<compile_context>
chip_gen: v5e
topology: v5e:2x2
jax: 0.10.0
libtpu: 0.0.40
codegen_flags: <defaults>
</compile_context>

<pallas_src>
import functools
import math

import jax
import jax.numpy as jnp
from jax.experimental import pallas as pl
from jax.experimental.pallas import tpu as pltpu


# ----------------------------------------------------------------------------
# Kernel bodies
# ----------------------------------------------------------------------------
def _feat_trans(hop, w, b, scale, offset):
    """Per-order transform: Linear(no bias) + bias + ReLU + row-wise 'norm'.

    Row-norm uses a fused single pass (sum and sum-of-squares) instead of a
    second (h - mean)^2 sweep; all math here is f32.
    """
    h = jnp.dot(hop, w, preferred_element_type=jnp.float32)
    h = jnp.maximum(h + b, 0.0)
    inv_d = 1.0 / h.shape[-1]
    s1 = jnp.sum(h, axis=-1, keepdims=True)
    s2 = jnp.sum(h * h, axis=-1, keepdims=True)
    mean = s1 * inv_d
    var = jnp.maximum(s2 * inv_d - mean * mean, 0.0) + 1e-9   # biased var + eps
    return (h - mean) * (scale * jax.lax.rsqrt(var)) + offset


def _spmm_kernel(adj_ref, src_ref, out_ref, acc_ref):
    """Tiled dense spmm: out[i] = sum_k adj[i, k] @ src[k].

    bf16 inputs on the MXU, f32 accumulation in a VMEM scratch.
    """
    k = pl.program_id(1)

    @pl.when(k == 0)
    def _():
        acc_ref[...] = jnp.zeros_like(acc_ref)

    acc_ref[...] += jnp.dot(adj_ref[...].astype(jnp.bfloat16),
                            src_ref[...].astype(jnp.bfloat16),
                            preferred_element_type=jnp.float32)

    @pl.when(k == pl.num_programs(1) - 1)
    def _():
        out_ref[...] = acc_ref[...]


def _fused_kernel(*refs, order):
    """Fused: last-hop spmm (k-accumulated) + all per-order epilogues + sum.

    refs = (adj, src, hop_0 .. hop_{order-1}, w, b, scale, offset, out, acc)
      adj   : (TM, TK)  tile (i, k)      src   : (TK, Din)  tile (k,)
      hop_o : (TM, Din) row tile (i,)    w     : (order+1, Din, Dout)
      b / scale / offset : (order+1, 1, Dout)
      out   : (TM, Dout)                 acc   : (TM, Din) f32 scratch
    """
    adj_ref, src_ref = refs[0], refs[1]
    hop_refs = refs[2:2 + order]
    w_ref, b_ref, scale_ref, offset_ref, out_ref, acc_ref = refs[2 + order:]
    k = pl.program_id(1)

    @pl.when(k == 0)
    def _():
        acc_ref[...] = jnp.zeros_like(acc_ref)

    # Dominant A @ hop matmul: bf16 MXU inputs, f32 accumulation.
    acc_ref[...] += jnp.dot(adj_ref[...].astype(jnp.bfloat16),
                            src_ref[...].astype(jnp.bfloat16),
                            preferred_element_type=jnp.float32)

    @pl.when(k == pl.num_programs(1) - 1)
    def _():
        out = jnp.zeros(out_ref.shape, jnp.float32)
        for o in range(order + 1):                        # static unroll
            hop = acc_ref[...] if o == order else hop_refs[o][...]
            out = out + _feat_trans(hop, w_ref[o], b_ref[o],
                                    scale_ref[o], offset_ref[o])
        out_ref[...] = out                                # 'mean' aggr == sum


def _order0_kernel(feat_ref, w_ref, b_ref, scale_ref, offset_ref, out_ref):
    out_ref[...] = _feat_trans(feat_ref[...], w_ref[0], b_ref[0],
                               scale_ref[0], offset_ref[0])


# ----------------------------------------------------------------------------
# Wrappers
# ----------------------------------------------------------------------------
def _const_imap(num_axes, rank):
    zero = (0,) * rank
    if num_axes == 1:
        return lambda i: zero
    return lambda i, k: zero


def _param_specs(w, b, scale, offset, num_axes):
    return [pl.BlockSpec(p.shape, _const_imap(num_axes, p.ndim))
            for p in (w, b, scale, offset)]


def _vmem_limit_bytes(tm, tk, din, dout, order, params_bytes):
    """VMEM budget derived from the actual tile footprint (double-buffered
    inputs/output + accumulator + params) with headroom -- NOT the physical
    VMEM size (which differs across v5e/v6e = 128 MiB and v7x = 64 MiB)."""
    f32 = 4
    tiles = 2 * (tm * tk + tk * din + max(order, 1) * tm * din + tm * dout) * f32
    scratch = tm * din * f32
    return int(1.5 * (tiles + scratch + 2 * params_bytes)) + (16 << 20)


def _spmm(adj, src, *, tm, tk, vmem_limit):
    n = adj.shape[0]
    din = src.shape[1]
    return pl.pallas_call(
        _spmm_kernel,
        out_shape=jax.ShapeDtypeStruct((n, din), jnp.float32),
        grid_spec=pltpu.PrefetchScalarGridSpec(
            num_scalar_prefetch=0,
            grid=(n // tm, n // tk),                      # reduction axis last
            in_specs=[pl.BlockSpec((tm, tk), lambda i, k: (i, k)),
                      pl.BlockSpec((tk, din), lambda i, k: (k, 0))],
            out_specs=pl.BlockSpec((tm, din), lambda i, k: (i, 0)),
            scratch_shapes=[pltpu.VMEM((tm, din), jnp.float32)]),
        compiler_params=pltpu.CompilerParams(
            dimension_semantics=("parallel", "arbitrary"),
            vmem_limit_bytes=vmem_limit),
    )(adj, src)


def high_order_aggregator(adj, feat, w, b, scale, offset, *, order,
                          tm=256, tk=256):
    """HighOrderAggregator forward (act='relu', aggr='mean', bias='norm').

    adj    : (N, N)  dense row-normalized adjacency (stand-in for sparse adj_norm)
    feat   : (N, Din)
    w      : (order+1, Din, Dout)  -- transposed vs nn.Linear's (Dout, Din)
    b, scale, offset : (order+1, 1, Dout)
    returns: (N, Dout) f32
    """
    n, din = feat.shape
    dout = w.shape[-1]
    if order > 0:
        assert adj.shape == (n, n), "adjacency must be (N, N)"
    params_bytes = 4 * (w.size + b.size + scale.size + offset.size)
    vmem_limit = _vmem_limit_bytes(tm, tk, din, dout, order, params_bytes)

    # Pad N so both the row tile (TM) and the contraction tile (TK) divide it.
    tile = tm * tk // math.gcd(tm, tk)
    n_pad = ((n + tile - 1) // tile) * tile
    if n_pad != n:
        feat = jnp.pad(feat, ((0, n_pad - n), (0, 0)))
        if order > 0:
            adj = jnp.pad(adj, ((0, n_pad - n), (0, n_pad - n)))

    if order == 0:
        out = pl.pallas_call(
            _order0_kernel,
            out_shape=jax.ShapeDtypeStruct((n_pad, dout), jnp.float32),
            grid_spec=pltpu.PrefetchScalarGridSpec(
                num_scalar_prefetch=0,
                grid=(n_pad // tm,),
                in_specs=[pl.BlockSpec((tm, din), lambda i: (i, 0))]
                         + _param_specs(w, b, scale, offset, 1),
                out_specs=pl.BlockSpec((tm, dout), lambda i: (i, 0))),
            compiler_params=pltpu.CompilerParams(
                dimension_semantics=("parallel",),
                vmem_limit_bytes=vmem_limit),
        )(feat, w, b, scale, offset)
        return out[:n]

    # hops 0 .. order-1.  Each extra hop needs the *full* previous hop, so it
    # is a chained tiled-spmm call; the last hop (adj @ hops[-1]) is fused
    # into the epilogue kernel below.
    hops = [feat]
    for _ in range(order - 1):
        hops.append(_spmm(adj, hops[-1], tm=tm, tk=tk, vmem_limit=vmem_limit))

    kernel = functools.partial(_fused_kernel, order=order)
    in_specs = (
        [pl.BlockSpec((tm, tk), lambda i, k: (i, k)),       # adj tile
         pl.BlockSpec((tk, din), lambda i, k: (k, 0))]      # last-hop spmm src
        + [pl.BlockSpec((tm, din), lambda i, k: (i, 0))     # hop_o row tiles
           for _ in range(order)]
        + _param_specs(w, b, scale, offset, 2))

    out = pl.pallas_call(
        kernel,
        out_shape=jax.ShapeDtypeStruct((n_pad, dout), jnp.float32),
        grid_spec=pltpu.PrefetchScalarGridSpec(
            num_scalar_prefetch=0,
            grid=(n_pad // tm, n_pad // tk),                # reduction axis last
            in_specs=in_specs,
            out_specs=pl.BlockSpec((tm, dout), lambda i, k: (i, 0)),
            scratch_shapes=[pltpu.VMEM((tm, din), jnp.float32)]),
        compiler_params=pltpu.CompilerParams(
            dimension_semantics=("parallel", "arbitrary"),
            vmem_limit_bytes=vmem_limit),
    )(adj, hops[-1], *hops, w, b, scale, offset)
    return out[:n]


# ----------------------------------------------------------------------------
# Reference + demo
# ----------------------------------------------------------------------------
def _reference(adj, feat, w, b, scale, offset, order, spmm_dtype=jnp.float32):
    """Pure-JAX reference mirroring the PyTorch forward().  `spmm_dtype`
    selects the A @ hop matmul input precision so the kernel's bf16-MXU path
    can also be checked tightly against a matched-precision reference."""
    hop = feat
    out = None
    for o in range(order + 1):
        if o > 0:
            hop = jnp.dot(adj.astype(spmm_dtype), hop.astype(spmm_dtype),
                          preferred_element_type=jnp.float32)
        h = jnp.dot(hop, w[o], preferred_element_type=jnp.float32) + b[o]
        h = jnp.maximum(h, 0.0)
        mean = jnp.mean(h, axis=1, keepdims=True)
        var = jnp.var(h, axis=1, keepdims=True) + 1e-9
        h = (h - mean) * scale[o] * jax.lax.rsqrt(var) + offset[o]
        out = h if out is None else out + h
    return out


if __name__ == "__main__":
    # Small, tile-friendly shapes.  Dout=128 keeps the output lane-dense
    # (no masked partial stores); TM=TK=256 are MXU-native tile multiples.
    N, DIM_IN, DIM_OUT = 512, 64, 128
    TM, TK = 256, 256

    key = jax.random.PRNGKey(0)
    k_adj, k_feat, k_w, k_b, k_s, k_o = jax.random.split(key, 6)

    # Dense row-normalized "adjacency" (stand-in for the sparse adj_norm):
    # ~10% density plus self loops.
    adj_raw = (jax.random.uniform(k_adj, (N, N)) > 0.9).astype(jnp.float32)
    adj_raw = adj_raw + jnp.eye(N, dtype=jnp.float32)
    adj = adj_raw / jnp.sum(adj_raw, axis=1, keepdims=True)

    feat = jax.random.normal(k_feat, (N, DIM_IN), dtype=jnp.float32)

    # Parameters for order=1 (module default).  W mirrors xavier_uniform over
    # nn.Linear's (dim_out, dim_in) weight, stored transposed as (Din, Dout).
    # b / scale / offset get non-trivial values so those paths are exercised.
    bound = (6.0 / (DIM_IN + DIM_OUT)) ** 0.5
    w1 = jax.random.uniform(k_w, (2, DIM_IN, DIM_OUT),
                            minval=-bound, maxval=bound, dtype=jnp.float32)
    b1 = 0.1 * jax.random.normal(k_b, (2, 1, DIM_OUT), dtype=jnp.float32)
    s1 = 1.0 + 0.1 * jax.random.normal(k_s, (2, 1, DIM_OUT), dtype=jnp.float32)
    o1 = 0.1 * jax.random.normal(k_o, (2, 1, DIM_OUT), dtype=jnp.float32)

    def run_and_check(order, w_, b_, scale_, offset_):
        out = high_order_aggregator(adj, feat, w_, b_, scale_, offset_,
                                    order=order, tm=TM, tk=TK)
        out = jax.block_until_ready(out)
        assert out.shape == (N, DIM_OUT)
        # Tight check vs a reference using the same bf16 spmm precision ...
        ref_m = _reference(adj, feat, w_, b_, scale_, offset_, order,
                           spmm_dtype=jnp.bfloat16)
        assert jnp.allclose(out, ref_m, atol=5e-3, rtol=5e-3), (
            f"order={order}: mismatch vs matched-precision reference")
        # ... and a looser check vs the full-f32 reference (bf16 is only used
        # for the A@hop MXU inputs; accumulation and norm math stay in f32).
        ref_f = _reference(adj, feat, w_, b_, scale_, offset_, order,
                           spmm_dtype=jnp.float32)
        assert jnp.allclose(out, ref_f, atol=5e-2, rtol=5e-2), (
            f"order={order}: mismatch vs f32 reference")

    # order=1: fully fused single pallas_call (module default).
    run_and_check(1, w1, b1, s1, o1)

    # order=2: exercises the chained tiled-spmm path (one extra pallas_call).
    w2 = jnp.concatenate([w1, w1[:1]], axis=0)
    b2 = jnp.concatenate([b1, b1[:1]], axis=0)
    s2 = jnp.concatenate([s1, s1[:1]], axis=0)
    o2 = jnp.concatenate([o1, o1[:1]], axis=0)
    run_and_check(2, w2, b2, s2, o2)

    print("KERNEL_OK")
</pallas_src>

<mosaic_0001>
module attributes {stable_mosaic.version = 11 : i64} {
  func.func @_fused_kernel(%arg0: i32, %arg1: i32, %arg2: memref<256x256xf32, #tpu.memory_space<vmem>>, %arg3: memref<256x64xf32, #tpu.memory_space<vmem>>, %arg4: memref<256x64xf32, #tpu.memory_space<vmem>>, %arg5: memref<2x64x128xf32, #tpu.memory_space<vmem>>, %arg6: memref<2x1x128xf32, #tpu.memory_space<vmem>>, %arg7: memref<2x1x128xf32, #tpu.memory_space<vmem>>, %arg8: memref<2x1x128xf32, #tpu.memory_space<vmem>>, %arg9: memref<256x128xf32, #tpu.memory_space<vmem>>, %arg10: memref<256x64xf32, #tpu.memory_space<vmem>>) attributes {dimension_semantics = [#tpu.dimension_semantics<parallel>, #tpu.dimension_semantics<arbitrary>], iteration_bounds = array<i64: 2, 2>, scalar_prefetch = 0 : i64, scratch_operands = 1 : i64, tpu.core_type = #tpu.core_type<tc>, window_params = [{transform_indices = @transform_0, window_bounds = array<i64: 256, 256>}, {transform_indices = @transform_1, window_bounds = array<i64: 256, 64>}, {transform_indices = @transform_2, window_bounds = array<i64: 256, 64>}, {pipeline_mode = #tpu.pipeline_mode<synchronous>, transform_indices = @transform_3, window_bounds = array<i64: 2, 64, 128>}, {pipeline_mode = #tpu.pipeline_mode<synchronous>, transform_indices = @transform_4, window_bounds = array<i64: 2, 1, 128>}, {pipeline_mode = #tpu.pipeline_mode<synchronous>, transform_indices = @transform_5, window_bounds = array<i64: 2, 1, 128>}, {pipeline_mode = #tpu.pipeline_mode<synchronous>, transform_indices = @transform_6, window_bounds = array<i64: 2, 1, 128>}, {transform_indices = @transform_7, window_bounds = array<i64: 256, 128>}]} {
    %c0_i32 = arith.constant 0 : i32
    %0 = arith.cmpi eq, %arg1, %c0_i32 : i32
    %1 = arith.extui %0 : i1 to i32
    %c0_i32_0 = arith.constant 0 : i32
    %2 = arith.cmpi ne, %1, %c0_i32_0 : i32
    scf.if %2 {
      %cst_9 = arith.constant 0.000000e+00 : f32
      %14 = vector.broadcast %cst_9 : f32 to vector<256x64xf32>
      %c0_10 = arith.constant 0 : index
      %c0_11 = arith.constant 0 : index
      %15 = vector.load %arg10[%c0_10, %c0_11] : memref<256x64xf32, #tpu.memory_space<vmem>>, vector<256x64xf32>
      tpu.vector_store %arg10[%c0_10, %c0_11], %14 {strides = array<i32>} : memref<256x64xf32, #tpu.memory_space<vmem>>, vector<256x64xf32>,
    } else {
    }
    %c0 = arith.constant 0 : index
    %c0_1 = arith.constant 0 : index
    %3 = vector.load %arg10[%c0, %c0_1] : memref<256x64xf32, #tpu.memory_space<vmem>>, vector<256x64xf32>
    %c0_2 = arith.constant 0 : index
    %c0_3 = arith.constant 0 : index
    %4 = vector.load %arg2[%c0_2, %c0_3] : memref<256x256xf32, #tpu.memory_space<vmem>>, vector<256x256xf32>
    %5 = arith.truncf %4 : vector<256x256xf32> to vector<256x256xbf16>
    %c0_4 = arith.constant 0 : index
    %c0_5 = arith.constant 0 : index
    %6 = vector.load %arg3[%c0_4, %c0_5] : memref<256x64xf32, #tpu.memory_space<vmem>>, vector<256x64xf32>
    %7 = arith.truncf %6 : vector<256x64xf32> to vector<256x64xbf16>
    %cst = arith.constant dense<0.000000e+00> : vector<256x64xf32>
    %8 = tpu.matmul %5, %7, %cst {dimension_numbers = #tpu.dot_dimension_numbers<[1], [0], [0], [1], [0, 0, 1, 1], [], []>} : vector<256x256xbf16>, vector<256x64xbf16>, vector<256x64xf32> -> vector<256x64xf32>
    %9 = arith.addf %3, %8 : vector<256x64xf32>
    %c0_6 = arith.constant 0 : index
    %c0_7 = arith.constant 0 : index
    %10 = vector.load %arg10[%c0_6, %c0_7] : memref<256x64xf32, #tpu.memory_space<vmem>>, vector<256x64xf32>
    tpu.vector_store %arg10[%c0_6, %c0_7], %9 {strides = array<i32>} : memref<256x64xf32, #tpu.memory_space<vmem>>, vector<256x64xf32>,
    %c1_i32 = arith.constant 1 : i32
    %11 = arith.cmpi eq, %arg1, %c1_i32 : i32
    %12 = arith.extui %11 : i1 to i32
    %c0_i32_8 = arith.constant 0 : i32
    %13 = arith.cmpi ne, %12, %c0_i32_8 : i32
    scf.if %13 {
      %cst_9 = arith.constant 0.000000e+00 : f32
      %14 = vector.broadcast %cst_9 : f32 to vector<256x128xf32>
      %c0_10 = arith.constant 0 : index
      %c0_11 = arith.constant 0 : index
      %15 = vector.load %arg4[%c0_10, %c0_11] : memref<256x64xf32, #tpu.memory_space<vmem>>, vector<256x64xf32>
      %c0_12 = arith.constant 0 : index
      %c0_13 = arith.constant 0 : index
      %c0_14 = arith.constant 0 : index
      %16 = vector.load %arg5[%c0_12, %c0_13, %c0_14] : memref<2x64x128xf32, #tpu.memory_space<vmem>>, vector<1x64x128xf32>
      %17 = vector.shape_cast %16 : vector<1x64x128xf32> to vector<64x128xf32>
      %c0_15 = arith.constant 0 : index
      %c0_16 = arith.constant 0 : index
      %c0_17 = arith.constant 0 : index
      %18 = vector.load %arg6[%c0_15, %c0_16, %c0_17] : memref<2x1x128xf32, #tpu.memory_space<vmem>>, vector<1x1x128xf32>
      %19 = vector.shape_cast %18 : vector<1x1x128xf32> to vector<1x128xf32>
      %c0_18 = arith.constant 0 : index
      %c0_19 = arith.constant 0 : index
      %c0_20 = arith.constant 0 : index
      %20 = vector.load %arg7[%c0_18, %c0_19, %c0_20] : memref<2x1x128xf32, #tpu.memory_space<vmem>>, vector<1x1x128xf32>
      %21 = vector.shape_cast %20 : vector<1x1x128xf32> to vector<1x128xf32>
      %c0_21 = arith.constant 0 : index
      %c0_22 = arith.constant 0 : index
      %c0_23 = arith.constant 0 : index
      %22 = vector.load %arg8[%c0_21, %c0_22, %c0_23] : memref<2x1x128xf32, #tpu.memory_space<vmem>>, vector<1x1x128xf32>
      %23 = vector.shape_cast %22 : vector<1x1x128xf32> to vector<1x128xf32>
      %cst_24 = arith.constant dense<0.000000e+00> : vector<256x128xf32>
      %24 = tpu.matmul %15, %17, %cst_24 {dimension_numbers = #tpu.dot_dimension_numbers<[1], [0], [0], [1], [0, 0, 1, 1], [], []>} : vector<256x64xf32>, vector<64x128xf32>, vector<256x128xf32> -> vector<256x128xf32>
      %25 = vector.broadcast %19 : vector<1x128xf32> to vector<256x128xf32>
      %26 = arith.addf %24, %25 : vector<256x128xf32>
      %cst_25 = arith.constant 0.000000e+00 : f32
      %27 = vector.broadcast %cst_25 : f32 to vector<256x128xf32>
      %28 = arith.maximumf %26, %27 : vector<256x128xf32>
      %cst_26 = arith.constant dense<0.000000e+00> : vector<256xf32>
      %29 = vector.multi_reduction <add>, %28, %cst_26 [1] : vector<256x128xf32> to vector<256xf32>
      %30 = vector.shape_cast %29 : vector<256xf32> to vector<256x1xf32>
      %31 = arith.mulf %28, %28 : vector<256x128xf32>
      %cst_27 = arith.constant dense<0.000000e+00> : vector<256xf32>
      %32 = vector.multi_reduction <add>, %31, %cst_27 [1] : vector<256x128xf32> to vector<256xf32>
      %33 = vector.shape_cast %32 : vector<256xf32> to vector<256x1xf32>
      %cst_28 = arith.constant 7.812500e-03 : f32
      %34 = vector.broadcast %cst_28 : f32 to vector<256x1xf32>
      %35 = arith.mulf %30, %34 : vector<256x1xf32>
      %cst_29 = arith.constant 7.812500e-03 : f32
      %36 = vector.broadcast %cst_29 : f32 to vector<256x1xf32>
      %37 = arith.mulf %33, %36 : vector<256x1xf32>
      %38 = arith.mulf %35, %35 : vector<256x1xf32>
      %39 = arith.subf %37, %38 : vector<256x1xf32>
      %cst_30 = arith.constant 0.000000e+00 : f32
      %40 = vector.broadcast %cst_30 : f32 to vector<256x1xf32>
      %41 = arith.maximumf %39, %40 : vector<256x1xf32>
      %cst_31 = arith.constant 9.99999971E-10 : f32
      %42 = vector.broadcast %cst_31 : f32 to vector<256x1xf32>
      %43 = arith.addf %41, %42 : vector<256x1xf32>
      %44 = vector.broadcast %35 : vector<256x1xf32> to vector<256x128xf32>
      %45 = arith.subf %28, %44 : vector<256x128xf32>
      %46 = math.rsqrt %43 : vector<256x1xf32>
      %47 = vector.broadcast %21 : vector<1x128xf32> to vector<256x128xf32>
      %48 = vector.broadcast %46 : vector<256x1xf32> to vector<256x128xf32>
      %49 = arith.mulf %47, %48 : vector<256x128xf32>
      %50 = arith.mulf %45, %49 : vector<256x128xf32>
      %51 = vector.broadcast %23 : vector<1x128xf32> to vector<256x128xf32>
      %52 = arith.addf %50, %51 : vector<256x128xf32>
      %53 = arith.addf %14, %52 : vector<256x128xf32>
      %c0_32 = arith.constant 0 : index
      %c0_33 = arith.constant 0 : index
      %54 = vector.load %arg10[%c0_32, %c0_33] : memref<256x64xf32, #tpu.memory_space<vmem>>, vector<256x64xf32>
      %c1 = arith.constant 1 : index
      %c0_34 = arith.constant 0 : index
      %c0_35 = arith.constant 0 : index
      %55 = vector.load %arg5[%c1, %c0_34, %c0_35] : memref<2x64x128xf32, #tpu.memory_space<vmem>>, vector<1x64x128xf32>
      %56 = vector.shape_cast %55 : vector<1x64x128xf32> to vector<64x128xf32>
      %c1_36 = arith.constant 1 : index
      %c0_37 = arith.constant 0 : index
      %c0_38 = arith.constant 0 : index
      %57 = vector.load %arg6[%c1_36, %c0_37, %c0_38] : memref<2x1x128xf32, #tpu.memory_space<vmem>>, vector<1x1x128xf32>
      %58 = vector.shape_cast %57 : vector<1x1x128xf32> to vector<1x128xf32>
      %c1_39 = arith.constant 1 : index
      %c0_40 = arith.constant 0 : index
      %c0_41 = arith.constant 0 : index
      %59 = vector.load %arg7[%c1_39, %c0_40, %c0_41] : memref<2x1x128xf32, #tpu.memory_space<vmem>>, vector<1x1x128xf32>
      %60 = vector.shape_cast %59 : vector<1x1x128xf32> to vector<1x128xf32>
      %c1_42 = arith.constant 1 : index
      %c0_43 = arith.constant 0 : index
      %c0_44 = arith.constant 0 : index
      %61 = vector.load %arg8[%c1_42, %c0_43, %c0_44] : memref<2x1x128xf32, #tpu.memory_space<vmem>>, vector<1x1x128xf32>
      %62 = vector.shape_cast %61 : vector<1x1x128xf32> to vector<1x128xf32>
      %cst_45 = arith.constant dense<0.000000e+00> : vector<256x128xf32>
      %63 = tpu.matmul %54, %56, %cst_45 {dimension_numbers = #tpu.dot_dimension_numbers<[1], [0], [0], [1], [0, 0, 1, 1], [], []>} : vector<256x64xf32>, vector<64x128xf32>, vector<256x128xf32> -> vector<256x128xf32>
      %64 = vector.broadcast %58 : vector<1x128xf32> to vector<256x128xf32>
      %65 = arith.addf %63, %64 : vector<256x128xf32>
      %cst_46 = arith.constant 0.000000e+00 : f32
      %66 = vector.broadcast %cst_46 : f32 to vector<256x128xf32>
      %67 = arith.maximumf %65, %66 : vector<256x128xf32>
      %cst_47 = arith.constant dense<0.000000e+00> : vector<256xf32>
      %68 = vector.multi_reduction <add>, %67, %cst_47 [1] : vector<256x128xf32> to vector<256xf32>
      %69 = vector.shape_cast %68 : vector<256xf32> to vector<256x1xf32>
      %70 = arith.mulf %67, %67 : vector<256x128xf32>
      %cst_48 = arith.constant dense<0.000000e+00> : vector<256xf32>
      %71 = vector.multi_reduction <add>, %70, %cst_48 [1] : vector<256x128xf32> to vector<256xf32>
      %72 = vector.shape_cast %71 : vector<256xf32> to vector<256x1xf32>
      %cst_49 = arith.constant 7.812500e-03 : f32
      %73 = vector.broadcast %cst_49 : f32 to vector<256x1xf32>
      %74 = arith.mulf %69, %73 : vector<256x1xf32>
      %cst_50 = arith.constant 7.812500e-03 : f32
      %75 = vector.broadcast %cst_50 : f32 to vector<256x1xf32>
      %76 = arith.mulf %72, %75 : vector<256x1xf32>
      %77 = arith.mulf %74, %74 : vector<256x1xf32>
      %78 = arith.subf %76, %77 : vector<256x1xf32>
      %cst_51 = arith.constant 0.000000e+00 : f32
      %79 = vector.broadcast %cst_51 : f32 to vector<256x1xf32>
      %80 = arith.maximumf %78, %79 : vector<256x1xf32>
      %cst_52 = arith.constant 9.99999971E-10 : f32
      %81 = vector.broadcast %cst_52 : f32 to vector<256x1xf32>
      %82 = arith.addf %80, %81 : vector<256x1xf32>
      %83 = vector.broadcast %74 : vector<256x1xf32> to vector<256x128xf32>
      %84 = arith.subf %67, %83 : vector<256x128xf32>
      %85 = math.rsqrt %82 : vector<256x1xf32>
      %86 = vector.broadcast %60 : vector<1x128xf32> to vector<256x128xf32>
      %87 = vector.broadcast %85 : vector<256x1xf32> to vector<256x128xf32>
      %88 = arith.mulf %86, %87 : vector<256x128xf32>
      %89 = arith.mulf %84, %88 : vector<256x128xf32>
      %90 = vector.broadcast %62 : vector<1x128xf32> to vector<256x128xf32>
      %91 = arith.addf %89, %90 : vector<256x128xf32>
      %92 = arith.addf %53, %91 : vector<256x128xf32>
      %c0_53 = arith.constant 0 : index
      %c0_54 = arith.constant 0 : index
      %93 = vector.load %arg9[%c0_53, %c0_54] : memref<256x128xf32, #tpu.memory_space<vmem>>, vector<256x128xf32>
      tpu.vector_store %arg9[%c0_53, %c0_54], %92 {strides = array<i32>} : memref<256x128xf32, #tpu.memory_space<vmem>>, vector<256x128xf32>,
    } else {
    }
    return
  }
  func.func @transform_0(%arg0: i32, %arg1: i32) -> (i32, i32) {
    %c0_i32 = arith.constant 0 : i32
    return %arg0, %arg1 : i32, i32
  }
  func.func @transform_1(%arg0: i32, %arg1: i32) -> (i32, i32) {
    %c0_i32 = arith.constant 0 : i32
    %c0_i32_0 = arith.constant 0 : i32
    return %arg1, %c0_i32 : i32, i32
  }
  func.func @transform_2(%arg0: i32, %arg1: i32) -> (i32, i32) {
    %c0_i32 = arith.constant 0 : i32
    %c0_i32_0 = arith.constant 0 : i32
    return %arg0, %c0_i32 : i32, i32
  }
  func.func @transform_3(%arg0: i32, %arg1: i32) -> (i32, i32, i32) {
    %c0_i32 = arith.constant 0 : i32
    %c0_i32_0 = arith.constant 0 : i32
    %c0_i32_1 = arith.constant 0 : i32
    %c0_i32_2 = arith.constant 0 : i32
    return %c0_i32, %c0_i32_0, %c0_i32_1 : i32, i32, i32
  }
  func.func @transform_4(%arg0: i32, %arg1: i32) -> (i32, i32, i32) {
    %c0_i32 = arith.constant 0 : i32
    %c0_i32_0 = arith.constant 0 : i32
    %c0_i32_1 = arith.constant 0 : i32
    %c0_i32_2 = arith.constant 0 : i32
    return %c0_i32, %c0_i32_0, %c0_i32_1 : i32, i32, i32
  }
  func.func @transform_5(%arg0: i32, %arg1: i32) -> (i32, i32, i32) {
    %c0_i32 = arith.constant 0 : i32
    %c0_i32_0 = arith.constant 0 : i32
    %c0_i32_1 = arith.constant 0 : i32
    %c0_i32_2 = arith.constant 0 : i32
    return %c0_i32, %c0_i32_0, %c0_i32_1 : i32, i32, i32
  }
  func.func @transform_6(%arg0: i32, %arg1: i32) -> (i32, i32, i32) {
    %c0_i32 = arith.constant 0 : i32
    %c0_i32_0 = arith.constant 0 : i32
    %c0_i32_1 = arith.constant 0 : i32
    %c0_i32_2 = arith.constant 0 : i32
    return %c0_i32, %c0_i32_0, %c0_i32_1 : i32, i32, i32
  }
  func.func @transform_7(%arg0: i32, %arg1: i32) -> (i32, i32) {
    %c0_i32 = arith.constant 0 : i32
    %c0_i32_0 = arith.constant 0 : i32
    return %arg0, %c0_i32 : i32, i32
  }
}

</mosaic_0001>

<llo_original>
// kernel: tpu_custom_call.1
$region0: #{tpu_custom_call.1}
  #allocation0 [shape = 'u32[]', space=smem, size = 0x4, offset = 0x4, fixed_abs, tag = 'smem constant byte address 0x4 - core index']
  #allocation1 [shape = 'u32[72,128]{1,0:T(1,128)}', space=vmem, size = 0x9000, scoped, tag = 'internal scratch']
  #allocation2 [shape = 'f32[256,64]{1,0:T(8,128)}', space=vmem, size = 0x20000, scoped, tag = 'scratch operand']
  %s0 = inlined_call_operand.hbm [shape: f32[512,512], index: 0, kind: input, shape index: {}]
  %s1 = inlined_call_operand.vmem [shape: f32[512,64], index: 1, kind: input, shape index: {}]
  %s2 = inlined_call_operand.vmem [shape: f32[512,64], index: 2, kind: input, shape index: {}]
  %s3 = inlined_call_operand.vmem [shape: f32[2,64,128], index: 3, kind: input, shape index: {}]
  %s4 = inlined_call_operand.vmem [shape: f32[2,1,128], index: 4, kind: input, shape index: {}]
  %s5 = inlined_call_operand.vmem [shape: f32[2,1,128], index: 5, kind: input, shape index: {}]
  %s6 = inlined_call_operand.vmem [shape: f32[2,1,128], index: 6, kind: input, shape index: {}]
  %s7 = inlined_call_operand.hbm [shape: f32[512,128], index: 7, kind: output, shape index: {}]
  %s8 = sld [smem:[#allocation0]]
  $region73: #{tpu_custom_call.1} parent=0
    _
  %s10 = ssub.s32 1, %s8
  %s11 = scalar_select 0, %s10, %s8
  $region1: #{tpu_custom_call.1} parent=0
    #allocation3 [shape = 'u8[524288]{0}', space=vmem, size = 0x80000, scoped, tag = 'input window, operand 0']
    #allocation4 [shape = 's32[2]{0}', space=sflag, size = 0x8, scoped, tag = 'scoped memory for tpu_custom_call.1']
    #allocation5 [shape = 's32[2]{0}', space=sflag, size = 0x8, scoped, tag = 'scoped memory for tpu_custom_call.1']
    #allocation6 [shape = 'u8[262144]{0}', space=vmem, size = 0x40000, scoped, tag = 'output window, operand 0']
    %12 = vsyncpa [#allocation4], 0
    %s13 = scalar_lea.sflag [#allocation4], 1
    %14 = vsyncpa %s13, 0
    %15 = vsyncpa [#allocation5], 0
    %s16 = scalar_lea.sflag [#allocation5], 1
    %17 = vsyncpa %s16, 0
    loop: start=0, step=1, limit=6
    $region2: #{tpu_custom_call.1} parent=1 // loop_pre_header
      _
    $region3: #{tpu_custom_call.1} parent=1 // loop_header
      %s19 = sphi 0, %s23
      %p20 = scmp.ge.s32.totalorder %s19, 6
      %s26 = sphi 0, %s38
      %s27 = sphi 0, %s34
      %s28 = sphi 0, %s26
      %s29 = sphi 0, %s27
      %s30 = sphi 0, %s28
      %s31 = sphi 0, %s29
      %s43 = sphi 0, %s45
      %s46 = sphi 0, %s43
      %s47 = sphi 0, %s46
      %s63 = sphi 0, %s47
      %s69 = sphi 0, %s71
      %s72 = sphi 0, %s69
      %s73 = sphi 0, %s72
      %s89 = sphi 0, %s73
      %s95 = sphi 0, %s97
      %s98 = sphi 0, %s95
      %s99 = sphi 0, %s98
      %s115 = sphi 0, %s99
      %s119 = sphi 0, %s119
      %s121 = sphi 0, %s119
      %s122 = sphi 0, %s121
      %s136 = sphi 0, %s122
      %s140 = sphi 0, %s140
      %s142 = sphi 0, %s140
      %s143 = sphi 0, %s142
      %s157 = sphi 0, %s143
      %s161 = sphi 0, %s161
      %s163 = sphi 0, %s161
      %s164 = sphi 0, %s163
      %s178 = sphi 0, %s164
      %s182 = sphi 0, %s182
      %s184 = sphi 0, %s182
      %s185 = sphi 0, %s184
      %s199 = sphi 0, %s185
      %s205 = sphi 0, %s207
      %s208 = sphi 0, %s205
      %s209 = sphi 0, %s208
      %s225 = sphi 0, %s209
    $region4: #{tpu_custom_call.1} parent=1 // loop_header_branch
      %22 = sbr.rel (%p20) target = $region8
    $region5: #{tpu_custom_call.1} parent=1 // loop_body
      %s24 = ssub.s32 %s19, 1
      %s25 = ssub.s32 %s19, 2
      %s32 = sadd.s32 1, %s27
      %p33 = scmp.ge.s32.totalorder %s32, 2
      %s34 = scalar_select %p33, 0, %s32
      %s35 = sadd.s32 1, %s26
      %s36 = scalar_select %p33, %s35, %s26
      %p37 = scmp.ge.s32.totalorder %s36, 2
      %s38 = scalar_select %p37, 0, %s36
      %s39 = ssub.s32 %s26, %s38
      %s40 = ssub.s32 %s27, %s34
      %s41 = sor.u32 %s39, %s40
      %p42 = scmp.eq.s32.totalorder %s41, 0
      %s44 = sadd.s32 %s43, 1
      %s45 = scalar_select %p42, %s43, %s44
      %p48 = pneg %p42
      %p49 = scmp.eq.s32.totalorder %s19, 3
      %p50 = por %p48, %p49
      %p51 = scmp.ne.s32.totalorder %s43, %s46
      %p52 = scmp.eq.s32.totalorder %s19, 0
      %p53 = por %p51, %p52
      %p54 = scmp.ne.s32.totalorder %s43, %s46
      %p55 = scmp.eq.s32.totalorder %s24, 3
      %p56 = por %p54, %p55
      %p57 = scmp.ne.s32.totalorder %s46, %s47
      %p58 = scmp.eq.s32.totalorder %s24, 0
      %p59 = por %p57, %p58
      %p60 = scmp.ne.s32.totalorder %s46, %s47
      %p61 = scmp.eq.s32.totalorder %s25, 3
      %p62 = por %p60, %p61
      %p64 = scmp.ne.s32.totalorder %s47, %s63
      %p65 = scmp.eq.s32.totalorder %s25, 0
      %p66 = por %p64, %p65
      %s67 = ssub.s32 %s27, %s34
      %p68 = scmp.eq.s32.totalorder %s67, 0
      %s70 = sadd.s32 %s69, 1
      %s71 = scalar_select %p68, %s69, %s70
      %p74 = pneg %p68
      %p75 = scmp.eq.s32.totalorder %s19, 3
      %p76 = por %p74, %p75
      %p77 = scmp.ne.s32.totalorder %s69, %s72
      %p78 = scmp.eq.s32.totalorder %s19, 0
      %p79 = por %p77, %p78
      %p80 = scmp.ne.s32.totalorder %s69, %s72
      %p81 = scmp.eq.s32.totalorder %s24, 3
      %p82 = por %p80, %p81
      %p83 = scmp.ne.s32.totalorder %s72, %s73
      %p84 = scmp.eq.s32.totalorder %s24, 0
      %p85 = por %p83, %p84
      %p86 = scmp.ne.s32.totalorder %s72, %s73
      %p87 = scmp.eq.s32.totalorder %s25, 3
      %p88 = por %p86, %p87
      %p90 = scmp.ne.s32.totalorder %s73, %s89
      %p91 = scmp.eq.s32.totalorder %s25, 0
      %p92 = por %p90, %p91
      %s93 = ssub.s32 %s26, %s38
      %p94 = scmp.eq.s32.totalorder %s93, 0
      %s96 = sadd.s32 %s95, 1
      %s97 = scalar_select %p94, %s95, %s96
      %p100 = pneg %p94
      %p101 = scmp.eq.s32.totalorder %s19, 3
      %p102 = por %p100, %p101
      %p103 = scmp.ne.s32.totalorder %s95, %s98
      %p104 = scmp.eq.s32.totalorder %s19, 0
      %p105 = por %p103, %p104
      %p106 = scmp.ne.s32.totalorder %s95, %s98
      %p107 = scmp.eq.s32.totalorder %s24, 3
      %p108 = por %p106, %p107
      %p109 = scmp.ne.s32.totalorder %s98, %s99
      %p110 = scmp.eq.s32.totalorder %s24, 0
      %p111 = por %p109, %p110
      %p112 = scmp.ne.s32.totalorder %s98, %s99
      %p113 = scmp.eq.s32.totalorder %s25, 3
      %p114 = por %p112, %p113
      %p116 = scmp.ne.s32.totalorder %s99, %s115
      %p117 = scmp.eq.s32.totalorder %s25, 0
      %p118 = por %p116, %p117
      %s120 = sadd.s32 %s119, 1
      %p123 = scmp.eq.s32.totalorder %s19, 3
      %p124 = scmp.ne.s32.totalorder %s119, %s121
      %p125 = scmp.eq.s32.totalorder %s19, 0
      %p126 = por %p124, %p125
      %p127 = scmp.ne.s32.totalorder %s119, %s121
      %p128 = scmp.eq.s32.totalorder %s24, 3
      %p129 = por %p127, %p128
      %p130 = scmp.ne.s32.totalorder %s121, %s122
      %p131 = scmp.eq.s32.totalorder %s24, 0
      %p132 = por %p130, %p131
      %p133 = scmp.ne.s32.totalorder %s121, %s122
      %p134 = scmp.eq.s32.totalorder %s25, 3
      %p135 = por %p133, %p134
      %p137 = scmp.ne.s32.totalorder %s122, %s136
      %p138 = scmp.eq.s32.totalorder %s25, 0
      %p139 = por %p137, %p138
      %s141 = sadd.s32 %s140, 1
      %p144 = scmp.eq.s32.totalorder %s19, 3
      %p145 = scmp.ne.s32.totalorder %s140, %s142
      %p146 = scmp.eq.s32.totalorder %s19, 0
      %p147 = por %p145, %p146
      %p148 = scmp.ne.s32.totalorder %s140, %s142
      %p149 = scmp.eq.s32.totalorder %s24, 3
      %p150 = por %p148, %p149
      %p151 = scmp.ne.s32.totalorder %s142, %s143
      %p152 = scmp.eq.s32.totalorder %s24, 0
      %p153 = por %p151, %p152
      %p154 = scmp.ne.s32.totalorder %s142, %s143
      %p155 = scmp.eq.s32.totalorder %s25, 3
      %p156 = por %p154, %p155
      %p158 = scmp.ne.s32.totalorder %s143, %s157
      %p159 = scmp.eq.s32.totalorder %s25, 0
      %p160 = por %p158, %p159
      %s162 = sadd.s32 %s161, 1
      %p165 = scmp.eq.s32.totalorder %s19, 3
      %p166 = scmp.ne.s32.totalorder %s161, %s163
      %p167 = scmp.eq.s32.totalorder %s19, 0
      %p168 = por %p166, %p167
      %p169 = scmp.ne.s32.totalorder %s161, %s163
      %p170 = scmp.eq.s32.totalorder %s24, 3
      %p171 = por %p169, %p170
      %p172 = scmp.ne.s32.totalorder %s163, %s164
      %p173 = scmp.eq.s32.totalorder %s24, 0
      %p174 = por %p172, %p173
      %p175 = scmp.ne.s32.totalorder %s163, %s164
      %p176 = scmp.eq.s32.totalorder %s25, 3
      %p177 = por %p175, %p176
      %p179 = scmp.ne.s32.totalorder %s164, %s178
      %p180 = scmp.eq.s32.totalorder %s25, 0
      %p181 = por %p179, %p180
      %s183 = sadd.s32 %s182, 1
      %p186 = scmp.eq.s32.totalorder %s19, 3
      %p187 = scmp.ne.s32.totalorder %s182, %s184
      %p188 = scmp.eq.s32.totalorder %s19, 0
      %p189 = por %p187, %p188
      %p190 = scmp.ne.s32.totalorder %s182, %s184
      %p191 = scmp.eq.s32.totalorder %s24, 3
      %p192 = por %p190, %p191
      %p193 = scmp.ne.s32.totalorder %s184, %s185
      %p194 = scmp.eq.s32.totalorder %s24, 0
      %p195 = por %p193, %p194
      %p196 = scmp.ne.s32.totalorder %s184, %s185
      %p197 = scmp.eq.s32.totalorder %s25, 3
      %p198 = por %p196, %p197
      %p200 = scmp.ne.s32.totalorder %s185, %s199
      %p201 = scmp.eq.s32.totalorder %s25, 0
      %p202 = por %p200, %p201
      %s203 = ssub.s32 %s26, %s38
      %p204 = scmp.eq.s32.totalorder %s203, 0
      %s206 = sadd.s32 %s205, 1
      %s207 = scalar_select %p204, %s205, %s206
      %p210 = pneg %p204
      %p211 = scmp.eq.s32.totalorder %s19, 3
      %p212 = por %p210, %p211
      %p213 = scmp.ne.s32.totalorder %s205, %s208
      %p214 = scmp.eq.s32.totalorder %s19, 0
      %p215 = por %p213, %p214
      %p216 = scmp.ne.s32.totalorder %s205, %s208
      %p217 = scmp.eq.s32.totalorder %s24, 3
      %p218 = por %p216, %p217
      %p219 = scmp.ne.s32.totalorder %s208, %s209
      %p220 = scmp.eq.s32.totalorder %s24, 0
      %p221 = por %p219, %p220
      %p222 = scmp.ne.s32.totalorder %s208, %s209
      %p223 = scmp.eq.s32.totalorder %s25, 3
      %p224 = por %p222, %p223
      %p226 = scmp.ne.s32.totalorder %s209, %s225
      %p227 = scmp.eq.s32.totalorder %s25, 0
      %p228 = por %p226, %p227
      %p229 = scmp.le.s32.totalorder 1, %s19
      %p230 = scmp.lt.s32.totalorder %s19, 5
      %p231 = pnand %p229, %p230
      %p232 = pneg %p231
      // Predicated region
      $region9: #{tpu_custom_call.1} parent=5 // pred_check
        _
      $region10: #{tpu_custom_call.1} parent=5 // pred_check_branch
        %234 = sbr.rel (%p231) target = $region12
      $region11: #{tpu_custom_call.1} parent=5 // pred_region
        %s235 = ssub.s32 %s19, 1
        // Predicated region
        $region13: #{tpu_custom_call.1} parent=11 // pred_check
          %p236 = pneg %p132
        $region14: #{tpu_custom_call.1} parent=11 // pred_check_branch
          %238 = sbr.rel (%p236) target = $region16
        $region15: #{tpu_custom_call.1} parent=11 // pred_region
          _
        $region16: #{tpu_custom_call.1} parent=11 // pred_fallthru
          _
        // Predicated region
        $region17: #{tpu_custom_call.1} parent=11 // pred_check
          %p239 = pneg %p153
        $region18: #{tpu_custom_call.1} parent=11 // pred_check_branch
          %241 = sbr.rel (%p239) target = $region20
        $region19: #{tpu_custom_call.1} parent=11 // pred_region
          _
        $region20: #{tpu_custom_call.1} parent=11 // pred_fallthru
          _
        // Predicated region
        $region21: #{tpu_custom_call.1} parent=11 // pred_check
          %p242 = pneg %p174
        $region22: #{tpu_custom_call.1} parent=11 // pred_check_branch
          %244 = sbr.rel (%p242) target = $region24
        $region23: #{tpu_custom_call.1} parent=11 // pred_region
          _
        $region24: #{tpu_custom_call.1} parent=11 // pred_fallthru
          _
        // Predicated region
        $region25: #{tpu_custom_call.1} parent=11 // pred_check
          %p245 = pneg %p195
        $region26: #{tpu_custom_call.1} parent=11 // pred_check_branch
          %247 = sbr.rel (%p245) target = $region28
        $region27: #{tpu_custom_call.1} parent=11 // pred_region
          _
        $region28: #{tpu_custom_call.1} parent=11 // pred_fallthru
          _
      $region12: #{tpu_custom_call.1} parent=5 // pred_fallthru
        _
      %p248 = scmp.lt.s32.totalorder %s19, 4
      // Predicated region
      $region29: #{tpu_custom_call.1} parent=5 // pred_check
        %p249 = pneg %p248
      $region30: #{tpu_custom_call.1} parent=5 // pred_check_branch
        %251 = sbr.rel (%p249) target = $region32
      $region31: #{tpu_custom_call.1} parent=5 // pred_region
        // Predicated region
        $region33: #{tpu_custom_call.1} parent=31 // pred_check
          %p252 = pneg %p53
        $region34: #{tpu_custom_call.1} parent=31 // pred_check_branch
          %254 = sbr.rel (%p252) target = $region36
        $region35: #{tpu_custom_call.1} parent=31 // pred_region
          %s255 = sand.u32 %s43, 1
          %s256 = scalar_lea.sflag [#allocation4], %s255
          %s257 = sand.u32 %s43, 1
          %s258 = smul.addr %s257, 512
          %s259 = scalar_lea.vmem [#allocation3], %s258
          %s260 = smul.u32 32, %s26
          %s261 = smul.u32 2, %s27
          %263 = vsyncadd %s256, 0
          %s264 = smul.addr %s260, 4
          %s265 = sadd.s32 %s261, %s264
          %s266 = smul.addr %s265, 8
          %s267 = scalar_lea.hbm %s0, %s266
          %s268 = sshll.u32 %s267, 4
          %s269 = int_to_ptr.hbm [resolvable:$true] %s268
          %s270 = sshll.u32 %s259, 4
          %s271 = int_to_ptr.vmem [resolvable:$true] %s270
          %276 = dma.hbm_to_vmem [thread:$0]  %s269, 8192, %s271, %s256, 512, 256, 16
        $region36: #{tpu_custom_call.1} parent=31 // pred_fallthru
          _
        // Predicated region
        $region37: #{tpu_custom_call.1} parent=31 // pred_check
          %p277 = pneg %p79
        $region38: #{tpu_custom_call.1} parent=31 // pred_check_branch
          %279 = sbr.rel (%p277) target = $region40
        $region39: #{tpu_custom_call.1} parent=31 // pred_region
          %s280 = smul.u32 32, %s27
          %p281 = scmp.lt.s32.totalorder %s280, 63
          %s282 = scalar_select %p281, %s280, 63
          %s283 = smul.addr %s282, 8
          %s284 = scalar_lea.vmem %s1, %s283
          %s285 = smul.u32 32, %s27
        $region40: #{tpu_custom_call.1} parent=31 // pred_fallthru
          _
        // Predicated region
        $region41: #{tpu_custom_call.1} parent=31 // pred_check
          %p286 = pneg %p105
        $region42: #{tpu_custom_call.1} parent=31 // pred_check_branch
          %288 = sbr.rel (%p286) target = $region44
        $region43: #{tpu_custom_call.1} parent=31 // pred_region
          %s289 = smul.u32 32, %s26
          %p290 = scmp.lt.s32.totalorder %s289, 63
          %s291 = scalar_select %p290, %s289, 63
          %s292 = smul.addr %s291, 8
          %s293 = scalar_lea.vmem %s2, %s292
          %s294 = smul.u32 32, %s26
        $region44: #{tpu_custom_call.1} parent=31 // pred_fallthru
          _
      $region32: #{tpu_custom_call.1} parent=5 // pred_fallthru
        _
      %p295 = scmp.le.s32.totalorder 1, %s19
      %p296 = scmp.lt.s32.totalorder %s19, 5
      %p297 = pnand %p295, %p296
      %p298 = pneg %p297
      // Predicated region
      $region45: #{tpu_custom_call.1} parent=5 // pred_check
        _
      $region46: #{tpu_custom_call.1} parent=5 // pred_check_branch
        %300 = sbr.rel (%p297) target = $region48
      $region47: #{tpu_custom_call.1} parent=5 // pred_region
        %s301 = ssub.s32 %s19, 1
        %s302 = sand.u32 %s46, 1
        %s303 = scalar_lea.sflag [#allocation4], %s302
        %s304 = sand.u32 %s46, 1
        %s305 = smul.addr %s304, 512
        %s306 = scalar_lea.vmem [#allocation3], %s305
        // Predicated region
        $region49: #{tpu_custom_call.1} parent=47 // pred_check
          %p307 = pneg %p59
        $region50: #{tpu_custom_call.1} parent=47 // pred_check_branch
          %309 = sbr.rel (%p307) target = $region52
        $region51: #{tpu_custom_call.1} parent=47 // pred_region
          %311 = dma.done %s303, 8192
        $region52: #{tpu_custom_call.1} parent=47 // pred_fallthru
          _
        %s312 = sand.u32 %s46, 1
        %s313 = scalar_lea.sflag [#allocation4], %s312
        %s314 = sand.u32 %s46, 1
        %s315 = smul.addr %s314, 512
        %s316 = scalar_lea.vmem [#allocation3], %s315
        %p317 = pneg %p59
        %p318 = pneg %p56
        %s319 = smul.u32 32, %s29
        %p320 = scmp.lt.s32.totalorder %s319, 63
        %s321 = scalar_select %p320, %s319, 63
        %s322 = smul.addr %s321, 8
        %s323 = scalar_lea.vmem %s1, %s322
        %p324 = pneg %p85
        %p325 = pneg %p82
        %s326 = smul.u32 32, %s28
        %p327 = scmp.lt.s32.totalorder %s326, 63
        %s328 = scalar_select %p327, %s326, 63
        %s329 = smul.addr %s328, 8
        %s330 = scalar_lea.vmem %s2, %s329
        %p331 = pneg %p111
        %p332 = pneg %p108
        %p333 = pneg %p132
        %p334 = pneg %p129
        %p335 = pneg %p153
        %p336 = pneg %p150
        %p337 = pneg %p174
        %p338 = pneg %p171
        %p339 = pneg %p195
        %p340 = pneg %p192
        %p341 = pneg %p221
        %p342 = pneg %p218
        %s343 = sand.u32 %s208, 1
        %s344 = scalar_lea.sflag [#allocation5], %s343
        %s345 = sand.u32 %s208, 1
        %s346 = smul.addr %s345, 256
        %s347 = scalar_lea.vmem [#allocation6], %s346
        %s348 = smul.u32 32, %s28
        %s349 = smul.u32 2, %s29
        %s350 = smul.u32 32, %s29
        %p351 = scmp.lt.s32.totalorder %s350, 63
        %s352 = scalar_select %p351, %s350, 63
        %s353 = smul.addr %s352, 8
        %s354 = scalar_lea.vmem %s1, %s353
        %s355 = smul.u32 32, %s29
        %s356 = smul.u32 32, %s28
        %p357 = scmp.lt.s32.totalorder %s356, 63
        %s358 = scalar_select %p357, %s356, 63
        %s359 = smul.addr %s358, 8
        %s360 = scalar_lea.vmem %s2, %s359
        %s361 = smul.u32 32, %s28
        %s362 = smul.u32 32, %s28
        %p363 = scmp.eq.s32.totalorder %s29, 0
        // Predicated region
        $region53: #{tpu_custom_call.1} parent=47 // pred_check
          %p364 = pneg %p363
        $region54: #{tpu_custom_call.1} parent=47 // pred_check_branch
          %366 = sbr.rel (%p364) target = $region56
        $region55: #{tpu_custom_call.1} parent=47 // pred_region
          %vm367 = vcmask 523264
          %368 = vst.msk [vmem:[#allocation2] sm:$0xff] %vm367, 0.0
          %369 = vst.msk [vmem:[#allocation2 + $0x8] sm:$0xff] %vm367, 0.0
          %370 = vst.msk [vmem:[#allocation2 + $0x10] sm:$0xff] %vm367, 0.0
          %371 = vst.msk [vmem:[#allocation2 + $0x18] sm:$0xff] %vm367, 0.0
          %372 = vst.msk [vmem:[#allocation2 + $0x20] sm:$0xff] %vm367, 0.0
          %373 = vst.msk [vmem:[#allocation2 + $0x28] sm:$0xff] %vm367, 0.0
          %374 = vst.msk [vmem:[#allocation2 + $0x30] sm:$0xff] %vm367, 0.0
          %375 = vst.msk [vmem:[#allocation2 + $0x38] sm:$0xff] %vm367, 0.0
          %376 = vst.msk [vmem:[#allocation2 + $0x40] sm:$0xff] %vm367, 0.0
          %377 = vst.msk [vmem:[#allocation2 + $0x48] sm:$0xff] %vm367, 0.0
          %378 = vst.msk [vmem:[#allocation2 + $0x50] sm:$0xff] %vm367, 0.0
          %379 = vst.msk [vmem:[#allocation2 + $0x58] sm:$0xff] %vm367, 0.0
          %380 = vst.msk [vmem:[#allocation2 + $0x60] sm:$0xff] %vm367, 0.0
          %381 = vst.msk [vmem:[#allocation2 + $0x68] sm:$0xff] %vm367, 0.0
          %382 = vst.msk [vmem:[#allocation2 + $0x70] sm:$0xff] %vm367, 0.0
          %383 = vst.msk [vmem:[#allocation2 + $0x78] sm:$0xff] %vm367, 0.0
          %384 = vst.msk [vmem:[#allocation2 + $0x80] sm:$0xff] %vm367, 0.0
          %385 = vst.msk [vmem:[#allocation2 + $0x88] sm:$0xff] %vm367, 0.0
          %386 = vst.msk [vmem:[#allocation2 + $0x90] sm:$0xff] %vm367, 0.0
          %387 = vst.msk [vmem:[#allocation2 + $0x98] sm:$0xff] %vm367, 0.0
          %388 = vst.msk [vmem:[#allocation2 + $0xa0] sm:$0xff] %vm367, 0.0
          %389 = vst.msk [vmem:[#allocation2 + $0xa8] sm:$0xff] %vm367, 0.0
          %390 = vst.msk [vmem:[#allocation2 + $0xb0] sm:$0xff] %vm367, 0.0
          %391 = vst.msk [vmem:[#allocation2 + $0xb8] sm:$0xff] %vm367, 0.0
          %392 = vst.msk [vmem:[#allocation2 + $0xc0] sm:$0xff] %vm367, 0.0
          %393 = vst.msk [vmem:[#allocation2 + $0xc8] sm:$0xff] %vm367, 0.0
          %394 = vst.msk [vmem:[#allocation2 + $0xd0] sm:$0xff] %vm367, 0.0
          %395 = vst.msk [vmem:[#allocation2 + $0xd8] sm:$0xff] %vm367, 0.0
          %396 = vst.msk [vmem:[#allocation2 + $0xe0] sm:$0xff] %vm367, 0.0
          %397 = vst.msk [vmem:[#allocation2 + $0xe8] sm:$0xff] %vm367, 0.0
          %398 = vst.msk [vmem:[#allocation2 + $0xf0] sm:$0xff] %vm367, 0.0
          %399 = vst.msk [vmem:[#allocation2 + $0xf8] sm:$0xff] %vm367, 0.0
        $region56: #{tpu_custom_call.1} parent=47 // pred_fallthru
          _
        %v400 = vld [vmem:[#allocation2] sm:$0xff]
        %v401 = vld [vmem:[#allocation2 + $0x8] sm:$0xff]
        %v402 = vld [vmem:[#allocation2 + $0x10] sm:$0xff]
        %v403 = vld [vmem:[#allocation2 + $0x18] sm:$0xff]
        %v404 = vld [vmem:[#allocation2 + $0x20] sm:$0xff]
        %v405 = vld [vmem:[#allocation2 + $0x28] sm:$0xff]
        %v406 = vld [vmem:[#allocation2 + $0x30] sm:$0xff]
        %v407 = vld [vmem:[#allocation2 + $0x38] sm:$0xff]
        %v408 = vld [vmem:[#allocation2 + $0x40] sm:$0xff]
        %v409 = vld [vmem:[#allocation2 + $0x48] sm:$0xff]
        %v410 = vld [vmem:[#allocation2 + $0x50] sm:$0xff]
        %v411 = vld [vmem:[#allocation2 + $0x58] sm:$0xff]
        %v412 = vld [vmem:[#allocation2 + $0x60] sm:$0xff]
        %v413 = vld [vmem:[#allocation2 + $0x68] sm:$0xff]
        %v414 = vld [vmem:[#allocation2 + $0x70] sm:$0xff]
        %v415 = vld [vmem:[#allocation2 + $0x78] sm:$0xff]
        %v416 = vld [vmem:[#allocation2 + $0x80] sm:$0xff]
        %v417 = vld [vmem:[#allocation2 + $0x88] sm:$0xff]
        %v418 = vld [vmem:[#allocation2 + $0x90] sm:$0xff]
        %v419 = vld [vmem:[#allocation2 + $0x98] sm:$0xff]
        %v420 = vld [vmem:[#allocation2 + $0xa0] sm:$0xff]
        %v421 = vld [vmem:[#allocation2 + $0xa8] sm:$0xff]
        %v422 = vld [vmem:[#allocation2 + $0xb0] sm:$0xff]
        %v423 = vld [vmem:[#allocation2 + $0xb8] sm:$0xff]
        %v424 = vld [vmem:[#allocation2 + $0xc0] sm:$0xff]
        %v425 = vld [vmem:[#allocation2 + $0xc8] sm:$0xff]
        %v426 = vld [vmem:[#allocation2 + $0xd0] sm:$0xff]
        %v427 = vld [vmem:[#allocation2 + $0xd8] sm:$0xff]
        %v428 = vld [vmem:[#allocation2 + $0xe0] sm:$0xff]
        %v429 = vld [vmem:[#allocation2 + $0xe8] sm:$0xff]
        %v430 = vld [vmem:[#allocation2 + $0xf0] sm:$0xff]
        %v431 = vld [vmem:[#allocation2 + $0xf8] sm:$0xff]
        %v432 = vld [vmem:[%s306] sm:$0xff]
        %v433 = vld [vmem:[%s306 + $0x8] sm:$0xff]
        %v434 = vld [vmem:[%s306 + $0x10] sm:$0xff]
        %v435 = vld [vmem:[%s306 + $0x18] sm:$0xff]
        %v436 = vld [vmem:[%s306 + $0x20] sm:$0xff]
        %v437 = vld [vmem:[%s306 + $0x28] sm:$0xff]
        %v438 = vld [vmem:[%s306 + $0x30] sm:$0xff]
        %v439 = vld [vmem:[%s306 + $0x38] sm:$0xff]
        %v440 = vld [vmem:[%s306 + $0x40] sm:$0xff]
        %v441 = vld [vmem:[%s306 + $0x48] sm:$0xff]
        %v442 = vld [vmem:[%s306 + $0x50] sm:$0xff]
        %v443 = vld [vmem:[%s306 + $0x58] sm:$0xff]
        %v444 = vld [vmem:[%s306 + $0x60] sm:$0xff]
        %v445 = vld [vmem:[%s306 + $0x68] sm:$0xff]
        %v446 = vld [vmem:[%s306 + $0x70] sm:$0xff]
        %v447 = vld [vmem:[%s306 + $0x78] sm:$0xff]
        %v448 = vld [vmem:[%s306 + $0x80] sm:$0xff]
        %v449 = vld [vmem:[%s306 + $0x88] sm:$0xff]
        %v450 = vld [vmem:[%s306 + $0x90] sm:$0xff]
        %v451 = vld [vmem:[%s306 + $0x98] sm:$0xff]
        %v452 = vld [vmem:[%s306 + $0xa0] sm:$0xff]
        %v453 = vld [vmem:[%s306 + $0xa8] sm:$0xff]
        %v454 = vld [vmem:[%s306 + $0xb0] sm:$0xff]
        %v455 = vld [vmem:[%s306 + $0xb8] sm:$0xff]
        %v456 = vld [vmem:[%s306 + $0xc0] sm:$0xff]
        %v457 = vld [vmem:[%s306 + $0xc8] sm:$0xff]
        %v458 = vld [vmem:[%s306 + $0xd0] sm:$0xff]
        %v459 = vld [vmem:[%s306 + $0xd8] sm:$0xff]
        %v460 = vld [vmem:[%s306 + $0xe0] sm:$0xff]
        %v461 = vld [vmem:[%s306 + $0xe8] sm:$0xff]
        %v462 = vld [vmem:[%s306 + $0xf0] sm:$0xff]
        %v463 = vld [vmem:[%s306 + $0xf8] sm:$0xff]
        %v464 = vld [vmem:[%s306 + $0x100] sm:$0xff]
        %v465 = vld [vmem:[%s306 + $0x108] sm:$0xff]
        %v466 = vld [vmem:[%s306 + $0x110] sm:$0xff]
        %v467 = vld [vmem:[%s306 + $0x118] sm:$0xff]
        %v468 = vld [vmem:[%s306 + $0x120] sm:$0xff]
        %v469 = vld [vmem:[%s306 + $0x128] sm:$0xff]
        %v470 = vld [vmem:[%s306 + $0x130] sm:$0xff]
        %v471 = vld [vmem:[%s306 + $0x138] sm:$0xff]
        %v472 = vld [vmem:[%s306 + $0x140] sm:$0xff]
        %v473 = vld [vmem:[%s306 + $0x148] sm:$0xff]
        %v474 = vld [vmem:[%s306 + $0x150] sm:$0xff]
        %v475 = vld [vmem:[%s306 + $0x158] sm:$0xff]
        %v476 = vld [vmem:[%s306 + $0x160] sm:$0xff]
        %v477 = vld [vmem:[%s306 + $0x168] sm:$0xff]
        %v478 = vld [vmem:[%s306 + $0x170] sm:$0xff]
        %v479 = vld [vmem:[%s306 + $0x178] sm:$0xff]
        %v480 = vld [vmem:[%s306 + $0x180] sm:$0xff]
        %v481 = vld [vmem:[%s306 + $0x188] sm:$0xff]
        %v482 = vld [vmem:[%s306 + $0x190] sm:$0xff]
        %v483 = vld [vmem:[%s306 + $0x198] sm:$0xff]
        %v484 = vld [vmem:[%s306 + $0x1a0] sm:$0xff]
        %v485 = vld [vmem:[%s306 + $0x1a8] sm:$0xff]
        %v486 = vld [vmem:[%s306 + $0x1b0] sm:$0xff]
        %v487 = vld [vmem:[%s306 + $0x1b8] sm:$0xff]
        %v488 = vld [vmem:[%s306 + $0x1c0] sm:$0xff]
        %v489 = vld [vmem:[%s306 + $0x1c8] sm:$0xff]
        %v490 = vld [vmem:[%s306 + $0x1d0] sm:$0xff]
        %v491 = vld [vmem:[%s306 + $0x1d8] sm:$0xff]
        %v492 = vld [vmem:[%s306 + $0x1e0] sm:$0xff]
        %v493 = vld [vmem:[%s306 + $0x1e8] sm:$0xff]
        %v494 = vld [vmem:[%s306 + $0x1f0] sm:$0xff]
        %v495 = vld [vmem:[%s306 + $0x1f8] sm:$0xff]
        %v496 = vpack.c.bf16 %v434, %v432
        %v497 = vpack.c.bf16 %v435, %v433
        %v498 = vpack.c.bf16 %v438, %v436
        %v499 = vpack.c.bf16 %v439, %v437
        %v500 = vpack.c.bf16 %v442, %v440
        %v501 = vpack.c.bf16 %v443, %v441
        %v502 = vpack.c.bf16 %v446, %v444
        %v503 = vpack.c.bf16 %v447, %v445
        %v504 = vpack.c.bf16 %v450, %v448
        %v505 = vpack.c.bf16 %v451, %v449
        %v506 = vpack.c.bf16 %v454, %v452
        %v507 = vpack.c.bf16 %v455, %v453
        %v508 = vpack.c.bf16 %v458, %v456
        %v509 = vpack.c.bf16 %v459, %v457
        %v510 = vpack.c.bf16 %v462, %v460
        %v511 = vpack.c.bf16 %v463, %v461
        %v512 = vpack.c.bf16 %v466, %v464
        %v513 = vpack.c.bf16 %v467, %v465
        %v514 = vpack.c.bf16 %v470, %v468
        %v515 = vpack.c.bf16 %v471, %v469
        %v516 = vpack.c.bf16 %v474, %v472
        %v517 = vpack.c.bf16 %v475, %v473
        %v518 = vpack.c.bf16 %v478, %v476
        %v519 = vpack.c.bf16 %v479, %v477
        %v520 = vpack.c.bf16 %v482, %v480
        %v521 = vpack.c.bf16 %v483, %v481
        %v522 = vpack.c.bf16 %v486, %v484
        %v523 = vpack.c.bf16 %v487, %v485
        %v524 = vpack.c.bf16 %v490, %v488
        %v525 = vpack.c.bf16 %v491, %v489
        %v526 = vpack.c.bf16 %v494, %v492
        %v527 = vpack.c.bf16 %v495, %v493
        %v528 = vld [vmem:[%s354] sm:$0xff]
        %v529 = vld [vmem:[%s354 + $0x8] sm:$0xff]
        %v530 = vld [vmem:[%s354 + $0x10] sm:$0xff]
        %v531 = vld [vmem:[%s354 + $0x18] sm:$0xff]
        %v532 = vld [vmem:[%s354 + $0x20] sm:$0xff]
        %v533 = vld [vmem:[%s354 + $0x28] sm:$0xff]
        %v534 = vld [vmem:[%s354 + $0x30] sm:$0xff]
        %v535 = vld [vmem:[%s354 + $0x38] sm:$0xff]
        %v536 = vld [vmem:[%s354 + $0x40] sm:$0xff]
        %v537 = vld [vmem:[%s354 + $0x48] sm:$0xff]
        %v538 = vld [vmem:[%s354 + $0x50] sm:$0xff]
        %v539 = vld [vmem:[%s354 + $0x58] sm:$0xff]
        %v540 = vld [vmem:[%s354 + $0x60] sm:$0xff]
        %v541 = vld [vmem:[%s354 + $0x68] sm:$0xff]
        %v542 = vld [vmem:[%s354 + $0x70] sm:$0xff]
        %v543 = vld [vmem:[%s354 + $0x78] sm:$0xff]
        %v544 = vld [vmem:[%s354 + $0x80] sm:$0xff]
        %v545 = vld [vmem:[%s354 + $0x88] sm:$0xff]
        %v546 = vld [vmem:[%s354 + $0x90] sm:$0xff]
        %v547 = vld [vmem:[%s354 + $0x98] sm:$0xff]
        %v548 = vld [vmem:[%s354 + $0xa0] sm:$0xff]
        %v549 = vld [vmem:[%s354 + $0xa8] sm:$0xff]
        %v550 = vld [vmem:[%s354 + $0xb0] sm:$0xff]
        %v551 = vld [vmem:[%s354 + $0xb8] sm:$0xff]
        %v552 = vld [vmem:[%s354 + $0xc0] sm:$0xff]
        %v553 = vld [vmem:[%s354 + $0xc8] sm:$0xff]
        %v554 = vld [vmem:[%s354 + $0xd0] sm:$0xff]
        %v555 = vld [vmem:[%s354 + $0xd8] sm:$0xff]
        %v556 = vld [vmem:[%s354 + $0xe0] sm:$0xff]
        %v557 = vld [vmem:[%s354 + $0xe8] sm:$0xff]
        %v558 = vld [vmem:[%s354 + $0xf0] sm:$0xff]
        %v559 = vld [vmem:[%s354 + $0xf8] sm:$0xff]
        %v560 = vpack.c.bf16 %v529, %v528
        %v561 = vpack.c.bf16 %v531, %v530
        %v562 = vpack.c.bf16 %v533, %v532
        %v563 = vpack.c.bf16 %v535, %v534
        %v564 = vpack.c.bf16 %v537, %v536
        %v565 = vpack.c.bf16 %v539, %v538
        %v566 = vpack.c.bf16 %v541, %v540
        %v567 = vpack.c.bf16 %v543, %v542
        %v568 = vpack.c.bf16 %v545, %v544
        %v569 = vpack.c.bf16 %v547, %v546
        %v570 = vpack.c.bf16 %v549, %v548
        %v571 = vpack.c.bf16 %v551, %v550
        %v572 = vpack.c.bf16 %v553, %v552
        %v573 = vpack.c.bf16 %v555, %v554
        %v574 = vpack.c.bf16 %v557, %v556
        %v575 = vpack.c.bf16 %v559, %v558
        %576 = vmatpush.bf16.msra.mxu0 %v567
        %577 = vmatpush.bf16.msra.mxu0 %v566
        %578 = vmatpush.bf16.msra.mxu0 %v565
        %579 = vmatpush.bf16.msra.mxu0 %v564
        %580 = vmatpush.bf16.msra.mxu0 %v563
        %581 = vmatpush.bf16.msra.mxu0 %v562
        %582 = vmatpush.bf16.msra.mxu0 %v561
        %583 = vmatpush.bf16.msra.mxu0 %v560
        %584 = vmatmul.bf16.gmra.mxu0 %v496
        %v585 = vpop.f32.mrf.mxu0
        %v586 = vadd.f32 0.0, %v585
        %v587 = vpop.f32.mrf.mxu0
        %v588 = vadd.f32 0.0, %v587
        %589 = vmatmul.bf16.gmra.mxu0 %v498
        %v590 = vpop.f32.mrf.mxu0
        %v591 = vadd.f32 0.0, %v590
        %v592 = vpop.f32.mrf.mxu0
        %v593 = vadd.f32 0.0, %v592
        %594 = vmatmul.bf16.gmra.mxu0 %v500
        %v595 = vpop.f32.mrf.mxu0
        %v596 = vadd.f32 0.0, %v595
        %v597 = vpop.f32.mrf.mxu0
        %v598 = vadd.f32 0.0, %v597
        %599 = vmatmul.bf16.gmra.mxu0 %v502
        %v600 = vpop.f32.mrf.mxu0
        %v601 = vadd.f32 0.0, %v600
        %v602 = vpop.f32.mrf.mxu0
        %v603 = vadd.f32 0.0, %v602
        %604 = vmatmul.bf16.gmra.mxu0 %v504
        %v605 = vpop.f32.mrf.mxu0
        %v606 = vadd.f32 0.0, %v605
        %v607 = vpop.f32.mrf.mxu0
        %v608 = vadd.f32 0.0, %v607
        %609 = vmatmul.bf16.gmra.mxu0 %v506
        %v610 = vpop.f32.mrf.mxu0
        %v611 = vadd.f32 0.0, %v610
        %v612 = vpop.f32.mrf.mxu0
        %v613 = vadd.f32 0.0, %v612
        %614 = vmatmul.bf16.gmra.mxu0 %v508
        %v615 = vpop.f32.mrf.mxu0
        %v616 = vadd.f32 0.0, %v615
        %v617 = vpop.f32.mrf.mxu0
        %v618 = vadd.f32 0.0, %v617
        %619 = vmatmul.bf16.gmra.mxu0 %v510
        %v620 = vpop.f32.mrf.mxu0
        %v621 = vadd.f32 0.0, %v620
        %v622 = vpop.f32.mrf.mxu0
        %v623 = vadd.f32 0.0, %v622
        %624 = vmatmul.bf16.gmra.mxu0 %v512
        %v625 = vpop.f32.mrf.mxu0
        %v626 = vadd.f32 0.0, %v625
        %v627 = vpop.f32.mrf.mxu0
        %v628 = vadd.f32 0.0, %v627
        %629 = vmatmul.bf16.gmra.mxu0 %v514
        %v630 = vpop.f32.mrf.mxu0
        %v631 = vadd.f32 0.0, %v630
        %v632 = vpop.f32.mrf.mxu0
        %v633 = vadd.f32 0.0, %v632
        %634 = vmatmul.bf16.gmra.mxu0 %v516
        %v635 = vpop.f32.mrf.mxu0
        %v636 = vadd.f32 0.0, %v635
        %v637 = vpop.f32.mrf.mxu0
        %v638 = vadd.f32 0.0, %v637
        %639 = vmatmul.bf16.gmra.mxu0 %v518
        %v640 = vpop.f32.mrf.mxu0
        %v641 = vadd.f32 0.0, %v640
        %v642 = vpop.f32.mrf.mxu0
        %v643 = vadd.f32 0.0, %v642
        %644 = vmatmul.bf16.gmra.mxu0 %v520
        %v645 = vpop.f32.mrf.mxu0
        %v646 = vadd.f32 0.0, %v645
        %v647 = vpop.f32.mrf.mxu0
        %v648 = vadd.f32 0.0, %v647
        %649 = vmatmul.bf16.gmra.mxu0 %v522
        %v650 = vpop.f32.mrf.mxu0
        %v651 = vadd.f32 0.0, %v650
        %v652 = vpop.f32.mrf.mxu0
        %v653 = vadd.f32 0.0, %v652
        %654 = vmatmul.bf16.gmra.mxu0 %v524
        %v655 = vpop.f32.mrf.mxu0
        %v656 = vadd.f32 0.0, %v655
        %v657 = vpop.f32.mrf.mxu0
        %v658 = vadd.f32 0.0, %v657
        %659 = vmatmul.bf16.gmra.mxu0 %v526
        %v660 = vpop.f32.mrf.mxu0
        %v661 = vadd.f32 0.0, %v660
        %v662 = vpop.f32.mrf.mxu0
        %v663 = vadd.f32 0.0, %v662
        %664 = vdwg.mxu0
        %665 = vmatpush.bf16.msra.mxu0 %v575
        %666 = vmatpush.bf16.msra.mxu0 %v574
        %667 = vmatpush.bf16.msra.mxu0 %v573
        %668 = vmatpush.bf16.msra.mxu0 %v572
        %669 = vmatpush.bf16.msra.mxu0 %v571
        %670 = vmatpush.bf16.msra.mxu0 %v570
        %671 = vmatpush.bf16.msra.mxu0 %v569
        %672 = vmatpush.bf16.msra.mxu0 %v568
        %673 = vmatmul.bf16.gmra.mxu0 %v497
        %v674 = vpop.f32.mrf.mxu0
        %v675 = vadd.f32 %v586, %v674
        %v676 = vpop.f32.mrf.mxu0
        %v677 = vadd.f32 %v588, %v676
        %678 = vmatmul.bf16.gmra.mxu0 %v499
        %v679 = vpop.f32.mrf.mxu0
        %v680 = vadd.f32 %v591, %v679
        %v681 = vpop.f32.mrf.mxu0
        %v682 = vadd.f32 %v593, %v681
        %683 = vmatmul.bf16.gmra.mxu0 %v501
        %v684 = vpop.f32.mrf.mxu0
        %v685 = vadd.f32 %v596, %v684
        %v686 = vpop.f32.mrf.mxu0
        %v687 = vadd.f32 %v598, %v686
        %688 = vmatmul.bf16.gmra.mxu0 %v503
        %v689 = vpop.f32.mrf.mxu0
        %v690 = vadd.f32 %v601, %v689
        %v691 = vpop.f32.mrf.mxu0
        %v692 = vadd.f32 %v603, %v691
        %693 = vmatmul.bf16.gmra.mxu0 %v505
        %v694 = vpop.f32.mrf.mxu0
        %v695 = vadd.f32 %v606, %v694
        %v696 = vpop.f32.mrf.mxu0
        %v697 = vadd.f32 %v608, %v696
        %698 = vmatmul.bf16.gmra.mxu0 %v507
        %v699 = vpop.f32.mrf.mxu0
        %v700 = vadd.f32 %v611, %v699
        %v701 = vpop.f32.mrf.mxu0
        %v702 = vadd.f32 %v613, %v701
        %703 = vmatmul.bf16.gmra.mxu0 %v509
        %v704 = vpop.f32.mrf.mxu0
        %v705 = vadd.f32 %v616, %v704
        %v706 = vpop.f32.mrf.mxu0
        %v707 = vadd.f32 %v618, %v706
        %708 = vmatmul.bf16.gmra.mxu0 %v511
        %v709 = vpop.f32.mrf.mxu0
        %v710 = vadd.f32 %v621, %v709
        %v711 = vpop.f32.mrf.mxu0
        %v712 = vadd.f32 %v623, %v711
        %713 = vmatmul.bf16.gmra.mxu0 %v513
        %v714 = vpop.f32.mrf.mxu0
        %v715 = vadd.f32 %v626, %v714
        %v716 = vpop.f32.mrf.mxu0
        %v717 = vadd.f32 %v628, %v716
        %718 = vmatmul.bf16.gmra.mxu0 %v515
        %v719 = vpop.f32.mrf.mxu0
        %v720 = vadd.f32 %v631, %v719
        %v721 = vpop.f32.mrf.mxu0
        %v722 = vadd.f32 %v633, %v721
        %723 = vmatmul.bf16.gmra.mxu0 %v517
        %v724 = vpop.f32.mrf.mxu0
        %v725 = vadd.f32 %v636, %v724
        %v726 = vpop.f32.mrf.mxu0
        %v727 = vadd.f32 %v638, %v726
        %728 = vmatmul.bf16.gmra.mxu0 %v519
        %v729 = vpop.f32.mrf.mxu0
        %v730 = vadd.f32 %v641, %v729
        %v731 = vpop.f32.mrf.mxu0
        %v732 = vadd.f32 %v643, %v731
        %733 = vmatmul.bf16.gmra.mxu0 %v521
        %v734 = vpop.f32.mrf.mxu0
        %v735 = vadd.f32 %v646, %v734
        %v736 = vpop.f32.mrf.mxu0
        %v737 = vadd.f32 %v648, %v736
        %738 = vmatmul.bf16.gmra.mxu0 %v523
        %v739 = vpop.f32.mrf.mxu0
        %v740 = vadd.f32 %v651, %v739
        %v741 = vpop.f32.mrf.mxu0
        %v742 = vadd.f32 %v653, %v741
        %743 = vmatmul.bf16.gmra.mxu0 %v525
        %v744 = vpop.f32.mrf.mxu0
        %v745 = vadd.f32 %v656, %v744
        %v746 = vpop.f32.mrf.mxu0
        %v747 = vadd.f32 %v658, %v746
        %748 = vmatmul.bf16.gmra.mxu0 %v527
        %v749 = vpop.f32.mrf.mxu0
        %v750 = vadd.f32 %v661, %v749
        %v751 = vpop.f32.mrf.mxu0
        %v752 = vadd.f32 %v663, %v751
        %753 = vdwg.mxu0
        %v754 = vadd.f32 %v400, %v675
        %v755 = vadd.f32 %v401, %v677
        %v756 = vadd.f32 %v402, %v680
        %v757 = vadd.f32 %v403, %v682
        %v758 = vadd.f32 %v404, %v685
        %v759 = vadd.f32 %v405, %v687
        %v760 = vadd.f32 %v406, %v690
        %v761 = vadd.f32 %v407, %v692
        %v762 = vadd.f32 %v408, %v695
        %v763 = vadd.f32 %v409, %v697
        %v764 = vadd.f32 %v410, %v700
        %v765 = vadd.f32 %v411, %v702
        %v766 = vadd.f32 %v412, %v705
        %v767 = vadd.f32 %v413, %v707
        %v768 = vadd.f32 %v414, %v710
        %v769 = vadd.f32 %v415, %v712
        %v770 = vadd.f32 %v416, %v715
        %v771 = vadd.f32 %v417, %v717
        %v772 = vadd.f32 %v418, %v720
        %v773 = vadd.f32 %v419, %v722
        %v774 = vadd.f32 %v420, %v725
        %v775 = vadd.f32 %v421, %v727
        %v776 = vadd.f32 %v422, %v730
        %v777 = vadd.f32 %v423, %v732
        %v778 = vadd.f32 %v424, %v735
        %v779 = vadd.f32 %v425, %v737
        %v780 = vadd.f32 %v426, %v740
        %v781 = vadd.f32 %v427, %v742
        %v782 = vadd.f32 %v428, %v745
        %v783 = vadd.f32 %v429, %v747
        %v784 = vadd.f32 %v430, %v750
        %v785 = vadd.f32 %v431, %v752
        %vm786 = vcmask 523264
        %787 = vst.msk [vmem:[#allocation2] sm:$0xff] %vm786, %v754
        %788 = vst.msk [vmem:[#allocation2 + $0x8] sm:$0xff] %vm786, %v755
        %789 = vst.msk [vmem:[#allocation2 + $0x10] sm:$0xff] %vm786, %v756
        %790 = vst.msk [vmem:[#allocation2 + $0x18] sm:$0xff] %vm786, %v757
        %791 = vst.msk [vmem:[#allocation2 + $0x20] sm:$0xff] %vm786, %v758
        %792 = vst.msk [vmem:[#allocation2 + $0x28] sm:$0xff] %vm786, %v759
        %793 = vst.msk [vmem:[#allocation2 + $0x30] sm:$0xff] %vm786, %v760
        %794 = vst.msk [vmem:[#allocation2 + $0x38] sm:$0xff] %vm786, %v761
        %795 = vst.msk [vmem:[#allocation2 + $0x40] sm:$0xff] %vm786, %v762
        %796 = vst.msk [vmem:[#allocation2 + $0x48] sm:$0xff] %vm786, %v763
        %797 = vst.msk [vmem:[#allocation2 + $0x50] sm:$0xff] %vm786, %v764
        %798 = vst.msk [vmem:[#allocation2 + $0x58] sm:$0xff] %vm786, %v765
        %799 = vst.msk [vmem:[#allocation2 + $0x60] sm:$0xff] %vm786, %v766
        %800 = vst.msk [vmem:[#allocation2 + $0x68] sm:$0xff] %vm786, %v767
        %801 = vst.msk [vmem:[#allocation2 + $0x70] sm:$0xff] %vm786, %v768
        %802 = vst.msk [vmem:[#allocation2 + $0x78] sm:$0xff] %vm786, %v769
        %803 = vst.msk [vmem:[#allocation2 + $0x80] sm:$0xff] %vm786, %v770
        %804 = vst.msk [vmem:[#allocation2 + $0x88] sm:$0xff] %vm786, %v771
        %805 = vst.msk [vmem:[#allocation2 + $0x90] sm:$0xff] %vm786, %v772
        %806 = vst.msk [vmem:[#allocation2 + $0x98] sm:$0xff] %vm786, %v773
        %807 = vst.msk [vmem:[#allocation2 + $0xa0] sm:$0xff] %vm786, %v774
        %808 = vst.msk [vmem:[#allocation2 + $0xa8] sm:$0xff] %vm786, %v775
        %809 = vst.msk [vmem:[#allocation2 + $0xb0] sm:$0xff] %vm786, %v776
        %810 = vst.msk [vmem:[#allocation2 + $0xb8] sm:$0xff] %vm786, %v777
        %811 = vst.msk [vmem:[#allocation2 + $0xc0] sm:$0xff] %vm786, %v778
        %812 = vst.msk [vmem:[#allocation2 + $0xc8] sm:$0xff] %vm786, %v779
        %813 = vst.msk [vmem:[#allocation2 + $0xd0] sm:$0xff] %vm786, %v780
        %814 = vst.msk [vmem:[#allocation2 + $0xd8] sm:$0xff] %vm786, %v781
        %815 = vst.msk [vmem:[#allocation2 + $0xe0] sm:$0xff] %vm786, %v782
        %816 = vst.msk [vmem:[#allocation2 + $0xe8] sm:$0xff] %vm786, %v783
        %817 = vst.msk [vmem:[#allocation2 + $0xf0] sm:$0xff] %vm786, %v784
        %818 = vst.msk [vmem:[#allocation2 + $0xf8] sm:$0xff] %vm786, %v785
        %p819 = scmp.eq.s32.totalorder %s29, 1
        // Predicated region
        $region57: #{tpu_custom_call.1} parent=47 // pred_check
          %p820 = pneg %p819
        $region58: #{tpu_custom_call.1} parent=47 // pred_check_branch
          %822 = sbr.rel (%p820) target = $region60
        $region59: #{tpu_custom_call.1} parent=47 // pred_region
          %v823 = vld [vmem:[%s360] sm:$0xff]
          %v824 = vld [vmem:[%s360 + $0x8] sm:$0xff]
          %v825 = vld [vmem:[%s360 + $0x10] sm:$0xff]
          %v826 = vld [vmem:[%s360 + $0x18] sm:$0xff]
          %v827 = vld [vmem:[%s360 + $0x20] sm:$0xff]
          %v828 = vld [vmem:[%s360 + $0x28] sm:$0xff]
          %v829 = vld [vmem:[%s360 + $0x30] sm:$0xff]
          %v830 = vld [vmem:[%s360 + $0x38] sm:$0xff]
          %v831 = vld [vmem:[%s360 + $0x40] sm:$0xff]
          %v832 = vld [vmem:[%s360 + $0x48] sm:$0xff]
          %v833 = vld [vmem:[%s360 + $0x50] sm:$0xff]
          %v834 = vld [vmem:[%s360 + $0x58] sm:$0xff]
          %v835 = vld [vmem:[%s360 + $0x60] sm:$0xff]
          %v836 = vld [vmem:[%s360 + $0x68] sm:$0xff]
          %v837 = vld [vmem:[%s360 + $0x70] sm:$0xff]
          %v838 = vld [vmem:[%s360 + $0x78] sm:$0xff]
          %v839 = vld [vmem:[%s360 + $0x80] sm:$0xff]
          %v840 = vld [vmem:[%s360 + $0x88] sm:$0xff]
          %v841 = vld [vmem:[%s360 + $0x90] sm:$0xff]
          %v842 = vld [vmem:[%s360 + $0x98] sm:$0xff]
          %v843 = vld [vmem:[%s360 + $0xa0] sm:$0xff]
          %v844 = vld [vmem:[%s360 + $0xa8] sm:$0xff]
          %v845 = vld [vmem:[%s360 + $0xb0] sm:$0xff]
          %v846 = vld [vmem:[%s360 + $0xb8] sm:$0xff]
          %v847 = vld [vmem:[%s360 + $0xc0] sm:$0xff]
          %v848 = vld [vmem:[%s360 + $0xc8] sm:$0xff]
          %v849 = vld [vmem:[%s360 + $0xd0] sm:$0xff]
          %v850 = vld [vmem:[%s360 + $0xd8] sm:$0xff]
          %v851 = vld [vmem:[%s360 + $0xe0] sm:$0xff]
          %v852 = vld [vmem:[%s360 + $0xe8] sm:$0xff]
          %v853 = vld [vmem:[%s360 + $0xf0] sm:$0xff]
          %v854 = vld [vmem:[%s360 + $0xf8] sm:$0xff]
          %v855 = vld [vmem:[%s3] sm:$0xff]
          %v856 = vld [vmem:[%s3 + $0x8] sm:$0xff]
          %v857 = vld [vmem:[%s3 + $0x10] sm:$0xff]
          %v858 = vld [vmem:[%s3 + $0x18] sm:$0xff]
          %v859 = vld [vmem:[%s3 + $0x20] sm:$0xff]
          %v860 = vld [vmem:[%s3 + $0x28] sm:$0xff]
          %v861 = vld [vmem:[%s3 + $0x30] sm:$0xff]
          %v862 = vld [vmem:[%s3 + $0x38] sm:$0xff]
          %v863 = vld [vmem:[%s4] sm:$0x1]
          %v864 = vld [vmem:[%s5] sm:$0x1]
          %v865 = vld [vmem:[%s6] sm:$0x1]
          %v867 = vperm.slane %v863, 0
          %v870 = vsel %vm786, %v823, 0
          %v873 = vsel %vm786, %v824, 0
          %v876 = vsel %vm786, %v825, 0
          %v879 = vsel %vm786, %v826, 0
          %v882 = vsel %vm786, %v827, 0
          %v885 = vsel %vm786, %v828, 0
          %v888 = vsel %vm786, %v829, 0
          %v891 = vsel %vm786, %v830, 0
          %v894 = vsel %vm786, %v831, 0
          %v897 = vsel %vm786, %v832, 0
          %v900 = vsel %vm786, %v833, 0
          %v903 = vsel %vm786, %v834, 0
          %v906 = vsel %vm786, %v835, 0
          %v909 = vsel %vm786, %v836, 0
          %v912 = vsel %vm786, %v837, 0
          %v915 = vsel %vm786, %v838, 0
          %v918 = vsel %vm786, %v839, 0
          %v921 = vsel %vm786, %v840, 0
          %v924 = vsel %vm786, %v841, 0
          %v927 = vsel %vm786, %v842, 0
          %v930 = vsel %vm786, %v843, 0
          %v933 = vsel %vm786, %v844, 0
          %v936 = vsel %vm786, %v845, 0
          %v939 = vsel %vm786, %v846, 0
          %v942 = vsel %vm786, %v847, 0
          %v945 = vsel %vm786, %v848, 0
          %v948 = vsel %vm786, %v849, 0
          %v951 = vsel %vm786, %v850, 0
          %v954 = vsel %vm786, %v851, 0
          %v957 = vsel %vm786, %v852, 0
          %v960 = vsel %vm786, %v853, 0
          %v963 = vsel %vm786, %v854, 0
          %965 = vmatpush.msra.mxu0 0.0
          %966 = vmatpush.msra.mxu0 0.0
          %967 = vmatpush.msra.mxu0 0.0
          %968 = vmatpush.msra.mxu0 0.0
          %969 = vmatpush.msra.mxu0 0.0
          %970 = vmatpush.msra.mxu0 0.0
          %971 = vmatpush.msra.mxu0 0.0
          %972 = vmatpush.msra.mxu0 0.0
          %973 = vmatpush.msra.mxu0 %v862
          %974 = vmatpush.msra.mxu0 %v861
          %975 = vmatpush.msra.mxu0 %v860
          %976 = vmatpush.msra.mxu0 %v859
          %977 = vmatpush.msra.mxu0 %v858
          %978 = vmatpush.msra.mxu0 %v857
          %979 = vmatpush.msra.mxu0 %v856
          %980 = vmatpush.msra.mxu0 %v855
          %981 = vmatmul.f32.gmra.mxu0 %v870
          %v982 = vpop.f32.mrf.mxu0
          %v983 = vadd.f32 %v867, %v982
          %984 = vmatmul.f32.gmra.mxu0 %v873
          %v985 = vpop.f32.mrf.mxu0
          %v986 = vadd.f32 %v867, %v985
          %987 = vmatmul.f32.gmra.mxu0 %v876
          %v988 = vpop.f32.mrf.mxu0
          %v989 = vadd.f32 %v867, %v988
          %990 = vmatmul.f32.gmra.mxu0 %v879
          %v991 = vpop.f32.mrf.mxu0
          %v992 = vadd.f32 %v867, %v991
          %993 = vmatmul.f32.gmra.mxu0 %v882
          %v994 = vpop.f32.mrf.mxu0
          %v995 = vadd.f32 %v867, %v994
          %996 = vmatmul.f32.gmra.mxu0 %v885
          %v997 = vpop.f32.mrf.mxu0
          %v998 = vadd.f32 %v867, %v997
          %999 = vmatmul.f32.gmra.mxu0 %v888
          %v1000 = vpop.f32.mrf.mxu0
          %v1001 = vadd.f32 %v867, %v1000
          %1002 = vmatmul.f32.gmra.mxu0 %v891
          %v1003 = vpop.f32.mrf.mxu0
          %v1004 = vadd.f32 %v867, %v1003
          %1005 = vmatmul.f32.gmra.mxu0 %v894
          %v1006 = vpop.f32.mrf.mxu0
          %v1007 = vadd.f32 %v867, %v1006
          %1008 = vmatmul.f32.gmra.mxu0 %v897
          %v1009 = vpop.f32.mrf.mxu0
          %v1010 = vadd.f32 %v867, %v1009
          %1011 = vmatmul.f32.gmra.mxu0 %v900
          %v1012 = vpop.f32.mrf.mxu0
          %v1013 = vadd.f32 %v867, %v1012
          %1014 = vmatmul.f32.gmra.mxu0 %v903
          %v1015 = vpop.f32.mrf.mxu0
          %v1016 = vadd.f32 %v867, %v1015
          %1017 = vmatmul.f32.gmra.mxu0 %v906
          %v1018 = vpop.f32.mrf.mxu0
          %v1019 = vadd.f32 %v867, %v1018
          %1020 = vmatmul.f32.gmra.mxu0 %v909
          %v1021 = vpop.f32.mrf.mxu0
          %v1022 = vadd.f32 %v867, %v1021
          %1023 = vmatmul.f32.gmra.mxu0 %v912
          %v1024 = vpop.f32.mrf.mxu0
          %v1025 = vadd.f32 %v867, %v1024
          %1026 = vmatmul.f32.gmra.mxu0 %v915
          %v1027 = vpop.f32.mrf.mxu0
          %v1028 = vadd.f32 %v867, %v1027
          %1029 = vmatmul.f32.gmra.mxu0 %v918
          %v1030 = vpop.f32.mrf.mxu0
          %v1031 = vadd.f32 %v867, %v1030
          %1032 = vmatmul.f32.gmra.mxu0 %v921
          %v1033 = vpop.f32.mrf.mxu0
          %v1034 = vadd.f32 %v867, %v1033
          %1035 = vmatmul.f32.gmra.mxu0 %v924
          %v1036 = vpop.f32.mrf.mxu0
          %v1037 = vadd.f32 %v867, %v1036
          %1038 = vmatmul.f32.gmra.mxu0 %v927
          %v1039 = vpop.f32.mrf.mxu0
          %v1040 = vadd.f32 %v867, %v1039
          %1041 = vmatmul.f32.gmra.mxu0 %v930
          %v1042 = vpop.f32.mrf.mxu0
          %v1043 = vadd.f32 %v867, %v1042
          %1044 = vmatmul.f32.gmra.mxu0 %v933
          %v1045 = vpop.f32.mrf.mxu0
          %v1046 = vadd.f32 %v867, %v1045
          %1047 = vmatmul.f32.gmra.mxu0 %v936
          %v1048 = vpop.f32.mrf.mxu0
          %v1049 = vadd.f32 %v867, %v1048
          %1050 = vmatmul.f32.gmra.mxu0 %v939
          %v1051 = vpop.f32.mrf.mxu0
          %v1052 = vadd.f32 %v867, %v1051
          %1053 = vmatmul.f32.gmra.mxu0 %v942
          %v1054 = vpop.f32.mrf.mxu0
          %v1055 = vadd.f32 %v867, %v1054
          %1056 = vmatmul.f32.gmra.mxu0 %v945
          %v1057 = vpop.f32.mrf.mxu0
          %v1058 = vadd.f32 %v867, %v1057
          %1059 = vmatmul.f32.gmra.mxu0 %v948
          %v1060 = vpop.f32.mrf.mxu0
          %v1061 = vadd.f32 %v867, %v1060
          %1062 = vmatmul.f32.gmra.mxu0 %v951
          %v1063 = vpop.f32.mrf.mxu0
          %v1064 = vadd.f32 %v867, %v1063
          %1065 = vmatmul.f32.gmra.mxu0 %v954
          %v1066 = vpop.f32.mrf.mxu0
          %v1067 = vadd.f32 %v867, %v1066
          %1068 = vmatmul.f32.gmra.mxu0 %v957
          %v1069 = vpop.f32.mrf.mxu0
          %v1070 = vadd.f32 %v867, %v1069
          %1071 = vmatmul.f32.gmra.mxu0 %v960
          %v1072 = vpop.f32.mrf.mxu0
          %v1073 = vadd.f32 %v867, %v1072
          %1074 = vmatmul.f32.gmra.mxu0 %v963
          %v1075 = vpop.f32.mrf.mxu0
          %v1076 = vadd.f32 %v867, %v1075
          %1077 = vdwg.mxu0
          %v1078 = vmax.f32 %v983, 0.0
          %v1079 = vmax.f32 %v986, 0.0
          %v1080 = vmax.f32 %v989, 0.0
          %v1081 = vmax.f32 %v992, 0.0
          %v1082 = vmax.f32 %v995, 0.0
          %v1083 = vmax.f32 %v998, 0.0
          %v1084 = vmax.f32 %v1001, 0.0
          %v1085 = vmax.f32 %v1004, 0.0
          %v1086 = vmax.f32 %v1007, 0.0
          %v1087 = vmax.f32 %v1010, 0.0
          %v1088 = vmax.f32 %v1013, 0.0
          %v1089 = vmax.f32 %v1016, 0.0
          %v1090 = vmax.f32 %v1019, 0.0
          %v1091 = vmax.f32 %v1022, 0.0
          %v1092 = vmax.f32 %v1025, 0.0
          %v1093 = vmax.f32 %v1028, 0.0
          %v1094 = vmax.f32 %v1031, 0.0
          %v1095 = vmax.f32 %v1034, 0.0
          %v1096 = vmax.f32 %v1037, 0.0
          %v1097 = vmax.f32 %v1040, 0.0
          %v1098 = vmax.f32 %v1043, 0.0
          %v1099 = vmax.f32 %v1046, 0.0
          %v1100 = vmax.f32 %v1049, 0.0
          %v1101 = vmax.f32 %v1052, 0.0
          %v1102 = vmax.f32 %v1055, 0.0
          %v1103 = vmax.f32 %v1058, 0.0
          %v1104 = vmax.f32 %v1061, 0.0
          %v1105 = vmax.f32 %v1064, 0.0
          %v1106 = vmax.f32 %v1067, 0.0
          %v1107 = vmax.f32 %v1070, 0.0
          %v1108 = vmax.f32 %v1073, 0.0
          %v1109 = vmax.f32 %v1076, 0.0
          %1110 = vadd.xlane.f32.xlu0 %v1078
          %v1111 = vpop.xlane.xlu0 %1110
          %1112 = vadd.xlane.f32.xlu0 %v1079
          %v1113 = vpop.xlane.xlu0 %1112
          %1114 = vadd.xlane.f32.xlu0 %v1080
          %v1115 = vpop.xlane.xlu0 %1114
          %1116 = vadd.xlane.f32.xlu0 %v1081
          %v1117 = vpop.xlane.xlu0 %1116
          %1118 = vadd.xlane.f32.xlu0 %v1082
          %v1119 = vpop.xlane.xlu0 %1118
          %1120 = vadd.xlane.f32.xlu0 %v1083
          %v1121 = vpop.xlane.xlu0 %1120
          %1122 = vadd.xlane.f32.xlu0 %v1084
          %v1123 = vpop.xlane.xlu0 %1122
          %1124 = vadd.xlane.f32.xlu0 %v1085
          %v1125 = vpop.xlane.xlu0 %1124
          %1126 = vadd.xlane.f32.xlu0 %v1086
          %v1127 = vpop.xlane.xlu0 %1126
          %1128 = vadd.xlane.f32.xlu0 %v1087
          %v1129 = vpop.xlane.xlu0 %1128
          %1130 = vadd.xlane.f32.xlu0 %v1088
          %v1131 = vpop.xlane.xlu0 %1130
          %1132 = vadd.xlane.f32.xlu0 %v1089
          %v1133 = vpop.xlane.xlu0 %1132
          %1134 = vadd.xlane.f32.xlu0 %v1090
          %v1135 = vpop.xlane.xlu0 %1134
          %1136 = vadd.xlane.f32.xlu0 %v1091
          %v1137 = vpop.xlane.xlu0 %1136
          %1138 = vadd.xlane.f32.xlu0 %v1092
          %v1139 = vpop.xlane.xlu0 %1138
          %1140 = vadd.xlane.f32.xlu0 %v1093
          %v1141 = vpop.xlane.xlu0 %1140
          %1142 = vadd.xlane.f32.xlu0 %v1094
          %v1143 = vpop.xlane.xlu0 %1142
          %1144 = vadd.xlane.f32.xlu0 %v1095
          %v1145 = vpop.xlane.xlu0 %1144
          %1146 = vadd.xlane.f32.xlu0 %v1096
          %v1147 = vpop.xlane.xlu0 %1146
          %1148 = vadd.xlane.f32.xlu0 %v1097
          %v1149 = vpop.xlane.xlu0 %1148
          %1150 = vadd.xlane.f32.xlu0 %v1098
          %v1151 = vpop.xlane.xlu0 %1150
          %1152 = vadd.xlane.f32.xlu0 %v1099
          %v1153 = vpop.xlane.xlu0 %1152
          %1154 = vadd.xlane.f32.xlu0 %v1100
          %v1155 = vpop.xlane.xlu0 %1154
          %1156 = vadd.xlane.f32.xlu0 %v1101
          %v1157 = vpop.xlane.xlu0 %1156
          %1158 = vadd.xlane.f32.xlu0 %v1102
          %v1159 = vpop.xlane.xlu0 %1158
          %1160 = vadd.xlane.f32.xlu0 %v1103
          %v1161 = vpop.xlane.xlu0 %1160
          %1162 = vadd.xlane.f32.xlu0 %v1104
          %v1163 = vpop.xlane.xlu0 %1162
          %1164 = vadd.xlane.f32.xlu0 %v1105
          %v1165 = vpop.xlane.xlu0 %1164
          %1166 = vadd.xlane.f32.xlu0 %v1106
          %v1167 = vpop.xlane.xlu0 %1166
          %1168 = vadd.xlane.f32.xlu0 %v1107
          %v1169 = vpop.xlane.xlu0 %1168
          %1170 = vadd.xlane.f32.xlu0 %v1108
          %v1171 = vpop.xlane.xlu0 %1170
          %1172 = vadd.xlane.f32.xlu0 %v1109
          %v1173 = vpop.xlane.xlu0 %1172
          %v1174 = vmul.f32 %v1078, %v1078
          %v1175 = vmul.f32 %v1079, %v1079
          %v1176 = vmul.f32 %v1080, %v1080
          %v1177 = vmul.f32 %v1081, %v1081
          %v1178 = vmul.f32 %v1082, %v1082
          %v1179 = vmul.f32 %v1083, %v1083
          %v1180 = vmul.f32 %v1084, %v1084
          %v1181 = vmul.f32 %v1085, %v1085
          %v1182 = vmul.f32 %v1086, %v1086
          %v1183 = vmul.f32 %v1087, %v1087
          %v1184 = vmul.f32 %v1088, %v1088
          %v1185 = vmul.f32 %v1089, %v1089
          %v1186 = vmul.f32 %v1090, %v1090
          %v1187 = vmul.f32 %v1091, %v1091
          %v1188 = vmul.f32 %v1092, %v1092
          %v1189 = vmul.f32 %v1093, %v1093
          %v1190 = vmul.f32 %v1094, %v1094
          %v1191 = vmul.f32 %v1095, %v1095
          %v1192 = vmul.f32 %v1096, %v1096
          %v1193 = vmul.f32 %v1097, %v1097
          %v1194 = vmul.f32 %v1098, %v1098
          %v1195 = vmul.f32 %v1099, %v1099
          %v1196 = vmul.f32 %v1100, %v1100
          %v1197 = vmul.f32 %v1101, %v1101
          %v1198 = vmul.f32 %v1102, %v1102
          %v1199 = vmul.f32 %v1103, %v1103
          %v1200 = vmul.f32 %v1104, %v1104
          %v1201 = vmul.f32 %v1105, %v1105
          %v1202 = vmul.f32 %v1106, %v1106
          %v1203 = vmul.f32 %v1107, %v1107
          %v1204 = vmul.f32 %v1108, %v1108
          %v1205 = vmul.f32 %v1109, %v1109
          %1206 = vadd.xlane.f32.xlu0 %v1174
          %v1207 = vpop.xlane.xlu0 %1206
          %1208 = vadd.xlane.f32.xlu0 %v1175
          %v1209 = vpop.xlane.xlu0 %1208
          %1210 = vadd.xlane.f32.xlu0 %v1176
          %v1211 = vpop.xlane.xlu0 %1210
          %1212 = vadd.xlane.f32.xlu0 %v1177
          %v1213 = vpop.xlane.xlu0 %1212
          %1214 = vadd.xlane.f32.xlu0 %v1178
          %v1215 = vpop.xlane.xlu0 %1214
          %1216 = vadd.xlane.f32.xlu0 %v1179
          %v1217 = vpop.xlane.xlu0 %1216
          %1218 = vadd.xlane.f32.xlu0 %v1180
          %v1219 = vpop.xlane.xlu0 %1218
          %1220 = vadd.xlane.f32.xlu0 %v1181
          %v1221 = vpop.xlane.xlu0 %1220
          %1222 = vadd.xlane.f32.xlu0 %v1182
          %v1223 = vpop.xlane.xlu0 %1222
          %1224 = vadd.xlane.f32.xlu0 %v1183
          %v1225 = vpop.xlane.xlu0 %1224
          %1226 = vadd.xlane.f32.xlu0 %v1184
          %v1227 = vpop.xlane.xlu0 %1226
          %1228 = vadd.xlane.f32.xlu0 %v1185
          %v1229 = vpop.xlane.xlu0 %1228
          %1230 = vadd.xlane.f32.xlu0 %v1186
          %v1231 = vpop.xlane.xlu0 %1230
          %1232 = vadd.xlane.f32.xlu0 %v1187
          %v1233 = vpop.xlane.xlu0 %1232
          %1234 = vadd.xlane.f32.xlu0 %v1188
          %v1235 = vpop.xlane.xlu0 %1234
          %1236 = vadd.xlane.f32.xlu0 %v1189
          %v1237 = vpop.xlane.xlu0 %1236
          %1238 = vadd.xlane.f32.xlu0 %v1190
          %v1239 = vpop.xlane.xlu0 %1238
          %1240 = vadd.xlane.f32.xlu0 %v1191
          %v1241 = vpop.xlane.xlu0 %1240
          %1242 = vadd.xlane.f32.xlu0 %v1192
          %v1243 = vpop.xlane.xlu0 %1242
          %1244 = vadd.xlane.f32.xlu0 %v1193
          %v1245 = vpop.xlane.xlu0 %1244
          %1246 = vadd.xlane.f32.xlu0 %v1194
          %v1247 = vpop.xlane.xlu0 %1246
          %1248 = vadd.xlane.f32.xlu0 %v1195
          %v1249 = vpop.xlane.xlu0 %1248
          %1250 = vadd.xlane.f32.xlu0 %v1196
          %v1251 = vpop.xlane.xlu0 %1250
          %1252 = vadd.xlane.f32.xlu0 %v1197
          %v1253 = vpop.xlane.xlu0 %1252
          %1254 = vadd.xlane.f32.xlu0 %v1198
          %v1255 = vpop.xlane.xlu0 %1254
          %1256 = vadd.xlane.f32.xlu0 %v1199
          %v1257 = vpop.xlane.xlu0 %1256
          %1258 = vadd.xlane.f32.xlu0 %v1200
          %v1259 = vpop.xlane.xlu0 %1258
          %1260 = vadd.xlane.f32.xlu0 %v1201
          %v1261 = vpop.xlane.xlu0 %1260
          %1262 = vadd.xlane.f32.xlu0 %v1202
          %v1263 = vpop.xlane.xlu0 %1262
          %1264 = vadd.xlane.f32.xlu0 %v1203
          %v1265 = vpop.xlane.xlu0 %1264
          %1266 = vadd.xlane.f32.xlu0 %v1204
          %v1267 = vpop.xlane.xlu0 %1266
          %1268 = vadd.xlane.f32.xlu0 %v1205
          %v1269 = vpop.xlane.xlu0 %1268
          %v1270 = vmul.f32 %v1111, 0.0078125
          %v1271 = vmul.f32 %v1113, 0.0078125
          %v1272 = vmul.f32 %v1115, 0.0078125
          %v1273 = vmul.f32 %v1117, 0.0078125
          %v1274 = vmul.f32 %v1119, 0.0078125
          %v1275 = vmul.f32 %v1121, 0.0078125
          %v1276 = vmul.f32 %v1123, 0.0078125
          %v1277 = vmul.f32 %v1125, 0.0078125
          %v1278 = vmul.f32 %v1127, 0.0078125
          %v1279 = vmul.f32 %v1129, 0.0078125
          %v1280 = vmul.f32 %v1131, 0.0078125
          %v1281 = vmul.f32 %v1133, 0.0078125
          %v1282 = vmul.f32 %v1135, 0.0078125
          %v1283 = vmul.f32 %v1137, 0.0078125
          %v1284 = vmul.f32 %v1139, 0.0078125
          %v1285 = vmul.f32 %v1141, 0.0078125
          %v1286 = vmul.f32 %v1143, 0.0078125
          %v1287 = vmul.f32 %v1145, 0.0078125
          %v1288 = vmul.f32 %v1147, 0.0078125
          %v1289 = vmul.f32 %v1149, 0.0078125
          %v1290 = vmul.f32 %v1151, 0.0078125
          %v1291 = vmul.f32 %v1153, 0.0078125
          %v1292 = vmul.f32 %v1155, 0.0078125
          %v1293 = vmul.f32 %v1157, 0.0078125
          %v1294 = vmul.f32 %v1159, 0.0078125
          %v1295 = vmul.f32 %v1161, 0.0078125
          %v1296 = vmul.f32 %v1163, 0.0078125
          %v1297 = vmul.f32 %v1165, 0.0078125
          %v1298 = vmul.f32 %v1167, 0.0078125
          %v1299 = vmul.f32 %v1169, 0.0078125
          %v1300 = vmul.f32 %v1171, 0.0078125
          %v1301 = vmul.f32 %v1173, 0.0078125
          %v1302 = vmul.f32 %v1207, 0.0078125
          %v1303 = vmul.f32 %v1209, 0.0078125
          %v1304 = vmul.f32 %v1211, 0.0078125
          %v1305 = vmul.f32 %v1213, 0.0078125
          %v1306 = vmul.f32 %v1215, 0.0078125
          %v1307 = vmul.f32 %v1217, 0.0078125
          %v1308 = vmul.f32 %v1219, 0.0078125
          %v1309 = vmul.f32 %v1221, 0.0078125
          %v1310 = vmul.f32 %v1223, 0.0078125
          %v1311 = vmul.f32 %v1225, 0.0078125
          %v1312 = vmul.f32 %v1227, 0.0078125
          %v1313 = vmul.f32 %v1229, 0.0078125
          %v1314 = vmul.f32 %v1231, 0.0078125
          %v1315 = vmul.f32 %v1233, 0.0078125
          %v1316 = vmul.f32 %v1235, 0.0078125
          %v1317 = vmul.f32 %v1237, 0.0078125
          %v1318 = vmul.f32 %v1239, 0.0078125
          %v1319 = vmul.f32 %v1241, 0.0078125
          %v1320 = vmul.f32 %v1243, 0.0078125
          %v1321 = vmul.f32 %v1245, 0.0078125
          %v1322 = vmul.f32 %v1247, 0.0078125
          %v1323 = vmul.f32 %v1249, 0.0078125
          %v1324 = vmul.f32 %v1251, 0.0078125
          %v1325 = vmul.f32 %v1253, 0.0078125
          %v1326 = vmul.f32 %v1255, 0.0078125
          %v1327 = vmul.f32 %v1257, 0.0078125
          %v1328 = vmul.f32 %v1259, 0.0078125
          %v1329 = vmul.f32 %v1261, 0.0078125
          %v1330 = vmul.f32 %v1263, 0.0078125
          %v1331 = vmul.f32 %v1265, 0.0078125
          %v1332 = vmul.f32 %v1267, 0.0078125
          %v1333 = vmul.f32 %v1269, 0.0078125
          %v1334 = vmul.f32 %v1270, %v1270
          %v1335 = vmul.f32 %v1271, %v1271
          %v1336 = vmul.f32 %v1272, %v1272
          %v1337 = vmul.f32 %v1273, %v1273
          %v1338 = vmul.f32 %v1274, %v1274
          %v1339 = vmul.f32 %v1275, %v1275
          %v1340 = vmul.f32 %v1276, %v1276
          %v1341 = vmul.f32 %v1277, %v1277
          %v1342 = vmul.f32 %v1278, %v1278
          %v1343 = vmul.f32 %v1279, %v1279
          %v1344 = vmul.f32 %v1280, %v1280
          %v1345 = vmul.f32 %v1281, %v1281
          %v1346 = vmul.f32 %v1282, %v1282
          %v1347 = vmul.f32 %v1283, %v1283
          %v1348 = vmul.f32 %v1284, %v1284
          %v1349 = vmul.f32 %v1285, %v1285
          %v1350 = vmul.f32 %v1286, %v1286
          %v1351 = vmul.f32 %v1287, %v1287
          %v1352 = vmul.f32 %v1288, %v1288
          %v1353 = vmul.f32 %v1289, %v1289
          %v1354 = vmul.f32 %v1290, %v1290
          %v1355 = vmul.f32 %v1291, %v1291
          %v1356 = vmul.f32 %v1292, %v1292
          %v1357 = vmul.f32 %v1293, %v1293
          %v1358 = vmul.f32 %v1294, %v1294
          %v1359 = vmul.f32 %v1295, %v1295
          %v1360 = vmul.f32 %v1296, %v1296
          %v1361 = vmul.f32 %v1297, %v1297
          %v1362 = vmul.f32 %v1298, %v1298
          %v1363 = vmul.f32 %v1299, %v1299
          %v1364 = vmul.f32 %v1300, %v1300
          %v1365 = vmul.f32 %v1301, %v1301
          %v1366 = vsub.f32 %v1302, %v1334
          %v1367 = vsub.f32 %v1303, %v1335
          %v1368 = vsub.f32 %v1304, %v1336
          %v1369 = vsub.f32 %v1305, %v1337
          %v1370 = vsub.f32 %v1306, %v1338
          %v1371 = vsub.f32 %v1307, %v1339
          %v1372 = vsub.f32 %v1308, %v1340
          %v1373 = vsub.f32 %v1309, %v1341
          %v1374 = vsub.f32 %v1310, %v1342
          %v1375 = vsub.f32 %v1311, %v1343
          %v1376 = vsub.f32 %v1312, %v1344
          %v1377 = vsub.f32 %v1313, %v1345
          %v1378 = vsub.f32 %v1314, %v1346
          %v1379 = vsub.f32 %v1315, %v1347
          %v1380 = vsub.f32 %v1316, %v1348
          %v1381 = vsub.f32 %v1317, %v1349
          %v1382 = vsub.f32 %v1318, %v1350
          %v1383 = vsub.f32 %v1319, %v1351
          %v1384 = vsub.f32 %v1320, %v1352
          %v1385 = vsub.f32 %v1321, %v1353
          %v1386 = vsub.f32 %v1322, %v1354
          %v1387 = vsub.f32 %v1323, %v1355
          %v1388 = vsub.f32 %v1324, %v1356
          %v1389 = vsub.f32 %v1325, %v1357
          %v1390 = vsub.f32 %v1326, %v1358
          %v1391 = vsub.f32 %v1327, %v1359
          %v1392 = vsub.f32 %v1328, %v1360
          %v1393 = vsub.f32 %v1329, %v1361
          %v1394 = vsub.f32 %v1330, %v1362
          %v1395 = vsub.f32 %v1331, %v1363
          %v1396 = vsub.f32 %v1332, %v1364
          %v1397 = vsub.f32 %v1333, %v1365
          %v1398 = vmax.f32 %v1366, 0.0
          %v1399 = vmax.f32 %v1367, 0.0
          %v1400 = vmax.f32 %v1368, 0.0
          %v1401 = vmax.f32 %v1369, 0.0
          %v1402 = vmax.f32 %v1370, 0.0
          %v1403 = vmax.f32 %v1371, 0.0
          %v1404 = vmax.f32 %v1372, 0.0
          %v1405 = vmax.f32 %v1373, 0.0
          %v1406 = vmax.f32 %v1374, 0.0
          %v1407 = vmax.f32 %v1375, 0.0
          %v1408 = vmax.f32 %v1376, 0.0
          %v1409 = vmax.f32 %v1377, 0.0
          %v1410 = vmax.f32 %v1378, 0.0
          %v1411 = vmax.f32 %v1379, 0.0
          %v1412 = vmax.f32 %v1380, 0.0
          %v1413 = vmax.f32 %v1381, 0.0
          %v1414 = vmax.f32 %v1382, 0.0
          %v1415 = vmax.f32 %v1383, 0.0
          %v1416 = vmax.f32 %v1384, 0.0
          %v1417 = vmax.f32 %v1385, 0.0
          %v1418 = vmax.f32 %v1386, 0.0
          %v1419 = vmax.f32 %v1387, 0.0
          %v1420 = vmax.f32 %v1388, 0.0
          %v1421 = vmax.f32 %v1389, 0.0
          %v1422 = vmax.f32 %v1390, 0.0
          %v1423 = vmax.f32 %v1391, 0.0
          %v1424 = vmax.f32 %v1392, 0.0
          %v1425 = vmax.f32 %v1393, 0.0
          %v1426 = vmax.f32 %v1394, 0.0
          %v1427 = vmax.f32 %v1395, 0.0
          %v1428 = vmax.f32 %v1396, 0.0
          %v1429 = vmax.f32 %v1397, 0.0
          %v1430 = vadd.f32 %v1398, 1e-09
          %v1431 = vadd.f32 %v1399, 1e-09
          %v1432 = vadd.f32 %v1400, 1e-09
          %v1433 = vadd.f32 %v1401, 1e-09
          %v1434 = vadd.f32 %v1402, 1e-09
          %v1435 = vadd.f32 %v1403, 1e-09
          %v1436 = vadd.f32 %v1404, 1e-09
          %v1437 = vadd.f32 %v1405, 1e-09
          %v1438 = vadd.f32 %v1406, 1e-09
          %v1439 = vadd.f32 %v1407, 1e-09
          %v1440 = vadd.f32 %v1408, 1e-09
          %v1441 = vadd.f32 %v1409, 1e-09
          %v1442 = vadd.f32 %v1410, 1e-09
          %v1443 = vadd.f32 %v1411, 1e-09
          %v1444 = vadd.f32 %v1412, 1e-09
          %v1445 = vadd.f32 %v1413, 1e-09
          %v1446 = vadd.f32 %v1414, 1e-09
          %v1447 = vadd.f32 %v1415, 1e-09
          %v1448 = vadd.f32 %v1416, 1e-09
          %v1449 = vadd.f32 %v1417, 1e-09
          %v1450 = vadd.f32 %v1418, 1e-09
          %v1451 = vadd.f32 %v1419, 1e-09
          %v1452 = vadd.f32 %v1420, 1e-09
          %v1453 = vadd.f32 %v1421, 1e-09
          %v1454 = vadd.f32 %v1422, 1e-09
          %v1455 = vadd.f32 %v1423, 1e-09
          %v1456 = vadd.f32 %v1424, 1e-09
          %v1457 = vadd.f32 %v1425, 1e-09
          %v1458 = vadd.f32 %v1426, 1e-09
          %v1459 = vadd.f32 %v1427, 1e-09
          %v1460 = vadd.f32 %v1428, 1e-09
          %v1461 = vadd.f32 %v1429, 1e-09
          %v1462 = vsub.f32 %v1078, %v1270
          %v1463 = vsub.f32 %v1079, %v1271
          %v1464 = vsub.f32 %v1080, %v1272
          %v1465 = vsub.f32 %v1081, %v1273
          %v1466 = vsub.f32 %v1082, %v1274
          %v1467 = vsub.f32 %v1083, %v1275
          %v1468 = vsub.f32 %v1084, %v1276
          %v1469 = vsub.f32 %v1085, %v1277
          %v1470 = vsub.f32 %v1086, %v1278
          %v1471 = vsub.f32 %v1087, %v1279
          %v1472 = vsub.f32 %v1088, %v1280
          %v1473 = vsub.f32 %v1089, %v1281
          %v1474 = vsub.f32 %v1090, %v1282
          %v1475 = vsub.f32 %v1091, %v1283
          %v1476 = vsub.f32 %v1092, %v1284
          %v1477 = vsub.f32 %v1093, %v1285
          %v1478 = vsub.f32 %v1094, %v1286
          %v1479 = vsub.f32 %v1095, %v1287
          %v1480 = vsub.f32 %v1096, %v1288
          %v1481 = vsub.f32 %v1097, %v1289
          %v1482 = vsub.f32 %v1098, %v1290
          %v1483 = vsub.f32 %v1099, %v1291
          %v1484 = vsub.f32 %v1100, %v1292
          %v1485 = vsub.f32 %v1101, %v1293
          %v1486 = vsub.f32 %v1102, %v1294
          %v1487 = vsub.f32 %v1103, %v1295
          %v1488 = vsub.f32 %v1104, %v1296
          %v1489 = vsub.f32 %v1105, %v1297
          %v1490 = vsub.f32 %v1106, %v1298
          %v1491 = vsub.f32 %v1107, %v1299
          %v1492 = vsub.f32 %v1108, %v1300
          %v1493 = vsub.f32 %v1109, %v1301
          %v1494 = vrsqrt.pop %v1430
          %v1495 = vmul.f32 %v1494, %v1430
          %v1496 = vmul.f32 %v1495, %v1494
          %v1497 = vmul.f32 0.5, %v1496
          %v1498 = vsub.f32 1.5, %v1497
          %v1499 = vmul.f32 %v1494, %v1498
          %vm1500 = vweird.f32 %v1430
          %vm1501 = vweird.f32 %v1494
          %vm1502 = vmor %vm1500, %vm1501
          %v1503 = vsel %vm1502, %v1494, %v1499
          %v1504 = vrsqrt.pop %v1431
          %v1505 = vmul.f32 %v1504, %v1431
          %v1506 = vmul.f32 %v1505, %v1504
          %v1507 = vmul.f32 0.5, %v1506
          %v1508 = vsub.f32 1.5, %v1507
          %v1509 = vmul.f32 %v1504, %v1508
          %vm1510 = vweird.f32 %v1431
          %vm1511 = vweird.f32 %v1504
          %vm1512 = vmor %vm1510, %vm1511
          %v1513 = vsel %vm1512, %v1504, %v1509
          %v1514 = vrsqrt.pop %v1432
          %v1515 = vmul.f32 %v1514, %v1432
          %v1516 = vmul.f32 %v1515, %v1514
          %v1517 = vmul.f32 0.5, %v1516
          %v1518 = vsub.f32 1.5, %v1517
          %v1519 = vmul.f32 %v1514, %v1518
          %vm1520 = vweird.f32 %v1432
          %vm1521 = vweird.f32 %v1514
          %vm1522 = vmor %vm1520, %vm1521
          %v1523 = vsel %vm1522, %v1514, %v1519
          %v1524 = vrsqrt.pop %v1433
          %v1525 = vmul.f32 %v1524, %v1433
          %v1526 = vmul.f32 %v1525, %v1524
          %v1527 = vmul.f32 0.5, %v1526
          %v1528 = vsub.f32 1.5, %v1527
          %v1529 = vmul.f32 %v1524, %v1528
          %vm1530 = vweird.f32 %v1433
          %vm1531 = vweird.f32 %v1524
          %vm1532 = vmor %vm1530, %vm1531
          %v1533 = vsel %vm1532, %v1524, %v1529
          %v1534 = vrsqrt.pop %v1434
          %v1535 = vmul.f32 %v1534, %v1434
          %v1536 = vmul.f32 %v1535, %v1534
          %v1537 = vmul.f32 0.5, %v1536
          %v1538 = vsub.f32 1.5, %v1537
          %v1539 = vmul.f32 %v1534, %v1538
          %vm1540 = vweird.f32 %v1434
          %vm1541 = vweird.f32 %v1534
          %vm1542 = vmor %vm1540, %vm1541
          %v1543 = vsel %vm1542, %v1534, %v1539
          %v1544 = vrsqrt.pop %v1435
          %v1545 = vmul.f32 %v1544, %v1435
          %v1546 = vmul.f32 %v1545, %v1544
          %v1547 = vmul.f32 0.5, %v1546
          %v1548 = vsub.f32 1.5, %v1547
          %v1549 = vmul.f32 %v1544, %v1548
          %vm1550 = vweird.f32 %v1435
          %vm1551 = vweird.f32 %v1544
          %vm1552 = vmor %vm1550, %vm1551
          %v1553 = vsel %vm1552, %v1544, %v1549
          %v1554 = vrsqrt.pop %v1436
          %v1555 = vmul.f32 %v1554, %v1436
          %v1556 = vmul.f32 %v1555, %v1554
          %v1557 = vmul.f32 0.5, %v1556
          %v1558 = vsub.f32 1.5, %v1557
          %v1559 = vmul.f32 %v1554, %v1558
          %vm1560 = vweird.f32 %v1436
          %vm1561 = vweird.f32 %v1554
          %vm1562 = vmor %vm1560, %vm1561
          %v1563 = vsel %vm1562, %v1554, %v1559
          %v1564 = vrsqrt.pop %v1437
          %v1565 = vmul.f32 %v1564, %v1437
          %v1566 = vmul.f32 %v1565, %v1564
          %v1567 = vmul.f32 0.5, %v1566
          %v1568 = vsub.f32 1.5, %v1567
          %v1569 = vmul.f32 %v1564, %v1568
          %vm1570 = vweird.f32 %v1437
          %vm1571 = vweird.f32 %v1564
          %vm1572 = vmor %vm1570, %vm1571
          %v1573 = vsel %vm1572, %v1564, %v1569
          %v1574 = vrsqrt.pop %v1438
          %v1575 = vmul.f32 %v1574, %v1438
          %v1576 = vmul.f32 %v1575, %v1574
          %v1577 = vmul.f32 0.5, %v1576
          %v1578 = vsub.f32 1.5, %v1577
          %v1579 = vmul.f32 %v1574, %v1578
          %vm1580 = vweird.f32 %v1438
          %vm1581 = vweird.f32 %v1574
          %vm1582 = vmor %vm1580, %vm1581
          %v1583 = vsel %vm1582, %v1574, %v1579
          %v1584 = vrsqrt.pop %v1439
          %v1585 = vmul.f32 %v1584, %v1439
          %v1586 = vmul.f32 %v1585, %v1584
          %v1587 = vmul.f32 0.5, %v1586
          %v1588 = vsub.f32 1.5, %v1587
          %v1589 = vmul.f32 %v1584, %v1588
          %vm1590 = vweird.f32 %v1439
          %vm1591 = vweird.f32 %v1584
          %vm1592 = vmor %vm1590, %vm1591
          %v1593 = vsel %vm1592, %v1584, %v1589
          %v1594 = vrsqrt.pop %v1440
          %v1595 = vmul.f32 %v1594, %v1440
          %v1596 = vmul.f32 %v1595, %v1594
          %v1597 = vmul.f32 0.5, %v1596
          %v1598 = vsub.f32 1.5, %v1597
          %v1599 = vmul.f32 %v1594, %v1598
          %vm1600 = vweird.f32 %v1440
          %vm1601 = vweird.f32 %v1594
          %vm1602 = vmor %vm1600, %vm1601
          %v1603 = vsel %vm1602, %v1594, %v1599
          %v1604 = vrsqrt.pop %v1441
          %v1605 = vmul.f32 %v1604, %v1441
          %v1606 = vmul.f32 %v1605, %v1604
          %v1607 = vmul.f32 0.5, %v1606
          %v1608 = vsub.f32 1.5, %v1607
          %v1609 = vmul.f32 %v1604, %v1608
          %vm1610 = vweird.f32 %v1441
          %vm1611 = vweird.f32 %v1604
          %vm1612 = vmor %vm1610, %vm1611
          %v1613 = vsel %vm1612, %v1604, %v1609
          %v1614 = vrsqrt.pop %v1442
          %v1615 = vmul.f32 %v1614, %v1442
          %v1616 = vmul.f32 %v1615, %v1614
          %v1617 = vmul.f32 0.5, %v1616
          %v1618 = vsub.f32 1.5, %v1617
          %v1619 = vmul.f32 %v1614, %v1618
          %vm1620 = vweird.f32 %v1442
          %vm1621 = vweird.f32 %v1614
          %vm1622 = vmor %vm1620, %vm1621
          %v1623 = vsel %vm1622, %v1614, %v1619
          %v1624 = vrsqrt.pop %v1443
          %v1625 = vmul.f32 %v1624, %v1443
          %v1626 = vmul.f32 %v1625, %v1624
          %v1627 = vmul.f32 0.5, %v1626
          %v1628 = vsub.f32 1.5, %v1627
          %v1629 = vmul.f32 %v1624, %v1628
          %vm1630 = vweird.f32 %v1443
          %vm1631 = vweird.f32 %v1624
          %vm1632 = vmor %vm1630, %vm1631
          %v1633 = vsel %vm1632, %v1624, %v1629
          %v1634 = vrsqrt.pop %v1444
          %v1635 = vmul.f32 %v1634, %v1444
          %v1636 = vmul.f32 %v1635, %v1634
          %v1637 = vmul.f32 0.5, %v1636
          %v1638 = vsub.f32 1.5, %v1637
          %v1639 = vmul.f32 %v1634, %v1638
          %vm1640 = vweird.f32 %v1444
          %vm1641 = vweird.f32 %v1634
          %vm1642 = vmor %vm1640, %vm1641
          %v1643 = vsel %vm1642, %v1634, %v1639
          %v1644 = vrsqrt.pop %v1445
          %v1645 = vmul.f32 %v1644, %v1445
          %v1646 = vmul.f32 %v1645, %v1644
          %v1647 = vmul.f32 0.5, %v1646
          %v1648 = vsub.f32 1.5, %v1647
          %v1649 = vmul.f32 %v1644, %v1648
          %vm1650 = vweird.f32 %v1445
          %vm1651 = vweird.f32 %v1644
          %vm1652 = vmor %vm1650, %vm1651
          %v1653 = vsel %vm1652, %v1644, %v1649
          %v1654 = vrsqrt.pop %v1446
          %v1655 = vmul.f32 %v1654, %v1446
          %v1656 = vmul.f32 %v1655, %v1654
          %v1657 = vmul.f32 0.5, %v1656
          %v1658 = vsub.f32 1.5, %v1657
          %v1659 = vmul.f32 %v1654, %v1658
          %vm1660 = vweird.f32 %v1446
          %vm1661 = vweird.f32 %v1654
          %vm1662 = vmor %vm1660, %vm1661
          %v1663 = vsel %vm1662, %v1654, %v1659
          %v1664 = vrsqrt.pop %v1447
          %v1665 = vmul.f32 %v1664, %v1447
          %v1666 = vmul.f32 %v1665, %v1664
          %v1667 = vmul.f32 0.5, %v1666
          %v1668 = vsub.f32 1.5, %v1667
          %v1669 = vmul.f32 %v1664, %v1668
          %vm1670 = vweird.f32 %v1447
          %vm1671 = vweird.f32 %v1664
          %vm1672 = vmor %vm1670, %vm1671
          %v1673 = vsel %vm1672, %v1664, %v1669
          %v1674 = vrsqrt.pop %v1448
          %v1675 = vmul.f32 %v1674, %v1448
          %v1676 = vmul.f32 %v1675, %v1674
          %v1677 = vmul.f32 0.5, %v1676
          %v1678 = vsub.f32 1.5, %v1677
          %v1679 = vmul.f32 %v1674, %v1678
          %vm1680 = vweird.f32 %v1448
          %vm1681 = vweird.f32 %v1674
          %vm1682 = vmor %vm1680, %vm1681
          %v1683 = vsel %vm1682, %v1674, %v1679
          %v1684 = vrsqrt.pop %v1449
          %v1685 = vmul.f32 %v1684, %v1449
          %v1686 = vmul.f32 %v1685, %v1684
          %v1687 = vmul.f32 0.5, %v1686
          %v1688 = vsub.f32 1.5, %v1687
          %v1689 = vmul.f32 %v1684, %v1688
          %vm1690 = vweird.f32 %v1449
          %vm1691 = vweird.f32 %v1684
          %vm1692 = vmor %vm1690, %vm1691
          %v1693 = vsel %vm1692, %v1684, %v1689
          %v1694 = vrsqrt.pop %v1450
          %v1695 = vmul.f32 %v1694, %v1450
          %v1696 = vmul.f32 %v1695, %v1694
          %v1697 = vmul.f32 0.5, %v1696
          %v1698 = vsub.f32 1.5, %v1697
          %v1699 = vmul.f32 %v1694, %v1698
          %vm1700 = vweird.f32 %v1450
          %vm1701 = vweird.f32 %v1694
          %vm1702 = vmor %vm1700, %vm1701
          %v1703 = vsel %vm1702, %v1694, %v1699
          %v1704 = vrsqrt.pop %v1451
          %v1705 = vmul.f32 %v1704, %v1451
          %v1706 = vmul.f32 %v1705, %v1704
          %v1707 = vmul.f32 0.5, %v1706
          %v1708 = vsub.f32 1.5, %v1707
          %v1709 = vmul.f32 %v1704, %v1708
          %vm1710 = vweird.f32 %v1451
          %vm1711 = vweird.f32 %v1704
          %vm1712 = vmor %vm1710, %vm1711
          %v1713 = vsel %vm1712, %v1704, %v1709
          %v1714 = vrsqrt.pop %v1452
          %v1715 = vmul.f32 %v1714, %v1452
          %v1716 = vmul.f32 %v1715, %v1714
          %v1717 = vmul.f32 0.5, %v1716
          %v1718 = vsub.f32 1.5, %v1717
          %v1719 = vmul.f32 %v1714, %v1718
          %vm1720 = vweird.f32 %v1452
          %vm1721 = vweird.f32 %v1714
          %vm1722 = vmor %vm1720, %vm1721
          %v1723 = vsel %vm1722, %v1714, %v1719
          %v1724 = vrsqrt.pop %v1453
          %v1725 = vmul.f32 %v1724, %v1453
          %v1726 = vmul.f32 %v1725, %v1724
          %v1727 = vmul.f32 0.5, %v1726
          %v1728 = vsub.f32 1.5, %v1727
          %v1729 = vmul.f32 %v1724, %v1728
          %vm1730 = vweird.f32 %v1453
          %vm1731 = vweird.f32 %v1724
          %vm1732 = vmor %vm1730, %vm1731
          %v1733 = vsel %vm1732, %v1724, %v1729
          %v1734 = vrsqrt.pop %v1454
          %v1735 = vmul.f32 %v1734, %v1454
          %v1736 = vmul.f32 %v1735, %v1734
          %v1737 = vmul.f32 0.5, %v1736
          %v1738 = vsub.f32 1.5, %v1737
          %v1739 = vmul.f32 %v1734, %v1738
          %vm1740 = vweird.f32 %v1454
          %vm1741 = vweird.f32 %v1734
          %vm1742 = vmor %vm1740, %vm1741
          %v1743 = vsel %vm1742, %v1734, %v1739
          %v1744 = vrsqrt.pop %v1455
          %v1745 = vmul.f32 %v1744, %v1455
          %v1746 = vmul.f32 %v1745, %v1744
          %v1747 = vmul.f32 0.5, %v1746
          %v1748 = vsub.f32 1.5, %v1747
          %v1749 = vmul.f32 %v1744, %v1748
          %vm1750 = vweird.f32 %v1455
          %vm1751 = vweird.f32 %v1744
          %vm1752 = vmor %vm1750, %vm1751
          %v1753 = vsel %vm1752, %v1744, %v1749
          %v1754 = vrsqrt.pop %v1456
          %v1755 = vmul.f32 %v1754, %v1456
          %v1756 = vmul.f32 %v1755, %v1754
          %v1757 = vmul.f32 0.5, %v1756
          %v1758 = vsub.f32 1.5, %v1757
          %v1759 = vmul.f32 %v1754, %v1758
          %vm1760 = vweird.f32 %v1456
          %vm1761 = vweird.f32 %v1754
          %vm1762 = vmor %vm1760, %vm1761
          %v1763 = vsel %vm1762, %v1754, %v1759
          %v1764 = vrsqrt.pop %v1457
          %v1765 = vmul.f32 %v1764, %v1457
          %v1766 = vmul.f32 %v1765, %v1764
          %v1767 = vmul.f32 0.5, %v1766
          %v1768 = vsub.f32 1.5, %v1767
          %v1769 = vmul.f32 %v1764, %v1768
          %vm1770 = vweird.f32 %v1457
          %vm1771 = vweird.f32 %v1764
          %vm1772 = vmor %vm1770, %vm1771
          %v1773 = vsel %vm1772, %v1764, %v1769
          %v1774 = vrsqrt.pop %v1458
          %v1775 = vmul.f32 %v1774, %v1458
          %v1776 = vmul.f32 %v1775, %v1774
          %v1777 = vmul.f32 0.5, %v1776
          %v1778 = vsub.f32 1.5, %v1777
          %v1779 = vmul.f32 %v1774, %v1778
          %vm1780 = vweird.f32 %v1458
          %vm1781 = vweird.f32 %v1774
          %vm1782 = vmor %vm1780, %vm1781
          %v1783 = vsel %vm1782, %v1774, %v1779
          %v1784 = vrsqrt.pop %v1459
          %v1785 = vmul.f32 %v1784, %v1459
          %v1786 = vmul.f32 %v1785, %v1784
          %v1787 = vmul.f32 0.5, %v1786
          %v1788 = vsub.f32 1.5, %v1787
          %v1789 = vmul.f32 %v1784, %v1788
          %vm1790 = vweird.f32 %v1459
          %vm1791 = vweird.f32 %v1784
          %vm1792 = vmor %vm1790, %vm1791
          %v1793 = vsel %vm1792, %v1784, %v1789
          %v1794 = vrsqrt.pop %v1460
          %v1795 = vmul.f32 %v1794, %v1460
          %v1796 = vmul.f32 %v1795, %v1794
          %v1797 = vmul.f32 0.5, %v1796
          %v1798 = vsub.f32 1.5, %v1797
          %v1799 = vmul.f32 %v1794, %v1798
          %vm1800 = vweird.f32 %v1460
          %vm1801 = vweird.f32 %v1794
          %vm1802 = vmor %vm1800, %vm1801
          %v1803 = vsel %vm1802, %v1794, %v1799
          %v1804 = vrsqrt.pop %v1461
          %v1805 = vmul.f32 %v1804, %v1461
          %v1806 = vmul.f32 %v1805, %v1804
          %v1807 = vmul.f32 0.5, %v1806
          %v1808 = vsub.f32 1.5, %v1807
          %v1809 = vmul.f32 %v1804, %v1808
          %vm1810 = vweird.f32 %v1461
          %vm1811 = vweird.f32 %v1804
          %vm1812 = vmor %vm1810, %vm1811
          %v1813 = vsel %vm1812, %v1804, %v1809
          %v1815 = vperm.slane %v864, 0
          %v1817 = vmul.f32 %v1815, %v1503
          %v1818 = vmul.f32 %v1815, %v1513
          %v1819 = vmul.f32 %v1815, %v1523
          %v1820 = vmul.f32 %v1815, %v1533
          %v1821 = vmul.f32 %v1815, %v1543
          %v1822 = vmul.f32 %v1815, %v1553
          %v1823 = vmul.f32 %v1815, %v1563
          %v1824 = vmul.f32 %v1815, %v1573
          %v1825 = vmul.f32 %v1815, %v1583
          %v1826 = vmul.f32 %v1815, %v1593
          %v1827 = vmul.f32 %v1815, %v1603
          %v1828 = vmul.f32 %v1815, %v1613
          %v1829 = vmul.f32 %v1815, %v1623
          %v1830 = vmul.f32 %v1815, %v1633
          %v1831 = vmul.f32 %v1815, %v1643
          %v1832 = vmul.f32 %v1815, %v1653
          %v1833 = vmul.f32 %v1815, %v1663
          %v1834 = vmul.f32 %v1815, %v1673
          %v1835 = vmul.f32 %v1815, %v1683
          %v1836 = vmul.f32 %v1815, %v1693
          %v1837 = vmul.f32 %v1815, %v1703
          %v1838 = vmul.f32 %v1815, %v1713
          %v1839 = vmul.f32 %v1815, %v1723
          %v1840 = vmul.f32 %v1815, %v1733
          %v1841 = vmul.f32 %v1815, %v1743
          %v1842 = vmul.f32 %v1815, %v1753
          %v1843 = vmul.f32 %v1815, %v1763
          %v1844 = vmul.f32 %v1815, %v1773
          %v1845 = vmul.f32 %v1815, %v1783
          %v1846 = vmul.f32 %v1815, %v1793
          %v1847 = vmul.f32 %v1815, %v1803
          %v1848 = vmul.f32 %v1815, %v1813
          %v1849 = vmul.f32 %v1462, %v1817
          %v1850 = vmul.f32 %v1463, %v1818
          %v1851 = vmul.f32 %v1464, %v1819
          %v1852 = vmul.f32 %v1465, %v1820
          %v1853 = vmul.f32 %v1466, %v1821
          %v1854 = vmul.f32 %v1467, %v1822
          %v1855 = vmul.f32 %v1468, %v1823
          %v1856 = vmul.f32 %v1469, %v1824
          %v1857 = vmul.f32 %v1470, %v1825
          %v1858 = vmul.f32 %v1471, %v1826
          %v1859 = vmul.f32 %v1472, %v1827
          %v1860 = vmul.f32 %v1473, %v1828
          %v1861 = vmul.f32 %v1474, %v1829
          %v1862 = vmul.f32 %v1475, %v1830
          %v1863 = vmul.f32 %v1476, %v1831
          %v1864 = vmul.f32 %v1477, %v1832
          %v1865 = vmul.f32 %v1478, %v1833
          %v1866 = vmul.f32 %v1479, %v1834
          %v1867 = vmul.f32 %v1480, %v1835
          %v1868 = vmul.f32 %v1481, %v1836
          %v1869 = vmul.f32 %v1482, %v1837
          %v1870 = vmul.f32 %v1483, %v1838
          %v1871 = vmul.f32 %v1484, %v1839
          %v1872 = vmul.f32 %v1485, %v1840
          %v1873 = vmul.f32 %v1486, %v1841
          %v1874 = vmul.f32 %v1487, %v1842
          %v1875 = vmul.f32 %v1488, %v1843
          %v1876 = vmul.f32 %v1489, %v1844
          %v1877 = vmul.f32 %v1490, %v1845
          %v1878 = vmul.f32 %v1491, %v1846
          %v1879 = vmul.f32 %v1492, %v1847
          %v1880 = vmul.f32 %v1493, %v1848
          %v1882 = vperm.slane %v865, 0
          %v1884 = vadd.f32 %v1849, %v1882
          %v1885 = vadd.f32 %v1850, %v1882
          %v1886 = vadd.f32 %v1851, %v1882
          %v1887 = vadd.f32 %v1852, %v1882
          %v1888 = vadd.f32 %v1853, %v1882
          %v1889 = vadd.f32 %v1854, %v1882
          %v1890 = vadd.f32 %v1855, %v1882
          %v1891 = vadd.f32 %v1856, %v1882
          %v1892 = vadd.f32 %v1857, %v1882
          %v1893 = vadd.f32 %v1858, %v1882
          %v1894 = vadd.f32 %v1859, %v1882
          %v1895 = vadd.f32 %v1860, %v1882
          %v1896 = vadd.f32 %v1861, %v1882
          %v1897 = vadd.f32 %v1862, %v1882
          %v1898 = vadd.f32 %v1863, %v1882
          %v1899 = vadd.f32 %v1864, %v1882
          %v1900 = vadd.f32 %v1865, %v1882
          %v1901 = vadd.f32 %v1866, %v1882
          %v1902 = vadd.f32 %v1867, %v1882
          %v1903 = vadd.f32 %v1868, %v1882
          %v1904 = vadd.f32 %v1869, %v1882
          %v1905 = vadd.f32 %v1870, %v1882
          %v1906 = vadd.f32 %v1871, %v1882
          %v1907 = vadd.f32 %v1872, %v1882
          %v1908 = vadd.f32 %v1873, %v1882
          %v1909 = vadd.f32 %v1874, %v1882
          %v1910 = vadd.f32 %v1875, %v1882
          %v1911 = vadd.f32 %v1876, %v1882
          %v1912 = vadd.f32 %v1877, %v1882
          %v1913 = vadd.f32 %v1878, %v1882
          %v1914 = vadd.f32 %v1879, %v1882
          %v1915 = vadd.f32 %v1880, %v1882
          %v1916 = vadd.f32 %v1884, 0.0
          %v1917 = vadd.f32 %v1885, 0.0
          %v1918 = vadd.f32 %v1886, 0.0
          %v1919 = vadd.f32 %v1887, 0.0
          %v1920 = vadd.f32 %v1888, 0.0
          %v1921 = vadd.f32 %v1889, 0.0
          %v1922 = vadd.f32 %v1890, 0.0
          %v1923 = vadd.f32 %v1891, 0.0
          %v1924 = vadd.f32 %v1892, 0.0
          %v1925 = vadd.f32 %v1893, 0.0
          %v1926 = vadd.f32 %v1894, 0.0
          %v1927 = vadd.f32 %v1895, 0.0
          %v1928 = vadd.f32 %v1896, 0.0
          %v1929 = vadd.f32 %v1897, 0.0
          %v1930 = vadd.f32 %v1898, 0.0
          %v1931 = vadd.f32 %v1899, 0.0
          %v1932 = vadd.f32 %v1900, 0.0
          %v1933 = vadd.f32 %v1901, 0.0
          %v1934 = vadd.f32 %v1902, 0.0
          %v1935 = vadd.f32 %v1903, 0.0
          %v1936 = vadd.f32 %v1904, 0.0
          %v1937 = vadd.f32 %v1905, 0.0
          %v1938 = vadd.f32 %v1906, 0.0
          %v1939 = vadd.f32 %v1907, 0.0
          %v1940 = vadd.f32 %v1908, 0.0
          %v1941 = vadd.f32 %v1909, 0.0
          %v1942 = vadd.f32 %v1910, 0.0
          %v1943 = vadd.f32 %v1911, 0.0
          %v1944 = vadd.f32 %v1912, 0.0
          %v1945 = vadd.f32 %v1913, 0.0
          %v1946 = vadd.f32 %v1914, 0.0
          %v1947 = vadd.f32 %v1915, 0.0
          %v1948 = vld [vmem:[#allocation2] sm:$0xff]
          %v1949 = vld [vmem:[#allocation2 + $0x8] sm:$0xff]
          %v1950 = vld [vmem:[#allocation2 + $0x10] sm:$0xff]
          %v1951 = vld [vmem:[#allocation2 + $0x18] sm:$0xff]
          %v1952 = vld [vmem:[#allocation2 + $0x20] sm:$0xff]
          %v1953 = vld [vmem:[#allocation2 + $0x28] sm:$0xff]
          %v1954 = vld [vmem:[#allocation2 + $0x30] sm:$0xff]
          %v1955 = vld [vmem:[#allocation2 + $0x38] sm:$0xff]
          %v1956 = vld [vmem:[#allocation2 + $0x40] sm:$0xff]
          %v1957 = vld [vmem:[#allocation2 + $0x48] sm:$0xff]
          %v1958 = vld [vmem:[#allocation2 + $0x50] sm:$0xff]
          %v1959 = vld [vmem:[#allocation2 + $0x58] sm:$0xff]
          %v1960 = vld [vmem:[#allocation2 + $0x60] sm:$0xff]
          %v1961 = vld [vmem:[#allocation2 + $0x68] sm:$0xff]
          %v1962 = vld [vmem:[#allocation2 + $0x70] sm:$0xff]
          %v1963 = vld [vmem:[#allocation2 + $0x78] sm:$0xff]
          %v1964 = vld [vmem:[#allocation2 + $0x80] sm:$0xff]
          %v1965 = vld [vmem:[#allocation2 + $0x88] sm:$0xff]
          %v1966 = vld [vmem:[#allocation2 + $0x90] sm:$0xff]
          %v1967 = vld [vmem:[#allocation2 + $0x98] sm:$0xff]
          %v1968 = vld [vmem:[#allocation2 + $0xa0] sm:$0xff]
          %v1969 = vld [vmem:[#allocation2 + $0xa8] sm:$0xff]
          %v1970 = vld [vmem:[#allocation2 + $0xb0] sm:$0xff]
          %v1971 = vld [vmem:[#allocation2 + $0xb8] sm:$0xff]
          %v1972 = vld [vmem:[#allocation2 + $0xc0] sm:$0xff]
          %v1973 = vld [vmem:[#allocation2 + $0xc8] sm:$0xff]
          %v1974 = vld [vmem:[#allocation2 + $0xd0] sm:$0xff]
          %v1975 = vld [vmem:[#allocation2 + $0xd8] sm:$0xff]
          %v1976 = vld [vmem:[#allocation2 + $0xe0] sm:$0xff]
          %v1977 = vld [vmem:[#allocation2 + $0xe8] sm:$0xff]
          %v1978 = vld [vmem:[#allocation2 + $0xf0] sm:$0xff]
          %v1979 = vld [vmem:[#allocation2 + $0xf8] sm:$0xff]
          %s1980 = scalar_lea.vmem %s3, 64
          %v1981 = vld [vmem:[%s1980] sm:$0xff]
          %v1982 = vld [vmem:[%s1980 + $0x8] sm:$0xff]
          %v1983 = vld [vmem:[%s1980 + $0x10] sm:$0xff]
          %v1984 = vld [vmem:[%s1980 + $0x18] sm:$0xff]
          %v1985 = vld [vmem:[%s1980 + $0x20] sm:$0xff]
          %v1986 = vld [vmem:[%s1980 + $0x28] sm:$0xff]
          %v1987 = vld [vmem:[%s1980 + $0x30] sm:$0xff]
          %v1988 = vld [vmem:[%s1980 + $0x38] sm:$0xff]
          %s1989 = scalar_lea.vmem %s4, 1
          %v1990 = vld [vmem:[%s1989] sm:$0x1]
          %s1991 = scalar_lea.vmem %s5, 1
          %v1992 = vld [vmem:[%s1991] sm:$0x1]
          %s1993 = scalar_lea.vmem %s6, 1
          %v1994 = vld [vmem:[%s1993] sm:$0x1]
          %v1996 = vperm.slane %v1990, 0
          %v1999 = vsel %vm786, %v1948, 0
          %v2002 = vsel %vm786, %v1949, 0
          %v2005 = vsel %vm786, %v1950, 0
          %v2008 = vsel %vm786, %v1951, 0
          %v2011 = vsel %vm786, %v1952, 0
          %v2014 = vsel %vm786, %v1953, 0
          %v2017 = vsel %vm786, %v1954, 0
          %v2020 = vsel %vm786, %v1955, 0
          %v2023 = vsel %vm786, %v1956, 0
          %v2026 = vsel %vm786, %v1957, 0
          %v2029 = vsel %vm786, %v1958, 0
          %v2032 = vsel %vm786, %v1959, 0
          %v2035 = vsel %vm786, %v1960, 0
          %v2038 = vsel %vm786, %v1961, 0
          %v2041 = vsel %vm786, %v1962, 0
          %v2044 = vsel %vm786, %v1963, 0
          %v2047 = vsel %vm786, %v1964, 0
          %v2050 = vsel %vm786, %v1965, 0
          %v2053 = vsel %vm786, %v1966, 0
          %v2056 = vsel %vm786, %v1967, 0
          %v2059 = vsel %vm786, %v1968, 0
          %v2062 = vsel %vm786, %v1969, 0
          %v2065 = vsel %vm786, %v1970, 0
          %v2068 = vsel %vm786, %v1971, 0
          %v2071 = vsel %vm786, %v1972, 0
          %v2074 = vsel %vm786, %v1973, 0
          %v2077 = vsel %vm786, %v1974, 0
          %v2080 = vsel %vm786, %v1975, 0
          %v2083 = vsel %vm786, %v1976, 0
          %v2086 = vsel %vm786, %v1977, 0
          %v2089 = vsel %vm786, %v1978, 0
          %v2092 = vsel %vm786, %v1979, 0
          %2094 = vmatpush.msra.mxu0 0.0
          %2095 = vmatpush.msra.mxu0 0.0
          %2096 = vmatpush.msra.mxu0 0.0
          %2097 = vmatpush.msra.mxu0 0.0
          %2098 = vmatpush.msra.mxu0 0.0
          %2099 = vmatpush.msra.mxu0 0.0
          %2100 = vmatpush.msra.mxu0 0.0
          %2101 = vmatpush.msra.mxu0 0.0
          %2102 = vmatpush.msra.mxu0 %v1988
          %2103 = vmatpush.msra.mxu0 %v1987
          %2104 = vmatpush.msra.mxu0 %v1986
          %2105 = vmatpush.msra.mxu0 %v1985
          %2106 = vmatpush.msra.mxu0 %v1984
          %2107 = vmatpush.msra.mxu0 %v1983
          %2108 = vmatpush.msra.mxu0 %v1982
          %2109 = vmatpush.msra.mxu0 %v1981
          %2110 = vmatmul.f32.gmra.mxu0 %v1999
          %v2111 = vpop.f32.mrf.mxu0
          %v2112 = vadd.f32 %v1996, %v2111
          %2113 = vmatmul.f32.gmra.mxu0 %v2002
          %v2114 = vpop.f32.mrf.mxu0
          %v2115 = vadd.f32 %v1996, %v2114
          %2116 = vmatmul.f32.gmra.mxu0 %v2005
          %v2117 = vpop.f32.mrf.mxu0
          %v2118 = vadd.f32 %v1996, %v2117
          %2119 = vmatmul.f32.gmra.mxu0 %v2008
          %v2120 = vpop.f32.mrf.mxu0
          %v2121 = vadd.f32 %v1996, %v2120
          %2122 = vmatmul.f32.gmra.mxu0 %v2011
          %v2123 = vpop.f32.mrf.mxu0
          %v2124 = vadd.f32 %v1996, %v2123
          %2125 = vmatmul.f32.gmra.mxu0 %v2014
          %v2126 = vpop.f32.mrf.mxu0
          %v2127 = vadd.f32 %v1996, %v2126
          %2128 = vmatmul.f32.gmra.mxu0 %v2017
          %v2129 = vpop.f32.mrf.mxu0
          %v2130 = vadd.f32 %v1996, %v2129
          %2131 = vmatmul.f32.gmra.mxu0 %v2020
          %v2132 = vpop.f32.mrf.mxu0
          %v2133 = vadd.f32 %v1996, %v2132
          %2134 = vmatmul.f32.gmra.mxu0 %v2023
          %v2135 = vpop.f32.mrf.mxu0
          %v2136 = vadd.f32 %v1996, %v2135
          %2137 = vmatmul.f32.gmra.mxu0 %v2026
          %v2138 = vpop.f32.mrf.mxu0
          %v2139 = vadd.f32 %v1996, %v2138
          %2140 = vmatmul.f32.gmra.mxu0 %v2029
          %v2141 = vpop.f32.mrf.mxu0
          %v2142 = vadd.f32 %v1996, %v2141
          %2143 = vmatmul.f32.gmra.mxu0 %v2032
          %v2144 = vpop.f32.mrf.mxu0
          %v2145 = vadd.f32 %v1996, %v2144
          %2146 = vmatmul.f32.gmra.mxu0 %v2035
          %v2147 = vpop.f32.mrf.mxu0
          %v2148 = vadd.f32 %v1996, %v2147
          %2149 = vmatmul.f32.gmra.mxu0 %v2038
          %v2150 = vpop.f32.mrf.mxu0
          %v2151 = vadd.f32 %v1996, %v2150
          %2152 = vmatmul.f32.gmra.mxu0 %v2041
          %v2153 = vpop.f32.mrf.mxu0
          %v2154 = vadd.f32 %v1996, %v2153
          %2155 = vmatmul.f32.gmra.mxu0 %v2044
          %v2156 = vpop.f32.mrf.mxu0
          %v2157 = vadd.f32 %v1996, %v2156
          %2158 = vmatmul.f32.gmra.mxu0 %v2047
          %v2159 = vpop.f32.mrf.mxu0
          %v2160 = vadd.f32 %v1996, %v2159
          %2161 = vmatmul.f32.gmra.mxu0 %v2050
          %v2162 = vpop.f32.mrf.mxu0
          %v2163 = vadd.f32 %v1996, %v2162
          %2164 = vmatmul.f32.gmra.mxu0 %v2053
          %v2165 = vpop.f32.mrf.mxu0
          %v2166 = vadd.f32 %v1996, %v2165
          %2167 = vmatmul.f32.gmra.mxu0 %v2056
          %v2168 = vpop.f32.mrf.mxu0
          %v2169 = vadd.f32 %v1996, %v2168
          %2170 = vmatmul.f32.gmra.mxu0 %v2059
          %v2171 = vpop.f32.mrf.mxu0
          %v2172 = vadd.f32 %v1996, %v2171
          %2173 = vmatmul.f32.gmra.mxu0 %v2062
          %v2174 = vpop.f32.mrf.mxu0
          %v2175 = vadd.f32 %v1996, %v2174
          %2176 = vmatmul.f32.gmra.mxu0 %v2065
          %v2177 = vpop.f32.mrf.mxu0
          %v2178 = vadd.f32 %v1996, %v2177
          %2179 = vmatmul.f32.gmra.mxu0 %v2068
          %v2180 = vpop.f32.mrf.mxu0
          %v2181 = vadd.f32 %v1996, %v2180
          %2182 = vmatmul.f32.gmra.mxu0 %v2071
          %v2183 = vpop.f32.mrf.mxu0
          %v2184 = vadd.f32 %v1996, %v2183
          %2185 = vmatmul.f32.gmra.mxu0 %v2074
          %v2186 = vpop.f32.mrf.mxu0
          %v2187 = vadd.f32 %v1996, %v2186
          %2188 = vmatmul.f32.gmra.mxu0 %v2077
          %v2189 = vpop.f32.mrf.mxu0
          %v2190 = vadd.f32 %v1996, %v2189
          %2191 = vmatmul.f32.gmra.mxu0 %v2080
          %v2192 = vpop.f32.mrf.mxu0
          %v2193 = vadd.f32 %v1996, %v2192
          %2194 = vmatmul.f32.gmra.mxu0 %v2083
          %v2195 = vpop.f32.mrf.mxu0
          %v2196 = vadd.f32 %v1996, %v2195
          %2197 = vmatmul.f32.gmra.mxu0 %v2086
          %v2198 = vpop.f32.mrf.mxu0
          %v2199 = vadd.f32 %v1996, %v2198
          %2200 = vmatmul.f32.gmra.mxu0 %v2089
          %v2201 = vpop.f32.mrf.mxu0
          %v2202 = vadd.f32 %v1996, %v2201
          %2203 = vmatmul.f32.gmra.mxu0 %v2092
          %v2204 = vpop.f32.mrf.mxu0
          %v2205 = vadd.f32 %v1996, %v2204
          %2206 = vdwg.mxu0
          %v2207 = vmax.f32 %v2112, 0.0
          %v2208 = vmax.f32 %v2115, 0.0
          %v2209 = vmax.f32 %v2118, 0.0
          %v2210 = vmax.f32 %v2121, 0.0
          %v2211 = vmax.f32 %v2124, 0.0
          %v2212 = vmax.f32 %v2127, 0.0
          %v2213 = vmax.f32 %v2130, 0.0
          %v2214 = vmax.f32 %v2133, 0.0
          %v2215 = vmax.f32 %v2136, 0.0
          %v2216 = vmax.f32 %v2139, 0.0
          %v2217 = vmax.f32 %v2142, 0.0
          %v2218 = vmax.f32 %v2145, 0.0
          %v2219 = vmax.f32 %v2148, 0.0
          %v2220 = vmax.f32 %v2151, 0.0
          %v2221 = vmax.f32 %v2154, 0.0
          %v2222 = vmax.f32 %v2157, 0.0
          %v2223 = vmax.f32 %v2160, 0.0
          %v2224 = vmax.f32 %v2163, 0.0
          %v2225 = vmax.f32 %v2166, 0.0
          %v2226 = vmax.f32 %v2169, 0.0
          %v2227 = vmax.f32 %v2172, 0.0
          %v2228 = vmax.f32 %v2175, 0.0
          %v2229 = vmax.f32 %v2178, 0.0
          %v2230 = vmax.f32 %v2181, 0.0
          %v2231 = vmax.f32 %v2184, 0.0
          %v2232 = vmax.f32 %v2187, 0.0
          %v2233 = vmax.f32 %v2190, 0.0
          %v2234 = vmax.f32 %v2193, 0.0
          %v2235 = vmax.f32 %v2196, 0.0
          %v2236 = vmax.f32 %v2199, 0.0
          %v2237 = vmax.f32 %v2202, 0.0
          %v2238 = vmax.f32 %v2205, 0.0
          %2239 = vadd.xlane.f32.xlu0 %v2207
          %v2240 = vpop.xlane.xlu0 %2239
          %2241 = vadd.xlane.f32.xlu0 %v2208
          %v2242 = vpop.xlane.xlu0 %2241
          %2243 = vadd.xlane.f32.xlu0 %v2209
          %v2244 = vpop.xlane.xlu0 %2243
          %2245 = vadd.xlane.f32.xlu0 %v2210
          %v2246 = vpop.xlane.xlu0 %2245
          %2247 = vadd.xlane.f32.xlu0 %v2211
          %v2248 = vpop.xlane.xlu0 %2247
          %2249 = vadd.xlane.f32.xlu0 %v2212
          %v2250 = vpop.xlane.xlu0 %2249
          %2251 = vadd.xlane.f32.xlu0 %v2213
          %v2252 = vpop.xlane.xlu0 %2251
          %2253 = vadd.xlane.f32.xlu0 %v2214
          %v2254 = vpop.xlane.xlu0 %2253
          %2255 = vadd.xlane.f32.xlu0 %v2215
          %v2256 = vpop.xlane.xlu0 %2255
          %2257 = vadd.xlane.f32.xlu0 %v2216
          %v2258 = vpop.xlane.xlu0 %2257
          %2259 = vadd.xlane.f32.xlu0 %v2217
          %v2260 = vpop.xlane.xlu0 %2259
          %2261 = vadd.xlane.f32.xlu0 %v2218
          %v2262 = vpop.xlane.xlu0 %2261
          %2263 = vadd.xlane.f32.xlu0 %v2219
          %v2264 = vpop.xlane.xlu0 %2263
          %2265 = vadd.xlane.f32.xlu0 %v2220
          %v2266 = vpop.xlane.xlu0 %2265
          %2267 = vadd.xlane.f32.xlu0 %v2221
          %v2268 = vpop.xlane.xlu0 %2267
          %2269 = vadd.xlane.f32.xlu0 %v2222
          %v2270 = vpop.xlane.xlu0 %2269
          %2271 = vadd.xlane.f32.xlu0 %v2223
          %v2272 = vpop.xlane.xlu0 %2271
          %2273 = vadd.xlane.f32.xlu0 %v2224
          %v2274 = vpop.xlane.xlu0 %2273
          %2275 = vadd.xlane.f32.xlu0 %v2225
          %v2276 = vpop.xlane.xlu0 %2275
          %2277 = vadd.xlane.f32.xlu0 %v2226
          %v2278 = vpop.xlane.xlu0 %2277
          %2279 = vadd.xlane.f32.xlu0 %v2227
          %v2280 = vpop.xlane.xlu0 %2279
          %2281 = vadd.xlane.f32.xlu0 %v2228
          %v2282 = vpop.xlane.xlu0 %2281
          %2283 = vadd.xlane.f32.xlu0 %v2229
          %v2284 = vpop.xlane.xlu0 %2283
          %2285 = vadd.xlane.f32.xlu0 %v2230
          %v2286 = vpop.xlane.xlu0 %2285
          %2287 = vadd.xlane.f32.xlu0 %v2231
          %v2288 = vpop.xlane.xlu0 %2287
          %2289 = vadd.xlane.f32.xlu0 %v2232
          %v2290 = vpop.xlane.xlu0 %2289
          %2291 = vadd.xlane.f32.xlu0 %v2233
          %v2292 = vpop.xlane.xlu0 %2291
          %2293 = vadd.xlane.f32.xlu0 %v2234
          %v2294 = vpop.xlane.xlu0 %2293
          %2295 = vadd.xlane.f32.xlu0 %v2235
          %v2296 = vpop.xlane.xlu0 %2295
          %2297 = vadd.xlane.f32.xlu0 %v2236
          %v2298 = vpop.xlane.xlu0 %2297
          %2299 = vadd.xlane.f32.xlu0 %v2237
          %v2300 = vpop.xlane.xlu0 %2299
          %2301 = vadd.xlane.f32.xlu0 %v2238
          %v2302 = vpop.xlane.xlu0 %2301
          %v2303 = vmul.f32 %v2207, %v2207
          %v2304 = vmul.f32 %v2208, %v2208
          %v2305 = vmul.f32 %v2209, %v2209
          %v2306 = vmul.f32 %v2210, %v2210
          %v2307 = vmul.f32 %v2211, %v2211
          %v2308 = vmul.f32 %v2212, %v2212
          %v2309 = vmul.f32 %v2213, %v2213
          %v2310 = vmul.f32 %v2214, %v2214
          %v2311 = vmul.f32 %v2215, %v2215
          %v2312 = vmul.f32 %v2216, %v2216
          %v2313 = vmul.f32 %v2217, %v2217
          %v2314 = vmul.f32 %v2218, %v2218
          %v2315 = vmul.f32 %v2219, %v2219
          %v2316 = vmul.f32 %v2220, %v2220
          %v2317 = vmul.f32 %v2221, %v2221
          %v2318 = vmul.f32 %v2222, %v2222
          %v2319 = vmul.f32 %v2223, %v2223
          %v2320 = vmul.f32 %v2224, %v2224
          %v2321 = vmul.f32 %v2225, %v2225
          %v2322 = vmul.f32 %v2226, %v2226
          %v2323 = vmul.f32 %v2227, %v2227
          %v2324 = vmul.f32 %v2228, %v2228
          %v2325 = vmul.f32 %v2229, %v2229
          %v2326 = vmul.f32 %v2230, %v2230
          %v2327 = vmul.f32 %v2231, %v2231
          %v2328 = vmul.f32 %v2232, %v2232
          %v2329 = vmul.f32 %v2233, %v2233
          %v2330 = vmul.f32 %v2234, %v2234
          %v2331 = vmul.f32 %v2235, %v2235
          %v2332 = vmul.f32 %v2236, %v2236
          %v2333 = vmul.f32 %v2237, %v2237
          %v2334 = vmul.f32 %v2238, %v2238
          %2335 = vadd.xlane.f32.xlu0 %v2303
          %v2336 = vpop.xlane.xlu0 %2335
          %2337 = vadd.xlane.f32.xlu0 %v2304
          %v2338 = vpop.xlane.xlu0 %2337
          %2339 = vadd.xlane.f32.xlu0 %v2305
          %v2340 = vpop.xlane.xlu0 %2339
          %2341 = vadd.xlane.f32.xlu0 %v2306
          %v2342 = vpop.xlane.xlu0 %2341
          %2343 = vadd.xlane.f32.xlu0 %v2307
          %v2344 = vpop.xlane.xlu0 %2343
          %2345 = vadd.xlane.f32.xlu0 %v2308
          %v2346 = vpop.xlane.xlu0 %2345
          %2347 = vadd.xlane.f32.xlu0 %v2309
          %v2348 = vpop.xlane.xlu0 %2347
          %2349 = vadd.xlane.f32.xlu0 %v2310
          %v2350 = vpop.xlane.xlu0 %2349
          %2351 = vadd.xlane.f32.xlu0 %v2311
          %v2352 = vpop.xlane.xlu0 %2351
          %2353 = vadd.xlane.f32.xlu0 %v2312
          %v2354 = vpop.xlane.xlu0 %2353
          %2355 = vadd.xlane.f32.xlu0 %v2313
          %v2356 = vpop.xlane.xlu0 %2355
          %2357 = vadd.xlane.f32.xlu0 %v2314
          %v2358 = vpop.xlane.xlu0 %2357
          %2359 = vadd.xlane.f32.xlu0 %v2315
          %v2360 = vpop.xlane.xlu0 %2359
          %2361 = vadd.xlane.f32.xlu0 %v2316
          %v2362 = vpop.xlane.xlu0 %2361
          %2363 = vadd.xlane.f32.xlu0 %v2317
          %v2364 = vpop.xlane.xlu0 %2363
          %2365 = vadd.xlane.f32.xlu0 %v2318
          %v2366 = vpop.xlane.xlu0 %2365
          %2367 = vadd.xlane.f32.xlu0 %v2319
          %v2368 = vpop.xlane.xlu0 %2367
          %2369 = vadd.xlane.f32.xlu0 %v2320
          %v2370 = vpop.xlane.xlu0 %2369
          %2371 = vadd.xlane.f32.xlu0 %v2321
          %v2372 = vpop.xlane.xlu0 %2371
          %2373 = vadd.xlane.f32.xlu0 %v2322
          %v2374 = vpop.xlane.xlu0 %2373
          %2375 = vadd.xlane.f32.xlu0 %v2323
          %v2376 = vpop.xlane.xlu0 %2375
          %2377 = vadd.xlane.f32.xlu0 %v2324
          %v2378 = vpop.xlane.xlu0 %2377
          %2379 = vadd.xlane.f32.xlu0 %v2325
          %v2380 = vpop.xlane.xlu0 %2379
          %2381 = vadd.xlane.f32.xlu0 %v2326
          %v2382 = vpop.xlane.xlu0 %2381
          %2383 = vadd.xlane.f32.xlu0 %v2327
          %v2384 = vpop.xlane.xlu0 %2383
          %2385 = vadd.xlane.f32.xlu0 %v2328
          %v2386 = vpop.xlane.xlu0 %2385
          %2387 = vadd.xlane.f32.xlu0 %v2329
          %v2388 = vpop.xlane.xlu0 %2387
          %2389 = vadd.xlane.f32.xlu0 %v2330
          %v2390 = vpop.xlane.xlu0 %2389
          %2391 = vadd.xlane.f32.xlu0 %v2331
          %v2392 = vpop.xlane.xlu0 %2391
          %2393 = vadd.xlane.f32.xlu0 %v2332
          %v2394 = vpop.xlane.xlu0 %2393
          %2395 = vadd.xlane.f32.xlu0 %v2333
          %v2396 = vpop.xlane.xlu0 %2395
          %2397 = vadd.xlane.f32.xlu0 %v2334
          %v2398 = vpop.xlane.xlu0 %2397
          %v2399 = vmul.f32 %v2240, 0.0078125
          %v2400 = vmul.f32 %v2242, 0.0078125
          %v2401 = vmul.f32 %v2244, 0.0078125
          %v2402 = vmul.f32 %v2246, 0.0078125
          %v2403 = vmul.f32 %v2248, 0.0078125
          %v2404 = vmul.f32 %v2250, 0.0078125
          %v2405 = vmul.f32 %v2252, 0.0078125
          %v2406 = vmul.f32 %v2254, 0.0078125
          %v2407 = vmul.f32 %v2256, 0.0078125
          %v2408 = vmul.f32 %v2258, 0.0078125
          %v2409 = vmul.f32 %v2260, 0.0078125
          %v2410 = vmul.f32 %v2262, 0.0078125
          %v2411 = vmul.f32 %v2264, 0.0078125
          %v2412 = vmul.f32 %v2266, 0.0078125
          %v2413 = vmul.f32 %v2268, 0.0078125
          %v2414 = vmul.f32 %v2270, 0.0078125
          %v2415 = vmul.f32 %v2272, 0.0078125
          %v2416 = vmul.f32 %v2274, 0.0078125
          %v2417 = vmul.f32 %v2276, 0.0078125
          %v2418 = vmul.f32 %v2278, 0.0078125
          %v2419 = vmul.f32 %v2280, 0.0078125
          %v2420 = vmul.f32 %v2282, 0.0078125
          %v2421 = vmul.f32 %v2284, 0.0078125
          %v2422 = vmul.f32 %v2286, 0.0078125
          %v2423 = vmul.f32 %v2288, 0.0078125
          %v2424 = vmul.f32 %v2290, 0.0078125
          %v2425 = vmul.f32 %v2292, 0.0078125
          %v2426 = vmul.f32 %v2294, 0.0078125
          %v2427 = vmul.f32 %v2296, 0.0078125
          %v2428 = vmul.f32 %v2298, 0.0078125
          %v2429 = vmul.f32 %v2300, 0.0078125
          %v2430 = vmul.f32 %v2302, 0.0078125
          %v2431 = vmul.f32 %v2336, 0.0078125
          %v2432 = vmul.f32 %v2338, 0.0078125
          %v2433 = vmul.f32 %v2340, 0.0078125
          %v2434 = vmul.f32 %v2342, 0.0078125
          %v2435 = vmul.f32 %v2344, 0.0078125
          %v2436 = vmul.f32 %v2346, 0.0078125
          %v2437 = vmul.f32 %v2348, 0.0078125
          %v2438 = vmul.f32 %v2350, 0.0078125
          %v2439 = vmul.f32 %v2352, 0.0078125
          %v2440 = vmul.f32 %v2354, 0.0078125
          %v2441 = vmul.f32 %v2356, 0.0078125
          %v2442 = vmul.f32 %v2358, 0.0078125
          %v2443 = vmul.f32 %v2360, 0.0078125
          %v2444 = vmul.f32 %v2362, 0.0078125
          %v2445 = vmul.f32 %v2364, 0.0078125
          %v2446 = vmul.f32 %v2366, 0.0078125
          %v2447 = vmul.f32 %v2368, 0.0078125
          %v2448 = vmul.f32 %v2370, 0.0078125
          %v2449 = vmul.f32 %v2372, 0.0078125
          %v2450 = vmul.f32 %v2374, 0.0078125
          %v2451 = vmul.f32 %v2376, 0.0078125
          %v2452 = vmul.f32 %v2378, 0.0078125
          %v2453 = vmul.f32 %v2380, 0.0078125
          %v2454 = vmul.f32 %v2382, 0.0078125
          %v2455 = vmul.f32 %v2384, 0.0078125
          %v2456 = vmul.f32 %v2386, 0.0078125
          %v2457 = vmul.f32 %v2388, 0.0078125
          %v2458 = vmul.f32 %v2390, 0.0078125
          %v2459 = vmul.f32 %v2392, 0.0078125
          %v2460 = vmul.f32 %v2394, 0.0078125
          %v2461 = vmul.f32 %v2396, 0.0078125
          %v2462 = vmul.f32 %v2398, 0.0078125
          %v2463 = vmul.f32 %v2399, %v2399
          %v2464 = vmul.f32 %v2400, %v2400
          %v2465 = vmul.f32 %v2401, %v2401
          %v2466 = vmul.f32 %v2402, %v2402
          %v2467 = vmul.f32 %v2403, %v2403
          %v2468 = vmul.f32 %v2404, %v2404
          %v2469 = vmul.f32 %v2405, %v2405
          %v2470 = vmul.f32 %v2406, %v2406
          %v2471 = vmul.f32 %v2407, %v2407
          %v2472 = vmul.f32 %v2408, %v2408
          %v2473 = vmul.f32 %v2409, %v2409
          %v2474 = vmul.f32 %v2410, %v2410
          %v2475 = vmul.f32 %v2411, %v2411
          %v2476 = vmul.f32 %v2412, %v2412
          %v2477 = vmul.f32 %v2413, %v2413
          %v2478 = vmul.f32 %v2414, %v2414
          %v2479 = vmul.f32 %v2415, %v2415
          %v2480 = vmul.f32 %v2416, %v2416
          %v2481 = vmul.f32 %v2417, %v2417
          %v2482 = vmul.f32 %v2418, %v2418
          %v2483 = vmul.f32 %v2419, %v2419
          %v2484 = vmul.f32 %v2420, %v2420
          %v2485 = vmul.f32 %v2421, %v2421
          %v2486 = vmul.f32 %v2422, %v2422
          %v2487 = vmul.f32 %v2423, %v2423
          %v2488 = vmul.f32 %v2424, %v2424
          %v2489 = vmul.f32 %v2425, %v2425
          %v2490 = vmul.f32 %v2426, %v2426
          %v2491 = vmul.f32 %v2427, %v2427
          %v2492 = vmul.f32 %v2428, %v2428
          %v2493 = vmul.f32 %v2429, %v2429
          %v2494 = vmul.f32 %v2430, %v2430
          %v2495 = vsub.f32 %v2431, %v2463
          %v2496 = vsub.f32 %v2432, %v2464
          %v2497 = vsub.f32 %v2433, %v2465
          %v2498 = vsub.f32 %v2434, %v2466
          %v2499 = vsub.f32 %v2435, %v2467
          %v2500 = vsub.f32 %v2436, %v2468
          %v2501 = vsub.f32 %v2437, %v2469
          %v2502 = vsub.f32 %v2438, %v2470
          %v2503 = vsub.f32 %v2439, %v2471
          %v2504 = vsub.f32 %v2440, %v2472
          %v2505 = vsub.f32 %v2441, %v2473
          %v2506 = vsub.f32 %v2442, %v2474
          %v2507 = vsub.f32 %v2443, %v2475
          %v2508 = vsub.f32 %v2444, %v2476
          %v2509 = vsub.f32 %v2445, %v2477
          %v2510 = vsub.f32 %v2446, %v2478
          %v2511 = vsub.f32 %v2447, %v2479
          %v2512 = vsub.f32 %v2448, %v2480
          %v2513 = vsub.f32 %v2449, %v2481
          %v2514 = vsub.f32 %v2450, %v2482
          %v2515 = vsub.f32 %v2451, %v2483
          %v2516 = vsub.f32 %v2452, %v2484
          %v2517 = vsub.f32 %v2453, %v2485
          %v2518 = vsub.f32 %v2454, %v2486
          %v2519 = vsub.f32 %v2455, %v2487
          %v2520 = vsub.f32 %v2456, %v2488
          %v2521 = vsub.f32 %v2457, %v2489
          %v2522 = vsub.f32 %v2458, %v2490
          %v2523 = vsub.f32 %v2459, %v2491
          %v2524 = vsub.f32 %v2460, %v2492
          %v2525 = vsub.f32 %v2461, %v2493
          %v2526 = vsub.f32 %v2462, %v2494
          %v2527 = vmax.f32 %v2495, 0.0
          %v2528 = vmax.f32 %v2496, 0.0
          %v2529 = vmax.f32 %v2497, 0.0
          %v2530 = vmax.f32 %v2498, 0.0
          %v2531 = vmax.f32 %v2499, 0.0
          %v2532 = vmax.f32 %v2500, 0.0
          %v2533 = vmax.f32 %v2501, 0.0
          %v2534 = vmax.f32 %v2502, 0.0
          %v2535 = vmax.f32 %v2503, 0.0
          %v2536 = vmax.f32 %v2504, 0.0
          %v2537 = vmax.f32 %v2505, 0.0
          %v2538 = vmax.f32 %v2506, 0.0
          %v2539 = vmax.f32 %v2507, 0.0
          %v2540 = vmax.f32 %v2508, 0.0
          %v2541 = vmax.f32 %v2509, 0.0
          %v2542 = vmax.f32 %v2510, 0.0
          %v2543 = vmax.f32 %v2511, 0.0
          %v2544 = vmax.f32 %v2512, 0.0
          %v2545 = vmax.f32 %v2513, 0.0
          %v2546 = vmax.f32 %v2514, 0.0
          %v2547 = vmax.f32 %v2515, 0.0
          %v2548 = vmax.f32 %v2516, 0.0
          %v2549 = vmax.f32 %v2517, 0.0
          %v2550 = vmax.f32 %v2518, 0.0
          %v2551 = vmax.f32 %v2519, 0.0
          %v2552 = vmax.f32 %v2520, 0.0
          %v2553 = vmax.f32 %v2521, 0.0
          %v2554 = vmax.f32 %v2522, 0.0
          %v2555 = vmax.f32 %v2523, 0.0
          %v2556 = vmax.f32 %v2524, 0.0
          %v2557 = vmax.f32 %v2525, 0.0
          %v2558 = vmax.f32 %v2526, 0.0
          %v2559 = vadd.f32 %v2527, 1e-09
          %v2560 = vadd.f32 %v2528, 1e-09
          %v2561 = vadd.f32 %v2529, 1e-09
          %v2562 = vadd.f32 %v2530, 1e-09
          %v2563 = vadd.f32 %v2531, 1e-09
          %v2564 = vadd.f32 %v2532, 1e-09
          %v2565 = vadd.f32 %v2533, 1e-09
          %v2566 = vadd.f32 %v2534, 1e-09
          %v2567 = vadd.f32 %v2535, 1e-09
          %v2568 = vadd.f32 %v2536, 1e-09
          %v2569 = vadd.f32 %v2537, 1e-09
          %v2570 = vadd.f32 %v2538, 1e-09
          %v2571 = vadd.f32 %v2539, 1e-09
          %v2572 = vadd.f32 %v2540, 1e-09
          %v2573 = vadd.f32 %v2541, 1e-09
          %v2574 = vadd.f32 %v2542, 1e-09
          %v2575 = vadd.f32 %v2543, 1e-09
          %v2576 = vadd.f32 %v2544, 1e-09
          %v2577 = vadd.f32 %v2545, 1e-09
          %v2578 = vadd.f32 %v2546, 1e-09
          %v2579 = vadd.f32 %v2547, 1e-09
          %v2580 = vadd.f32 %v2548, 1e-09
          %v2581 = vadd.f32 %v2549, 1e-09
          %v2582 = vadd.f32 %v2550, 1e-09
          %v2583 = vadd.f32 %v2551, 1e-09
          %v2584 = vadd.f32 %v2552, 1e-09
          %v2585 = vadd.f32 %v2553, 1e-09
          %v2586 = vadd.f32 %v2554, 1e-09
          %v2587 = vadd.f32 %v2555, 1e-09
          %v2588 = vadd.f32 %v2556, 1e-09
          %v2589 = vadd.f32 %v2557, 1e-09
          %v2590 = vadd.f32 %v2558, 1e-09
          %v2591 = vsub.f32 %v2207, %v2399
          %v2592 = vsub.f32 %v2208, %v2400
          %v2593 = vsub.f32 %v2209, %v2401
          %v2594 = vsub.f32 %v2210, %v2402
          %v2595 = vsub.f32 %v2211, %v2403
          %v2596 = vsub.f32 %v2212, %v2404
          %v2597 = vsub.f32 %v2213, %v2405
          %v2598 = vsub.f32 %v2214, %v2406
          %v2599 = vsub.f32 %v2215, %v2407
          %v2600 = vsub.f32 %v2216, %v2408
          %v2601 = vsub.f32 %v2217, %v2409
          %v2602 = vsub.f32 %v2218, %v2410
          %v2603 = vsub.f32 %v2219, %v2411
          %v2604 = vsub.f32 %v2220, %v2412
          %v2605 = vsub.f32 %v2221, %v2413
          %v2606 = vsub.f32 %v2222, %v2414
          %v2607 = vsub.f32 %v2223, %v2415
          %v2608 = vsub.f32 %v2224, %v2416
          %v2609 = vsub.f32 %v2225, %v2417
          %v2610 = vsub.f32 %v2226, %v2418
          %v2611 = vsub.f32 %v2227, %v2419
          %v2612 = vsub.f32 %v2228, %v2420
          %v2613 = vsub.f32 %v2229, %v2421
          %v2614 = vsub.f32 %v2230, %v2422
          %v2615 = vsub.f32 %v2231, %v2423
          %v2616 = vsub.f32 %v2232, %v2424
          %v2617 = vsub.f32 %v2233, %v2425
          %v2618 = vsub.f32 %v2234, %v2426
          %v2619 = vsub.f32 %v2235, %v2427
          %v2620 = vsub.f32 %v2236, %v2428
          %v2621 = vsub.f32 %v2237, %v2429
          %v2622 = vsub.f32 %v2238, %v2430
          %v2623 = vrsqrt.pop %v2559
          %v2624 = vmul.f32 %v2623, %v2559
          %v2625 = vmul.f32 %v2624, %v2623
          %v2626 = vmul.f32 0.5, %v2625
          %v2627 = vsub.f32 1.5, %v2626
          %v2628 = vmul.f32 %v2623, %v2627
          %vm2629 = vweird.f32 %v2559
          %vm2630 = vweird.f32 %v2623
          %vm2631 = vmor %vm2629, %vm2630
          %v2632 = vsel %vm2631, %v2623, %v2628
          %v2633 = vrsqrt.pop %v2560
          %v2634 = vmul.f32 %v2633, %v2560
          %v2635 = vmul.f32 %v2634, %v2633
          %v2636 = vmul.f32 0.5, %v2635
          %v2637 = vsub.f32 1.5, %v2636
          %v2638 = vmul.f32 %v2633, %v2637
          %vm2639 = vweird.f32 %v2560
          %vm2640 = vweird.f32 %v2633
          %vm2641 = vmor %vm2639, %vm2640
          %v2642 = vsel %vm2641, %v2633, %v2638
          %v2643 = vrsqrt.pop %v2561
          %v2644 = vmul.f32 %v2643, %v2561
          %v2645 = vmul.f32 %v2644, %v2643
          %v2646 = vmul.f32 0.5, %v2645
          %v2647 = vsub.f32 1.5, %v2646
          %v2648 = vmul.f32 %v2643, %v2647
          %vm2649 = vweird.f32 %v2561
          %vm2650 = vweird.f32 %v2643
          %vm2651 = vmor %vm2649, %vm2650
          %v2652 = vsel %vm2651, %v2643, %v2648
          %v2653 = vrsqrt.pop %v2562
          %v2654 = vmul.f32 %v2653, %v2562
          %v2655 = vmul.f32 %v2654, %v2653
          %v2656 = vmul.f32 0.5, %v2655
          %v2657 = vsub.f32 1.5, %v2656
          %v2658 = vmul.f32 %v2653, %v2657
          %vm2659 = vweird.f32 %v2562
          %vm2660 = vweird.f32 %v2653
          %vm2661 = vmor %vm2659, %vm2660
          %v2662 = vsel %vm2661, %v2653, %v2658
          %v2663 = vrsqrt.pop %v2563
          %v2664 = vmul.f32 %v2663, %v2563
          %v2665 = vmul.f32 %v2664, %v2663
          %v2666 = vmul.f32 0.5, %v2665
          %v2667 = vsub.f32 1.5, %v2666
          %v2668 = vmul.f32 %v2663, %v2667
          %vm2669 = vweird.f32 %v2563
          %vm2670 = vweird.f32 %v2663
          %vm2671 = vmor %vm2669, %vm2670
          %v2672 = vsel %vm2671, %v2663, %v2668
          %v2673 = vrsqrt.pop %v2564
          %v2674 = vmul.f32 %v2673, %v2564
          %v2675 = vmul.f32 %v2674, %v2673
          %v2676 = vmul.f32 0.5, %v2675
          %v2677 = vsub.f32 1.5, %v2676
          %v2678 = vmul.f32 %v2673, %v2677
          %vm2679 = vweird.f32 %v2564
          %vm2680 = vweird.f32 %v2673
          %vm2681 = vmor %vm2679, %vm2680
          %v2682 = vsel %vm2681, %v2673, %v2678
          %v2683 = vrsqrt.pop %v2565
          %v2684 = vmul.f32 %v2683, %v2565
          %v2685 = vmul.f32 %v2684, %v2683
          %v2686 = vmul.f32 0.5, %v2685
          %v2687 = vsub.f32 1.5, %v2686
          %v2688 = vmul.f32 %v2683, %v2687
          %vm2689 = vweird.f32 %v2565
          %vm2690 = vweird.f32 %v2683
          %vm2691 = vmor %vm2689, %vm2690
          %v2692 = vsel %vm2691, %v2683, %v2688
          %v2693 = vrsqrt.pop %v2566
          %v2694 = vmul.f32 %v2693, %v2566
          %v2695 = vmul.f32 %v2694, %v2693
          %v2696 = vmul.f32 0.5, %v2695
          %v2697 = vsub.f32 1.5, %v2696
          %v2698 = vmul.f32 %v2693, %v2697
          %vm2699 = vweird.f32 %v2566
          %vm2700 = vweird.f32 %v2693
          %vm2701 = vmor %vm2699, %vm2700
          %v2702 = vsel %vm2701, %v2693, %v2698
          %v2703 = vrsqrt.pop %v2567
          %v2704 = vmul.f32 %v2703, %v2567
          %v2705 = vmul.f32 %v2704, %v2703
          %v2706 = vmul.f32 0.5, %v2705
          %v2707 = vsub.f32 1.5, %v2706
          %v2708 = vmul.f32 %v2703, %v2707
          %vm2709 = vweird.f32 %v2567
          %vm2710 = vweird.f32 %v2703
          %vm2711 = vmor %vm2709, %vm2710
          %v2712 = vsel %vm2711, %v2703, %v2708
          %v2713 = vrsqrt.pop %v2568
          %v2714 = vmul.f32 %v2713, %v2568
          %v2715 = vmul.f32 %v2714, %v2713
          %v2716 = vmul.f32 0.5, %v2715
          %v2717 = vsub.f32 1.5, %v2716
          %v2718 = vmul.f32 %v2713, %v2717
          %vm2719 = vweird.f32 %v2568
          %vm2720 = vweird.f32 %v2713
          %vm2721 = vmor %vm2719, %vm2720
          %v2722 = vsel %vm2721, %v2713, %v2718
          %v2723 = vrsqrt.pop %v2569
          %v2724 = vmul.f32 %v2723, %v2569
          %v2725 = vmul.f32 %v2724, %v2723
          %v2726 = vmul.f32 0.5, %v2725
          %v2727 = vsub.f32 1.5, %v2726
          %v2728 = vmul.f32 %v2723, %v2727
          %vm2729 = vweird.f32 %v2569
          %vm2730 = vweird.f32 %v2723
          %vm2731 = vmor %vm2729, %vm2730
          %v2732 = vsel %vm2731, %v2723, %v2728
          %v2733 = vrsqrt.pop %v2570
          %v2734 = vmul.f32 %v2733, %v2570
          %v2735 = vmul.f32 %v2734, %v2733
          %v2736 = vmul.f32 0.5, %v2735
          %v2737 = vsub.f32 1.5, %v2736
          %v2738 = vmul.f32 %v2733, %v2737
          %vm2739 = vweird.f32 %v2570
          %vm2740 = vweird.f32 %v2733
          %vm2741 = vmor %vm2739, %vm2740
          %v2742 = vsel %vm2741, %v2733, %v2738
          %v2743 = vrsqrt.pop %v2571
          %v2744 = vmul.f32 %v2743, %v2571
          %v2745 = vmul.f32 %v2744, %v2743
          %v2746 = vmul.f32 0.5, %v2745
          %v2747 = vsub.f32 1.5, %v2746
          %v2748 = vmul.f32 %v2743, %v2747
          %vm2749 = vweird.f32 %v2571
          %vm2750 = vweird.f32 %v2743
          %vm2751 = vmor %vm2749, %vm2750
          %v2752 = vsel %vm2751, %v2743, %v2748
          %v2753 = vrsqrt.pop %v2572
          %v2754 = vmul.f32 %v2753, %v2572
          %v2755 = vmul.f32 %v2754, %v2753
          %v2756 = vmul.f32 0.5, %v2755
          %v2757 = vsub.f32 1.5, %v2756
          %v2758 = vmul.f32 %v2753, %v2757
          %vm2759 = vweird.f32 %v2572
          %vm2760 = vweird.f32 %v2753
          %vm2761 = vmor %vm2759, %vm2760
          %v2762 = vsel %vm2761, %v2753, %v2758
          %v2763 = vrsqrt.pop %v2573
          %v2764 = vmul.f32 %v2763, %v2573
          %v2765 = vmul.f32 %v2764, %v2763
          %v2766 = vmul.f32 0.5, %v2765
          %v2767 = vsub.f32 1.5, %v2766
          %v2768 = vmul.f32 %v2763, %v2767
          %vm2769 = vweird.f32 %v2573
          %vm2770 = vweird.f32 %v2763
          %vm2771 = vmor %vm2769, %vm2770
          %v2772 = vsel %vm2771, %v2763, %v2768
          %v2773 = vrsqrt.pop %v2574
          %v2774 = vmul.f32 %v2773, %v2574
          %v2775 = vmul.f32 %v2774, %v2773
          %v2776 = vmul.f32 0.5, %v2775
          %v2777 = vsub.f32 1.5, %v2776
          %v2778 = vmul.f32 %v2773, %v2777
          %vm2779 = vweird.f32 %v2574
          %vm2780 = vweird.f32 %v2773
          %vm2781 = vmor %vm2779, %vm2780
          %v2782 = vsel %vm2781, %v2773, %v2778
          %v2783 = vrsqrt.pop %v2575
          %v2784 = vmul.f32 %v2783, %v2575
          %v2785 = vmul.f32 %v2784, %v2783
          %v2786 = vmul.f32 0.5, %v2785
          %v2787 = vsub.f32 1.5, %v2786
          %v2788 = vmul.f32 %v2783, %v2787
          %vm2789 = vweird.f32 %v2575
          %vm2790 = vweird.f32 %v2783
          %vm2791 = vmor %vm2789, %vm2790
          %v2792 = vsel %vm2791, %v2783, %v2788
          %v2793 = vrsqrt.pop %v2576
          %v2794 = vmul.f32 %v2793, %v2576
          %v2795 = vmul.f32 %v2794, %v2793
          %v2796 = vmul.f32 0.5, %v2795
          %v2797 = vsub.f32 1.5, %v2796
          %v2798 = vmul.f32 %v2793, %v2797
          %vm2799 = vweird.f32 %v2576
          %vm2800 = vweird.f32 %v2793
          %vm2801 = vmor %vm2799, %vm2800
          %v2802 = vsel %vm2801, %v2793, %v2798
          %v2803 = vrsqrt.pop %v2577
          %v2804 = vmul.f32 %v2803, %v2577
          %v2805 = vmul.f32 %v2804, %v2803
          %v2806 = vmul.f32 0.5, %v2805
          %v2807 = vsub.f32 1.5, %v2806
          %v2808 = vmul.f32 %v2803, %v2807
          %vm2809 = vweird.f32 %v2577
          %vm2810 = vweird.f32 %v2803
          %vm2811 = vmor %vm2809, %vm2810
          %v2812 = vsel %vm2811, %v2803, %v2808
          %v2813 = vrsqrt.pop %v2578
          %v2814 = vmul.f32 %v2813, %v2578
          %v2815 = vmul.f32 %v2814, %v2813
          %v2816 = vmul.f32 0.5, %v2815
          %v2817 = vsub.f32 1.5, %v2816
          %v2818 = vmul.f32 %v2813, %v2817
          %vm2819 = vweird.f32 %v2578
          %vm2820 = vweird.f32 %v2813
          %vm2821 = vmor %vm2819, %vm2820
          %v2822 = vsel %vm2821, %v2813, %v2818
          %v2823 = vrsqrt.pop %v2579
          %v2824 = vmul.f32 %v2823, %v2579
          %v2825 = vmul.f32 %v2824, %v2823
          %v2826 = vmul.f32 0.5, %v2825
          %v2827 = vsub.f32 1.5, %v2826
          %v2828 = vmul.f32 %v2823, %v2827
          %vm2829 = vweird.f32 %v2579
          %vm2830 = vweird.f32 %v2823
          %vm2831 = vmor %vm2829, %vm2830
          %v2832 = vsel %vm2831, %v2823, %v2828
          %v2833 = vrsqrt.pop %v2580
          %v2834 = vmul.f32 %v2833, %v2580
          %v2835 = vmul.f32 %v2834, %v2833
          %v2836 = vmul.f32 0.5, %v2835
          %v2837 = vsub.f32 1.5, %v2836
          %v2838 = vmul.f32 %v2833, %v2837
          %vm2839 = vweird.f32 %v2580
          %vm2840 = vweird.f32 %v2833
          %vm2841 = vmor %vm2839, %vm2840
          %v2842 = vsel %vm2841, %v2833, %v2838
          %v2843 = vrsqrt.pop %v2581
          %v2844 = vmul.f32 %v2843, %v2581
          %v2845 = vmul.f32 %v2844, %v2843
          %v2846 = vmul.f32 0.5, %v2845
          %v2847 = vsub.f32 1.5, %v2846
          %v2848 = vmul.f32 %v2843, %v2847
          %vm2849 = vweird.f32 %v2581
          %vm2850 = vweird.f32 %v2843
          %vm2851 = vmor %vm2849, %vm2850
          %v2852 = vsel %vm2851, %v2843, %v2848
          %v2853 = vrsqrt.pop %v2582
          %v2854 = vmul.f32 %v2853, %v2582
          %v2855 = vmul.f32 %v2854, %v2853
          %v2856 = vmul.f32 0.5, %v2855
          %v2857 = vsub.f32 1.5, %v2856
          %v2858 = vmul.f32 %v2853, %v2857
          %vm2859 = vweird.f32 %v2582
          %vm2860 = vweird.f32 %v2853
          %vm2861 = vmor %vm2859, %vm2860
          %v2862 = vsel %vm2861, %v2853, %v2858
          %v2863 = vrsqrt.pop %v2583
          %v2864 = vmul.f32 %v2863, %v2583
          %v2865 = vmul.f32 %v2864, %v2863
          %v2866 = vmul.f32 0.5, %v2865
          %v2867 = vsub.f32 1.5, %v2866
          %v2868 = vmul.f32 %v2863, %v2867
          %vm2869 = vweird.f32 %v2583
          %vm2870 = vweird.f32 %v2863
          %vm2871 = vmor %vm2869, %vm2870
          %v2872 = vsel %vm2871, %v2863, %v2868
          %v2873 = vrsqrt.pop %v2584
          %v2874 = vmul.f32 %v2873, %v2584
          %v2875 = vmul.f32 %v2874, %v2873
          %v2876 = vmul.f32 0.5, %v2875
          %v2877 = vsub.f32 1.5, %v2876
          %v2878 = vmul.f32 %v2873, %v2877
          %vm2879 = vweird.f32 %v2584
          %vm2880 = vweird.f32 %v2873
          %vm2881 = vmor %vm2879, %vm2880
          %v2882 = vsel %vm2881, %v2873, %v2878
          %v2883 = vrsqrt.pop %v2585
          %v2884 = vmul.f32 %v2883, %v2585
          %v2885 = vmul.f32 %v2884, %v2883
          %v2886 = vmul.f32 0.5, %v2885
          %v2887 = vsub.f32 1.5, %v2886
          %v2888 = vmul.f32 %v2883, %v2887
          %vm2889 = vweird.f32 %v2585
          %vm2890 = vweird.f32 %v2883
          %vm2891 = vmor %vm2889, %vm2890
          %v2892 = vsel %vm2891, %v2883, %v2888
          %v2893 = vrsqrt.pop %v2586
          %v2894 = vmul.f32 %v2893, %v2586
          %v2895 = vmul.f32 %v2894, %v2893
          %v2896 = vmul.f32 0.5, %v2895
          %v2897 = vsub.f32 1.5, %v2896
          %v2898 = vmul.f32 %v2893, %v2897
          %vm2899 = vweird.f32 %v2586
          %vm2900 = vweird.f32 %v2893
          %vm2901 = vmor %vm2899, %vm2900
          %v2902 = vsel %vm2901, %v2893, %v2898
          %v2903 = vrsqrt.pop %v2587
          %v2904 = vmul.f32 %v2903, %v2587
          %v2905 = vmul.f32 %v2904, %v2903
          %v2906 = vmul.f32 0.5, %v2905
          %v2907 = vsub.f32 1.5, %v2906
          %v2908 = vmul.f32 %v2903, %v2907
          %vm2909 = vweird.f32 %v2587
          %vm2910 = vweird.f32 %v2903
          %vm2911 = vmor %vm2909, %vm2910
          %v2912 = vsel %vm2911, %v2903, %v2908
          %v2913 = vrsqrt.pop %v2588
          %v2914 = vmul.f32 %v2913, %v2588
          %v2915 = vmul.f32 %v2914, %v2913
          %v2916 = vmul.f32 0.5, %v2915
          %v2917 = vsub.f32 1.5, %v2916
          %v2918 = vmul.f32 %v2913, %v2917
          %vm2919 = vweird.f32 %v2588
          %vm2920 = vweird.f32 %v2913
          %vm2921 = vmor %vm2919, %vm2920
          %v2922 = vsel %vm2921, %v2913, %v2918
          %v2923 = vrsqrt.pop %v2589
          %v2924 = vmul.f32 %v2923, %v2589
          %v2925 = vmul.f32 %v2924, %v2923
          %v2926 = vmul.f32 0.5, %v2925
          %v2927 = vsub.f32 1.5, %v2926
          %v2928 = vmul.f32 %v2923, %v2927
          %vm2929 = vweird.f32 %v2589
          %vm2930 = vweird.f32 %v2923
          %vm2931 = vmor %vm2929, %vm2930
          %v2932 = vsel %vm2931, %v2923, %v2928
          %v2933 = vrsqrt.pop %v2590
          %v2934 = vmul.f32 %v2933, %v2590
          %v2935 = vmul.f32 %v2934, %v2933
          %v2936 = vmul.f32 0.5, %v2935
          %v2937 = vsub.f32 1.5, %v2936
          %v2938 = vmul.f32 %v2933, %v2937
          %vm2939 = vweird.f32 %v2590
          %vm2940 = vweird.f32 %v2933
          %vm2941 = vmor %vm2939, %vm2940
          %v2942 = vsel %vm2941, %v2933, %v2938
          %v2944 = vperm.slane %v1992, 0
          %v2946 = vmul.f32 %v2944, %v2632
          %v2947 = vmul.f32 %v2944, %v2642
          %v2948 = vmul.f32 %v2944, %v2652
          %v2949 = vmul.f32 %v2944, %v2662
          %v2950 = vmul.f32 %v2944, %v2672
          %v2951 = vmul.f32 %v2944, %v2682
          %v2952 = vmul.f32 %v2944, %v2692
          %v2953 = vmul.f32 %v2944, %v2702
          %v2954 = vmul.f32 %v2944, %v2712
          %v2955 = vmul.f32 %v2944, %v2722
          %v2956 = vmul.f32 %v2944, %v2732
          %v2957 = vmul.f32 %v2944, %v2742
          %v2958 = vmul.f32 %v2944, %v2752
          %v2959 = vmul.f32 %v2944, %v2762
          %v2960 = vmul.f32 %v2944, %v2772
          %v2961 = vmul.f32 %v2944, %v2782
          %v2962 = vmul.f32 %v2944, %v2792
          %v2963 = vmul.f32 %v2944, %v2802
          %v2964 = vmul.f32 %v2944, %v2812
          %v2965 = vmul.f32 %v2944, %v2822
          %v2966 = vmul.f32 %v2944, %v2832
          %v2967 = vmul.f32 %v2944, %v2842
          %v2968 = vmul.f32 %v2944, %v2852
          %v2969 = vmul.f32 %v2944, %v2862
          %v2970 = vmul.f32 %v2944, %v2872
          %v2971 = vmul.f32 %v2944, %v2882
          %v2972 = vmul.f32 %v2944, %v2892
          %v2973 = vmul.f32 %v2944, %v2902
          %v2974 = vmul.f32 %v2944, %v2912
          %v2975 = vmul.f32 %v2944, %v2922
          %v2976 = vmul.f32 %v2944, %v2932
          %v2977 = vmul.f32 %v2944, %v2942
          %v2978 = vmul.f32 %v2591, %v2946
          %v2979 = vmul.f32 %v2592, %v2947
          %v2980 = vmul.f32 %v2593, %v2948
          %v2981 = vmul.f32 %v2594, %v2949
          %v2982 = vmul.f32 %v2595, %v2950
          %v2983 = vmul.f32 %v2596, %v2951
          %v2984 = vmul.f32 %v2597, %v2952
          %v2985 = vmul.f32 %v2598, %v2953
          %v2986 = vmul.f32 %v2599, %v2954
          %v2987 = vmul.f32 %v2600, %v2955
          %v2988 = vmul.f32 %v2601, %v2956
          %v2989 = vmul.f32 %v2602, %v2957
          %v2990 = vmul.f32 %v2603, %v2958
          %v2991 = vmul.f32 %v2604, %v2959
          %v2992 = vmul.f32 %v2605, %v2960
          %v2993 = vmul.f32 %v2606, %v2961
          %v2994 = vmul.f32 %v2607, %v2962
          %v2995 = vmul.f32 %v2608, %v2963
          %v2996 = vmul.f32 %v2609, %v2964
          %v2997 = vmul.f32 %v2610, %v2965
          %v2998 = vmul.f32 %v2611, %v2966
          %v2999 = vmul.f32 %v2612, %v2967
          %v3000 = vmul.f32 %v2613, %v2968
          %v3001 = vmul.f32 %v2614, %v2969
          %v3002 = vmul.f32 %v2615, %v2970
          %v3003 = vmul.f32 %v2616, %v2971
          %v3004 = vmul.f32 %v2617, %v2972
          %v3005 = vmul.f32 %v2618, %v2973
          %v3006 = vmul.f32 %v2619, %v2974
          %v3007 = vmul.f32 %v2620, %v2975
          %v3008 = vmul.f32 %v2621, %v2976
          %v3009 = vmul.f32 %v2622, %v2977
          %v3011 = vperm.slane %v1994, 0
          %v3013 = vadd.f32 %v2978, %v3011
          %v3014 = vadd.f32 %v2979, %v3011
          %v3015 = vadd.f32 %v2980, %v3011
          %v3016 = vadd.f32 %v2981, %v3011
          %v3017 = vadd.f32 %v2982, %v3011
          %v3018 = vadd.f32 %v2983, %v3011
          %v3019 = vadd.f32 %v2984, %v3011
          %v3020 = vadd.f32 %v2985, %v3011
          %v3021 = vadd.f32 %v2986, %v3011
          %v3022 = vadd.f32 %v2987, %v3011
          %v3023 = vadd.f32 %v2988, %v3011
          %v3024 = vadd.f32 %v2989, %v3011
          %v3025 = vadd.f32 %v2990, %v3011
          %v3026 = vadd.f32 %v2991, %v3011
          %v3027 = vadd.f32 %v2992, %v3011
          %v3028 = vadd.f32 %v2993, %v3011
          %v3029 = vadd.f32 %v2994, %v3011
          %v3030 = vadd.f32 %v2995, %v3011
          %v3031 = vadd.f32 %v2996, %v3011
          %v3032 = vadd.f32 %v2997, %v3011
          %v3033 = vadd.f32 %v2998, %v3011
          %v3034 = vadd.f32 %v2999, %v3011
          %v3035 = vadd.f32 %v3000, %v3011
          %v3036 = vadd.f32 %v3001, %v3011
          %v3037 = vadd.f32 %v3002, %v3011
          %v3038 = vadd.f32 %v3003, %v3011
          %v3039 = vadd.f32 %v3004, %v3011
          %v3040 = vadd.f32 %v3005, %v3011
          %v3041 = vadd.f32 %v3006, %v3011
          %v3042 = vadd.f32 %v3007, %v3011
          %v3043 = vadd.f32 %v3008, %v3011
          %v3044 = vadd.f32 %v3009, %v3011
          %v3045 = vadd.f32 %v1916, %v3013
          %v3046 = vadd.f32 %v1917, %v3014
          %v3047 = vadd.f32 %v1918, %v3015
          %v3048 = vadd.f32 %v1919, %v3016
          %v3049 = vadd.f32 %v1920, %v3017
          %v3050 = vadd.f32 %v1921, %v3018
          %v3051 = vadd.f32 %v1922, %v3019
          %v3052 = vadd.f32 %v1923, %v3020
          %v3053 = vadd.f32 %v1924, %v3021
          %v3054 = vadd.f32 %v1925, %v3022
          %v3055 = vadd.f32 %v1926, %v3023
          %v3056 = vadd.f32 %v1927, %v3024
          %v3057 = vadd.f32 %v1928, %v3025
          %v3058 = vadd.f32 %v1929, %v3026
          %v3059 = vadd.f32 %v1930, %v3027
          %v3060 = vadd.f32 %v1931, %v3028
          %v3061 = vadd.f32 %v1932, %v3029
          %v3062 = vadd.f32 %v1933, %v3030
          %v3063 = vadd.f32 %v1934, %v3031
          %v3064 = vadd.f32 %v1935, %v3032
          %v3065 = vadd.f32 %v1936, %v3033
          %v3066 = vadd.f32 %v1937, %v3034
          %v3067 = vadd.f32 %v1938, %v3035
          %v3068 = vadd.f32 %v1939, %v3036
          %v3069 = vadd.f32 %v1940, %v3037
          %v3070 = vadd.f32 %v1941, %v3038
          %v3071 = vadd.f32 %v1942, %v3039
          %v3072 = vadd.f32 %v1943, %v3040
          %v3073 = vadd.f32 %v1944, %v3041
          %v3074 = vadd.f32 %v1945, %v3042
          %v3075 = vadd.f32 %v1946, %v3043
          %v3076 = vadd.f32 %v1947, %v3044
          %3077 = vst [vmem:[%s347] sm:$0xff] %v3045
          %3078 = vst [vmem:[%s347 + $0x8] sm:$0xff] %v3046
          %3079 = vst [vmem:[%s347 + $0x10] sm:$0xff] %v3047
          %3080 = vst [vmem:[%s347 + $0x18] sm:$0xff] %v3048
          %3081 = vst [vmem:[%s347 + $0x20] sm:$0xff] %v3049
          %3082 = vst [vmem:[%s347 + $0x28] sm:$0xff] %v3050
          %3083 = vst [vmem:[%s347 + $0x30] sm:$0xff] %v3051
          %3084 = vst [vmem:[%s347 + $0x38] sm:$0xff] %v3052
          %3085 = vst [vmem:[%s347 + $0x40] sm:$0xff] %v3053
          %3086 = vst [vmem:[%s347 + $0x48] sm:$0xff] %v3054
          %3087 = vst [vmem:[%s347 + $0x50] sm:$0xff] %v3055
          %3088 = vst [vmem:[%s347 + $0x58] sm:$0xff] %v3056
          %3089 = vst [vmem:[%s347 + $0x60] sm:$0xff] %v3057
          %3090 = vst [vmem:[%s347 + $0x68] sm:$0xff] %v3058
          %3091 = vst [vmem:[%s347 + $0x70] sm:$0xff] %v3059
          %3092 = vst [vmem:[%s347 + $0x78] sm:$0xff] %v3060
          %3093 = vst [vmem:[%s347 + $0x80] sm:$0xff] %v3061
          %3094 = vst [vmem:[%s347 + $0x88] sm:$0xff] %v3062
          %3095 = vst [vmem:[%s347 + $0x90] sm:$0xff] %v3063
          %3096 = vst [vmem:[%s347 + $0x98] sm:$0xff] %v3064
          %3097 = vst [vmem:[%s347 + $0xa0] sm:$0xff] %v3065
          %3098 = vst [vmem:[%s347 + $0xa8] sm:$0xff] %v3066
          %3099 = vst [vmem:[%s347 + $0xb0] sm:$0xff] %v3067
          %3100 = vst [vmem:[%s347 + $0xb8] sm:$0xff] %v3068
          %3101 = vst [vmem:[%s347 + $0xc0] sm:$0xff] %v3069
          %3102 = vst [vmem:[%s347 + $0xc8] sm:$0xff] %v3070
          %3103 = vst [vmem:[%s347 + $0xd0] sm:$0xff] %v3071
          %3104 = vst [vmem:[%s347 + $0xd8] sm:$0xff] %v3072
          %3105 = vst [vmem:[%s347 + $0xe0] sm:$0xff] %v3073
          %3106 = vst [vmem:[%s347 + $0xe8] sm:$0xff] %v3074
          %3107 = vst [vmem:[%s347 + $0xf0] sm:$0xff] %v3075
          %3108 = vst [vmem:[%s347 + $0xf8] sm:$0xff] %v3076
        $region60: #{tpu_custom_call.1} parent=47 // pred_fallthru
          _
        %s3109 = sand.u32 %s208, 1
        %s3110 = scalar_lea.sflag [#allocation5], %s3109
        %s3111 = sand.u32 %s208, 1
        %s3112 = smul.addr %s3111, 256
        %s3113 = scalar_lea.vmem [#allocation6], %s3112
        // Predicated region
        $region61: #{tpu_custom_call.1} parent=47 // pred_check
          %p3114 = pneg %p218
        $region62: #{tpu_custom_call.1} parent=47 // pred_check_branch
          %3116 = sbr.rel (%p3114) target = $region64
        $region63: #{tpu_custom_call.1} parent=47 // pred_region
          %s3117 = smul.u32 32, %s28
          %3119 = vsyncadd %s3110, 0
          %s3120 = smul.addr %s3117, 8
          %s3121 = scalar_lea.hbm %s7, %s3120
          %s3122 = sshll.u32 %s3113, 4
          %s3123 = int_to_ptr.vmem [resolvable:$true] %s3122
          %s3124 = sshll.u32 %s3121, 4
          %s3125 = int_to_ptr.hbm [resolvable:$true] %s3124
          %3130 = dma.vmem_to_hbm [thread:$0]  %s3123, 4096, %s3125, %s3110, 128, 128, 8
        $region64: #{tpu_custom_call.1} parent=47 // pred_fallthru
          _
      $region48: #{tpu_custom_call.1} parent=5 // pred_fallthru
        _
      %p3131 = scmp.le.s32.totalorder 2, %s19
      // Predicated region
      $region65: #{tpu_custom_call.1} parent=5 // pred_check
        %p3132 = pneg %p3131
      $region66: #{tpu_custom_call.1} parent=5 // pred_check_branch
        %3134 = sbr.rel (%p3132) target = $region68
      $region67: #{tpu_custom_call.1} parent=5 // pred_region
        %s3135 = ssub.s32 %s19, 2
        // Predicated region
        $region69: #{tpu_custom_call.1} parent=67 // pred_check
          %p3136 = pneg %p224
        $region70: #{tpu_custom_call.1} parent=67 // pred_check_branch
          %3138 = sbr.rel (%p3136) target = $region72
        $region71: #{tpu_custom_call.1} parent=67 // pred_region
          %s3139 = sand.u32 %s209, 1
          %s3140 = scalar_lea.sflag [#allocation5], %s3139
          %s3141 = sand.u32 %s209, 1
          %s3142 = smul.addr %s3141, 256
          %s3143 = scalar_lea.vmem [#allocation6], %s3142
          %3145 = dma.done %s3140, 4096
        $region72: #{tpu_custom_call.1} parent=67 // pred_fallthru
          _
      $region68: #{tpu_custom_call.1} parent=5 // pred_fallthru
        _
    $region6: #{tpu_custom_call.1} parent=1 // loop_footer
      %s23 = sadd.s32 1, %s19
    $region7: #{tpu_custom_call.1} parent=1 // loop_footer_branch
      %18 = sbr.rel target = $region3
    $region8: #{tpu_custom_call.1} parent=1 // loop_exit
      _
    %3146 = vsyncpa [#allocation4], 1
    %s3147 = scalar_lea.sflag [#allocation4], 1
    %3148 = vsyncpa %s3147, 1
    %3149 = vsyncpa [#allocation5], 1
    %s3150 = scalar_lea.sflag [#allocation5], 1
    %3151 = vsyncpa %s3150, 1

</llo_original>
